<compile_context>
chip_gen: v6e
topology: v6e:2x2x1
jax: 0.10.0
libtpu: 0.0.40
codegen_flags: <defaults>
</compile_context>

<pallas_src>
import functools

import jax
import jax.numpy as jnp
from jax.experimental import pallas as pl
from jax.experimental.pallas import tpu as pltpu


# ----------------------------- Pallas kernel ------------------------------- #

def _d1_encode_kernel(x_ref, *refs):
    """Entire encode_img stack for B_step images stacked along sublanes.

    x_ref : (B_step*H, W*Cin0) bf16 input block (Cin0 padded to 4), lane dim = W*Cin0.
    refs  : for each of the 4 conv layers: (R, M, brow), then the output ref.
            R    : (4, B_step*Ho, B_step*Hin) bf16, block-diagonal 0/1 row selection per
                   ky tap (stride-2 / pad-1 in H; batches kept separate; OOB rows -> 0)
            M    : (4*Win*Cin, Wo*Cout)       bf16, ky-stacked column mixing (kx taps,
                   width zero-padding, conv weights with the BN scale folded in)
            brow : (1, Wo*Cout)               f32, folded BN bias tiled over Wo
    Per layer:
        rows_cat = [R[0]@X | R[1]@X | R[2]@X | R[3]@X]   # 4 cheap selection GEMMs
        Y        = LeakyReLU(rows_cat @ M + brow)        # ONE heavy MXU GEMM (f32 acc)
    All operands and stores are lane-dense multiples of 128; no slicing/reshaping inside
    the kernel, and one layer's output layout IS the next layer's input layout.
    """
    o_ref = refs[-1]
    layer_refs = refs[:-1]
    n_layers = len(layer_refs) // 3
    h = x_ref[...]                                            # bf16
    for li in range(n_layers):
        r_ref = layer_refs[3 * li]
        m_ref = layer_refs[3 * li + 1]
        b_ref = layer_refs[3 * li + 2]
        # Row selection per ky tap (exact in bf16: each R row has a single 1 or is zero).
        rows = [
            jnp.dot(r_ref[ky], h, preferred_element_type=jnp.float32).astype(jnp.bfloat16)
            for ky in range(4)
        ]
        rows_cat = jnp.concatenate(rows, axis=-1)             # (B_step*Ho, 4*Win*Cin)
        y = jnp.dot(rows_cat, m_ref[...], preferred_element_type=jnp.float32)
        y = y + b_ref[...]
        y = jnp.maximum(y, 0.2 * y)                           # LeakyReLU(0.2) in f32
        if li == n_layers - 1:
            o_ref[...] = y
        else:
            h = y.astype(jnp.bfloat16)


# ------------------------- parameter / operand prep ------------------------ #

def _fold_bn(gamma, beta, running_mean, running_var, eps=1e-5):
    scale = gamma / jnp.sqrt(running_var + eps)
    bias = beta - running_mean * scale
    return scale, bias


def _row_select(h_in, b_step):
    """Block-diagonal R[ky]: R[ky, b*ho+oy, b*h_in+iy] = 1 iff iy == 2*oy + ky - 1.

    stride 2 / pad 1 in H; OOB rows (iy == -1 or h_in) simply have no 1 anywhere, so the
    zero-padding is handled exactly; images never mix thanks to the block-diag structure.
    """
    ho = h_in // 2
    iy = jnp.arange(h_in)[None, None, :]
    oy = jnp.arange(ho)[None, :, None]
    ky = jnp.arange(4)[:, None, None]
    r = (iy == 2 * oy + ky - 1).astype(jnp.float32)           # (4, ho, h_in)
    eye = jnp.eye(b_step, dtype=jnp.float32)
    rb = jax.vmap(lambda rk: jnp.kron(eye, rk))(r)            # (4, b*ho, b*h_in)
    return rb.astype(jnp.bfloat16)


def _col_mix(w_hwio, w_in, scale, cin_pad=None):
    """ky-stacked column-mixing matrix.

    M[ky*Win*Cin + ix*Cin + ci, ox*Cout + co] = scale[co] * w[ky, ix-2*ox+1, ci, co]
    (valid kx taps only; Cin optionally zero-padded so K is a multiple of 128).
    """
    cin, cout = w_hwio.shape[2], w_hwio.shape[3]
    if cin_pad is not None and cin_pad > cin:
        w_hwio = jnp.pad(w_hwio, ((0, 0), (0, 0), (0, cin_pad - cin), (0, 0)))
        cin = cin_pad
    wo = w_in // 2
    ix = jnp.arange(w_in)[:, None]
    ox = jnp.arange(wo)[None, :]
    kx = ix - 2 * ox + 1                                      # (w_in, wo)
    valid = ((kx >= 0) & (kx < 4)).astype(jnp.float32)
    kx_c = jnp.clip(kx, 0, 3)
    w_s = w_hwio * scale[None, None, None, :]                 # fold BN scale into weights
    m = w_s[:, kx_c, :, :]                                    # (4, w_in, wo, cin, cout)
    m = m * valid[None, :, :, None, None]
    m = jnp.transpose(m, (0, 1, 3, 2, 4))                     # (4, w_in, cin, wo, cout)
    m = m.reshape(4 * w_in * cin, wo * cout)                  # K-fused across ky taps
    return m.astype(jnp.bfloat16)


def make_params(key, nd):
    """Conv weights + eval-mode BatchNorm params for the 4 encode_img layers (f32)."""
    chans = [(3, nd // 8), (nd // 8, nd // 4), (nd // 4, nd // 2), (nd // 2, nd)]
    keys = jax.random.split(key, 3 * len(chans))
    layers = []
    ki = 0
    for i, (cin, cout) in enumerate(chans):
        w = 0.1 * jax.random.normal(keys[ki], (4, 4, cin, cout), jnp.float32); ki += 1
        if i == 0:                           # first conv: LeakyReLU only, no BN
            scale = jnp.ones((cout,), jnp.float32)
            bias = jnp.zeros((cout,), jnp.float32)
        else:                                # conv + BatchNorm2d (eval) + LeakyReLU
            gamma = 1.0 + 0.1 * jax.random.normal(keys[ki], (cout,), jnp.float32); ki += 1
            beta = 0.1 * jax.random.normal(keys[ki], (cout,), jnp.float32); ki += 1
            scale, bias = _fold_bn(gamma, beta, jnp.zeros(cout), jnp.ones(cout))
        layers.append({"w": w, "scale": scale, "bias": bias})
    return layers


def prepare_operands(layers, h, w, b_step):
    """One-time weight prep: per layer (R, M_cat, brow) GEMM operands."""
    ops = []
    h_in, w_in = h, w
    for idx, lyr in enumerate(layers):
        cin_pad = 4 if idx == 0 else None     # pad layer-0 Cin 3 -> 4 (whole-vreg lanes)
        ops.append(_row_select(h_in, b_step))
        ops.append(_col_mix(lyr["w"], w_in, lyr["scale"], cin_pad=cin_pad))
        ops.append(jnp.tile(lyr["bias"], w_in // 2)[None, :].astype(jnp.float32))
        h_in, w_in = h_in // 2, w_in // 2
    return ops


# ------------------------------ Forward ------------------------------------ #

@functools.partial(jax.jit, static_argnames=("b_step",))
def d1_forward(image_nchw, operands, *, b_step):
    b, c0, h, w = image_nchw.shape
    assert b % b_step == 0
    steps = b // b_step
    ho, wo = h // 16, w // 16                     # 4 stride-2 convs
    n_out = operands[-1].shape[1]                 # wo * Nd
    nd = n_out // wo
    c_pad = 4

    # NCHW -> channel-padded NHWC -> (steps, B_step*H, W*4) bf16 lane-dense blocks
    # (pure layout plumbing; fuses into one tiny XLA op).
    x = jnp.transpose(image_nchw, (0, 2, 3, 1))
    x = jnp.pad(x, ((0, 0), (0, 0), (0, 0), (0, c_pad - c0)))
    x = x.reshape(steps, b_step * h, w * c_pad).astype(jnp.bfloat16)

    in_specs = [pl.BlockSpec((None, b_step * h, w * c_pad), lambda i: (i, 0, 0))]
    for op in operands:                           # constant blocks: fetched once per core
        in_specs.append(pl.BlockSpec(op.shape, lambda i, n=op.ndim: (0,) * n))

    out = pl.pallas_call(
        _d1_encode_kernel,
        out_shape=jax.ShapeDtypeStruct((steps, b_step * ho, n_out), jnp.float32),
        grid=(steps,),
        in_specs=in_specs,
        out_specs=pl.BlockSpec((None, b_step * ho, n_out), lambda i: (i, 0, 0)),
        compiler_params=pltpu.CompilerParams(dimension_semantics=("parallel",)),
    )(x, *operands)

    # (steps, B_step*Ho, Wo*Nd) -> NCHW img_embed (B, Nd, Ho, Wo), matching PyTorch.
    return jnp.transpose(out.reshape(b, ho, wo, nd), (0, 3, 1, 2))


# --------------------------- pure-JAX reference ----------------------------- #

def d1_reference(image_nchw, layers):
    x = jnp.transpose(image_nchw, (0, 2, 3, 1))
    for lyr in layers:
        y = jax.lax.conv_general_dilated(
            x, lyr["w"], window_strides=(2, 2), padding=((1, 1), (1, 1)),
            dimension_numbers=("NHWC", "HWIO", "NHWC"))
        y = y * lyr["scale"] + lyr["bias"]
        x = jnp.maximum(y, 0.2 * y)
    return jnp.transpose(x, (0, 3, 1, 2))


# -------------------------------- Main --------------------------------------- #

if __name__ == "__main__":
    Nd, Np = 32, 32        # Np only feeds D_GET_LOGITS, which D1.forward never calls
    B, H, W = 4, 64, 64    # StackGAN stage-1 discriminator input: 64x64 RGB
    B_STEP = 2             # 2 images folded per grid step -> grid=(2,), one per v7x TC
                           # (on v5e/v6e, which have 1 TC, B_STEP = B is also a fine choice)

    key = jax.random.PRNGKey(0)
    k_param, k_img = jax.random.split(key)

    layers = make_params(k_param, Nd)
    operands = prepare_operands(layers, H, W, B_STEP)

    image = jax.random.normal(k_img, (B, 3, H, W), jnp.float32)

    img_embed = d1_forward(image, operands, b_step=B_STEP)
    jax.block_until_ready(img_embed)

    assert img_embed.shape == (B, Nd, H // 16, W // 16), img_embed.shape
    assert bool(jnp.all(jnp.isfinite(img_embed)))

    ref = d1_reference(image, layers)
    diff = img_embed - ref
    max_err = float(jnp.max(jnp.abs(diff)))
    rel_rms = float(jnp.sqrt(jnp.sum(diff * diff) / jnp.sum(ref * ref)))
    # bf16 MXU operands with f32 accumulation -> tolerance relaxed vs. the pure-f32 version.
    assert bool(jnp.allclose(img_embed, ref, atol=5e-2, rtol=5e-2)), (max_err, rel_rms)
    assert rel_rms < 3e-2, (max_err, rel_rms)

    print("KERNEL_OK")
</pallas_src>

<mosaic_0001>
module attributes {stable_mosaic.version = 11 : i64} {
  func.func @_d1_encode_kernel(%arg0: i32, %arg1: memref<1x128x256xbf16, #tpu.memory_space<vmem>>, %arg2: memref<4x64x128xbf16, #tpu.memory_space<vmem>>, %arg3: memref<1024x128xbf16, #tpu.memory_space<vmem>>, %arg4: memref<1x128xf32, #tpu.memory_space<vmem>>, %arg5: memref<4x32x64xbf16, #tpu.memory_space<vmem>>, %arg6: memref<512x128xbf16, #tpu.memory_space<vmem>>, %arg7: memref<1x128xf32, #tpu.memory_space<vmem>>, %arg8: memref<4x16x32xbf16, #tpu.memory_space<vmem>>, %arg9: memref<512x128xbf16, #tpu.memory_space<vmem>>, %arg10: memref<1x128xf32, #tpu.memory_space<vmem>>, %arg11: memref<4x8x16xbf16, #tpu.memory_space<vmem>>, %arg12: memref<512x128xbf16, #tpu.memory_space<vmem>>, %arg13: memref<1x128xf32, #tpu.memory_space<vmem>>, %arg14: memref<1x8x128xf32, #tpu.memory_space<vmem>>) attributes {dimension_semantics = [#tpu.dimension_semantics<parallel>], iteration_bounds = array<i64: 2>, scalar_prefetch = 0 : i64, scratch_operands = 0 : i64, tpu.core_type = #tpu.core_type<tc>, window_params = [{transform_indices = @transform_0, window_bounds = array<i64: 1, 128, 256>}, {pipeline_mode = #tpu.pipeline_mode<synchronous>, transform_indices = @transform_1, window_bounds = array<i64: 4, 64, 128>}, {pipeline_mode = #tpu.pipeline_mode<synchronous>, transform_indices = @transform_2, window_bounds = array<i64: 1024, 128>}, {pipeline_mode = #tpu.pipeline_mode<synchronous>, transform_indices = @transform_3, window_bounds = array<i64: 1, 128>}, {pipeline_mode = #tpu.pipeline_mode<synchronous>, transform_indices = @transform_4, window_bounds = array<i64: 4, 32, 64>}, {pipeline_mode = #tpu.pipeline_mode<synchronous>, transform_indices = @transform_5, window_bounds = array<i64: 512, 128>}, {pipeline_mode = #tpu.pipeline_mode<synchronous>, transform_indices = @transform_6, window_bounds = array<i64: 1, 128>}, {pipeline_mode = #tpu.pipeline_mode<synchronous>, transform_indices = @transform_7, window_bounds = array<i64: 4, 16, 32>}, {pipeline_mode = #tpu.pipeline_mode<synchronous>, transform_indices = @transform_8, window_bounds = array<i64: 512, 128>}, {pipeline_mode = #tpu.pipeline_mode<synchronous>, transform_indices = @transform_9, window_bounds = array<i64: 1, 128>}, {pipeline_mode = #tpu.pipeline_mode<synchronous>, transform_indices = @transform_10, window_bounds = array<i64: 4, 8, 16>}, {pipeline_mode = #tpu.pipeline_mode<synchronous>, transform_indices = @transform_11, window_bounds = array<i64: 512, 128>}, {pipeline_mode = #tpu.pipeline_mode<synchronous>, transform_indices = @transform_12, window_bounds = array<i64: 1, 128>}, {transform_indices = @transform_13, window_bounds = array<i64: 1, 8, 128>}]} {
    %c0 = arith.constant 0 : index
    %c0_0 = arith.constant 0 : index
    %c0_1 = arith.constant 0 : index
    %0 = vector.load %arg1[%c0, %c0_0, %c0_1] : memref<1x128x256xbf16, #tpu.memory_space<vmem>>, vector<1x128x256xbf16>
    %1 = vector.shape_cast %0 : vector<1x128x256xbf16> to vector<128x256xbf16>
    %c0_2 = arith.constant 0 : index
    %c0_3 = arith.constant 0 : index
    %c0_4 = arith.constant 0 : index
    %2 = vector.load %arg2[%c0_2, %c0_3, %c0_4] : memref<4x64x128xbf16, #tpu.memory_space<vmem>>, vector<1x64x128xbf16>
    %3 = vector.shape_cast %2 : vector<1x64x128xbf16> to vector<64x128xbf16>
    %cst = arith.constant dense<0.000000e+00> : vector<64x256xf32>
    %4 = tpu.matmul %3, %1, %cst {dimension_numbers = #tpu.dot_dimension_numbers<[1], [0], [0], [1], [0, 0, 1, 1], [], []>} : vector<64x128xbf16>, vector<128x256xbf16>, vector<64x256xf32> -> vector<64x256xf32>
    %5 = arith.truncf %4 : vector<64x256xf32> to vector<64x256xbf16>
    %c1 = arith.constant 1 : index
    %c0_5 = arith.constant 0 : index
    %c0_6 = arith.constant 0 : index
    %6 = vector.load %arg2[%c1, %c0_5, %c0_6] : memref<4x64x128xbf16, #tpu.memory_space<vmem>>, vector<1x64x128xbf16>
    %7 = vector.shape_cast %6 : vector<1x64x128xbf16> to vector<64x128xbf16>
    %cst_7 = arith.constant dense<0.000000e+00> : vector<64x256xf32>
    %8 = tpu.matmul %7, %1, %cst_7 {dimension_numbers = #tpu.dot_dimension_numbers<[1], [0], [0], [1], [0, 0, 1, 1], [], []>} : vector<64x128xbf16>, vector<128x256xbf16>, vector<64x256xf32> -> vector<64x256xf32>
    %9 = arith.truncf %8 : vector<64x256xf32> to vector<64x256xbf16>
    %c2 = arith.constant 2 : index
    %c0_8 = arith.constant 0 : index
    %c0_9 = arith.constant 0 : index
    %10 = vector.load %arg2[%c2, %c0_8, %c0_9] : memref<4x64x128xbf16, #tpu.memory_space<vmem>>, vector<1x64x128xbf16>
    %11 = vector.shape_cast %10 : vector<1x64x128xbf16> to vector<64x128xbf16>
    %cst_10 = arith.constant dense<0.000000e+00> : vector<64x256xf32>
    %12 = tpu.matmul %11, %1, %cst_10 {dimension_numbers = #tpu.dot_dimension_numbers<[1], [0], [0], [1], [0, 0, 1, 1], [], []>} : vector<64x128xbf16>, vector<128x256xbf16>, vector<64x256xf32> -> vector<64x256xf32>
    %13 = arith.truncf %12 : vector<64x256xf32> to vector<64x256xbf16>
    %c3 = arith.constant 3 : index
    %c0_11 = arith.constant 0 : index
    %c0_12 = arith.constant 0 : index
    %14 = vector.load %arg2[%c3, %c0_11, %c0_12] : memref<4x64x128xbf16, #tpu.memory_space<vmem>>, vector<1x64x128xbf16>
    %15 = vector.shape_cast %14 : vector<1x64x128xbf16> to vector<64x128xbf16>
    %cst_13 = arith.constant dense<0.000000e+00> : vector<64x256xf32>
    %16 = tpu.matmul %15, %1, %cst_13 {dimension_numbers = #tpu.dot_dimension_numbers<[1], [0], [0], [1], [0, 0, 1, 1], [], []>} : vector<64x128xbf16>, vector<128x256xbf16>, vector<64x256xf32> -> vector<64x256xf32>
    %17 = arith.truncf %16 : vector<64x256xf32> to vector<64x256xbf16>
    %18 = tpu.concatenate %5, %9, %13, %17 in 1 : vector<64x256xbf16>, vector<64x256xbf16>, vector<64x256xbf16>, vector<64x256xbf16> -> vector<64x1024xbf16>
    %c0_14 = arith.constant 0 : index
    %c0_15 = arith.constant 0 : index
    %19 = vector.load %arg3[%c0_14, %c0_15] : memref<1024x128xbf16, #tpu.memory_space<vmem>>, vector<1024x128xbf16>
    %cst_16 = arith.constant dense<0.000000e+00> : vector<64x128xf32>
    %20 = tpu.matmul %18, %19, %cst_16 {dimension_numbers = #tpu.dot_dimension_numbers<[1], [0], [0], [1], [0, 0, 1, 1], [], []>} : vector<64x1024xbf16>, vector<1024x128xbf16>, vector<64x128xf32> -> vector<64x128xf32>
    %c0_17 = arith.constant 0 : index
    %c0_18 = arith.constant 0 : index
    %21 = vector.load %arg4[%c0_17, %c0_18] : memref<1x128xf32, #tpu.memory_space<vmem>>, vector<1x128xf32>
    %22 = vector.broadcast %21 : vector<1x128xf32> to vector<64x128xf32>
    %23 = arith.addf %20, %22 : vector<64x128xf32>
    %cst_19 = arith.constant 2.000000e-01 : f32
    %24 = vector.broadcast %cst_19 : f32 to vector<64x128xf32>
    %25 = arith.mulf %24, %23 : vector<64x128xf32>
    %26 = arith.maximumf %23, %25 : vector<64x128xf32>
    %27 = arith.truncf %26 : vector<64x128xf32> to vector<64x128xbf16>
    %c0_20 = arith.constant 0 : index
    %c0_21 = arith.constant 0 : index
    %c0_22 = arith.constant 0 : index
    %28 = vector.load %arg5[%c0_20, %c0_21, %c0_22] : memref<4x32x64xbf16, #tpu.memory_space<vmem>>, vector<1x32x64xbf16>
    %29 = vector.shape_cast %28 : vector<1x32x64xbf16> to vector<32x64xbf16>
    %cst_23 = arith.constant dense<0.000000e+00> : vector<32x128xf32>
    %30 = tpu.matmul %29, %27, %cst_23 {dimension_numbers = #tpu.dot_dimension_numbers<[1], [0], [0], [1], [0, 0, 1, 1], [], []>} : vector<32x64xbf16>, vector<64x128xbf16>, vector<32x128xf32> -> vector<32x128xf32>
    %31 = arith.truncf %30 : vector<32x128xf32> to vector<32x128xbf16>
    %c1_24 = arith.constant 1 : index
    %c0_25 = arith.constant 0 : index
    %c0_26 = arith.constant 0 : index
    %32 = vector.load %arg5[%c1_24, %c0_25, %c0_26] : memref<4x32x64xbf16, #tpu.memory_space<vmem>>, vector<1x32x64xbf16>
    %33 = vector.shape_cast %32 : vector<1x32x64xbf16> to vector<32x64xbf16>
    %cst_27 = arith.constant dense<0.000000e+00> : vector<32x128xf32>
    %34 = tpu.matmul %33, %27, %cst_27 {dimension_numbers = #tpu.dot_dimension_numbers<[1], [0], [0], [1], [0, 0, 1, 1], [], []>} : vector<32x64xbf16>, vector<64x128xbf16>, vector<32x128xf32> -> vector<32x128xf32>
    %35 = arith.truncf %34 : vector<32x128xf32> to vector<32x128xbf16>
    %c2_28 = arith.constant 2 : index
    %c0_29 = arith.constant 0 : index
    %c0_30 = arith.constant 0 : index
    %36 = vector.load %arg5[%c2_28, %c0_29, %c0_30] : memref<4x32x64xbf16, #tpu.memory_space<vmem>>, vector<1x32x64xbf16>
    %37 = vector.shape_cast %36 : vector<1x32x64xbf16> to vector<32x64xbf16>
    %cst_31 = arith.constant dense<0.000000e+00> : vector<32x128xf32>
    %38 = tpu.matmul %37, %27, %cst_31 {dimension_numbers = #tpu.dot_dimension_numbers<[1], [0], [0], [1], [0, 0, 1, 1], [], []>} : vector<32x64xbf16>, vector<64x128xbf16>, vector<32x128xf32> -> vector<32x128xf32>
    %39 = arith.truncf %38 : vector<32x128xf32> to vector<32x128xbf16>
    %c3_32 = arith.constant 3 : index
    %c0_33 = arith.constant 0 : index
    %c0_34 = arith.constant 0 : index
    %40 = vector.load %arg5[%c3_32, %c0_33, %c0_34] : memref<4x32x64xbf16, #tpu.memory_space<vmem>>, vector<1x32x64xbf16>
    %41 = vector.shape_cast %40 : vector<1x32x64xbf16> to vector<32x64xbf16>
    %cst_35 = arith.constant dense<0.000000e+00> : vector<32x128xf32>
    %42 = tpu.matmul %41, %27, %cst_35 {dimension_numbers = #tpu.dot_dimension_numbers<[1], [0], [0], [1], [0, 0, 1, 1], [], []>} : vector<32x64xbf16>, vector<64x128xbf16>, vector<32x128xf32> -> vector<32x128xf32>
    %43 = arith.truncf %42 : vector<32x128xf32> to vector<32x128xbf16>
    %44 = tpu.concatenate %31, %35, %39, %43 in 1 : vector<32x128xbf16>, vector<32x128xbf16>, vector<32x128xbf16>, vector<32x128xbf16> -> vector<32x512xbf16>
    %c0_36 = arith.constant 0 : index
    %c0_37 = arith.constant 0 : index
    %45 = vector.load %arg6[%c0_36, %c0_37] : memref<512x128xbf16, #tpu.memory_space<vmem>>, vector<512x128xbf16>
    %cst_38 = arith.constant dense<0.000000e+00> : vector<32x128xf32>
    %46 = tpu.matmul %44, %45, %cst_38 {dimension_numbers = #tpu.dot_dimension_numbers<[1], [0], [0], [1], [0, 0, 1, 1], [], []>} : vector<32x512xbf16>, vector<512x128xbf16>, vector<32x128xf32> -> vector<32x128xf32>
    %c0_39 = arith.constant 0 : index
    %c0_40 = arith.constant 0 : index
    %47 = vector.load %arg7[%c0_39, %c0_40] : memref<1x128xf32, #tpu.memory_space<vmem>>, vector<1x128xf32>
    %48 = vector.broadcast %47 : vector<1x128xf32> to vector<32x128xf32>
    %49 = arith.addf %46, %48 : vector<32x128xf32>
    %cst_41 = arith.constant 2.000000e-01 : f32
    %50 = vector.broadcast %cst_41 : f32 to vector<32x128xf32>
    %51 = arith.mulf %50, %49 : vector<32x128xf32>
    %52 = arith.maximumf %49, %51 : vector<32x128xf32>
    %53 = arith.truncf %52 : vector<32x128xf32> to vector<32x128xbf16>
    %c0_42 = arith.constant 0 : index
    %c0_43 = arith.constant 0 : index
    %c0_44 = arith.constant 0 : index
    %54 = vector.load %arg8[%c0_42, %c0_43, %c0_44] : memref<4x16x32xbf16, #tpu.memory_space<vmem>>, vector<1x16x32xbf16>
    %55 = vector.shape_cast %54 : vector<1x16x32xbf16> to vector<16x32xbf16>
    %cst_45 = arith.constant dense<0.000000e+00> : vector<16x128xf32>
    %56 = tpu.matmul %55, %53, %cst_45 {dimension_numbers = #tpu.dot_dimension_numbers<[1], [0], [0], [1], [0, 0, 1, 1], [], []>} : vector<16x32xbf16>, vector<32x128xbf16>, vector<16x128xf32> -> vector<16x128xf32>
    %57 = arith.truncf %56 : vector<16x128xf32> to vector<16x128xbf16>
    %c1_46 = arith.constant 1 : index
    %c0_47 = arith.constant 0 : index
    %c0_48 = arith.constant 0 : index
    %58 = vector.load %arg8[%c1_46, %c0_47, %c0_48] : memref<4x16x32xbf16, #tpu.memory_space<vmem>>, vector<1x16x32xbf16>
    %59 = vector.shape_cast %58 : vector<1x16x32xbf16> to vector<16x32xbf16>
    %cst_49 = arith.constant dense<0.000000e+00> : vector<16x128xf32>
    %60 = tpu.matmul %59, %53, %cst_49 {dimension_numbers = #tpu.dot_dimension_numbers<[1], [0], [0], [1], [0, 0, 1, 1], [], []>} : vector<16x32xbf16>, vector<32x128xbf16>, vector<16x128xf32> -> vector<16x128xf32>
    %61 = arith.truncf %60 : vector<16x128xf32> to vector<16x128xbf16>
    %c2_50 = arith.constant 2 : index
    %c0_51 = arith.constant 0 : index
    %c0_52 = arith.constant 0 : index
    %62 = vector.load %arg8[%c2_50, %c0_51, %c0_52] : memref<4x16x32xbf16, #tpu.memory_space<vmem>>, vector<1x16x32xbf16>
    %63 = vector.shape_cast %62 : vector<1x16x32xbf16> to vector<16x32xbf16>
    %cst_53 = arith.constant dense<0.000000e+00> : vector<16x128xf32>
    %64 = tpu.matmul %63, %53, %cst_53 {dimension_numbers = #tpu.dot_dimension_numbers<[1], [0], [0], [1], [0, 0, 1, 1], [], []>} : vector<16x32xbf16>, vector<32x128xbf16>, vector<16x128xf32> -> vector<16x128xf32>
    %65 = arith.truncf %64 : vector<16x128xf32> to vector<16x128xbf16>
    %c3_54 = arith.constant 3 : index
    %c0_55 = arith.constant 0 : index
    %c0_56 = arith.constant 0 : index
    %66 = vector.load %arg8[%c3_54, %c0_55, %c0_56] : memref<4x16x32xbf16, #tpu.memory_space<vmem>>, vector<1x16x32xbf16>
    %67 = vector.shape_cast %66 : vector<1x16x32xbf16> to vector<16x32xbf16>
    %cst_57 = arith.constant dense<0.000000e+00> : vector<16x128xf32>
    %68 = tpu.matmul %67, %53, %cst_57 {dimension_numbers = #tpu.dot_dimension_numbers<[1], [0], [0], [1], [0, 0, 1, 1], [], []>} : vector<16x32xbf16>, vector<32x128xbf16>, vector<16x128xf32> -> vector<16x128xf32>
    %69 = arith.truncf %68 : vector<16x128xf32> to vector<16x128xbf16>
    %70 = tpu.concatenate %57, %61, %65, %69 in 1 : vector<16x128xbf16>, vector<16x128xbf16>, vector<16x128xbf16>, vector<16x128xbf16> -> vector<16x512xbf16>
    %c0_58 = arith.constant 0 : index
    %c0_59 = arith.constant 0 : index
    %71 = vector.load %arg9[%c0_58, %c0_59] : memref<512x128xbf16, #tpu.memory_space<vmem>>, vector<512x128xbf16>
    %cst_60 = arith.constant dense<0.000000e+00> : vector<16x128xf32>
    %72 = tpu.matmul %70, %71, %cst_60 {dimension_numbers = #tpu.dot_dimension_numbers<[1], [0], [0], [1], [0, 0, 1, 1], [], []>} : vector<16x512xbf16>, vector<512x128xbf16>, vector<16x128xf32> -> vector<16x128xf32>
    %c0_61 = arith.constant 0 : index
    %c0_62 = arith.constant 0 : index
    %73 = vector.load %arg10[%c0_61, %c0_62] : memref<1x128xf32, #tpu.memory_space<vmem>>, vector<1x128xf32>
    %74 = vector.broadcast %73 : vector<1x128xf32> to vector<16x128xf32>
    %75 = arith.addf %72, %74 : vector<16x128xf32>
    %cst_63 = arith.constant 2.000000e-01 : f32
    %76 = vector.broadcast %cst_63 : f32 to vector<16x128xf32>
    %77 = arith.mulf %76, %75 : vector<16x128xf32>
    %78 = arith.maximumf %75, %77 : vector<16x128xf32>
    %79 = arith.truncf %78 : vector<16x128xf32> to vector<16x128xbf16>
    %c0_64 = arith.constant 0 : index
    %c0_65 = arith.constant 0 : index
    %c0_66 = arith.constant 0 : index
    %80 = vector.load %arg11[%c0_64, %c0_65, %c0_66] : memref<4x8x16xbf16, #tpu.memory_space<vmem>>, vector<1x8x16xbf16>
    %81 = vector.shape_cast %80 : vector<1x8x16xbf16> to vector<8x16xbf16>
    %cst_67 = arith.constant dense<0.000000e+00> : vector<8x128xf32>
    %82 = tpu.matmul %81, %79, %cst_67 {dimension_numbers = #tpu.dot_dimension_numbers<[1], [0], [0], [1], [0, 0, 1, 1], [], []>} : vector<8x16xbf16>, vector<16x128xbf16>, vector<8x128xf32> -> vector<8x128xf32>
    %83 = arith.truncf %82 : vector<8x128xf32> to vector<8x128xbf16>
    %c1_68 = arith.constant 1 : index
    %c0_69 = arith.constant 0 : index
    %c0_70 = arith.constant 0 : index
    %84 = vector.load %arg11[%c1_68, %c0_69, %c0_70] : memref<4x8x16xbf16, #tpu.memory_space<vmem>>, vector<1x8x16xbf16>
    %85 = vector.shape_cast %84 : vector<1x8x16xbf16> to vector<8x16xbf16>
    %cst_71 = arith.constant dense<0.000000e+00> : vector<8x128xf32>
    %86 = tpu.matmul %85, %79, %cst_71 {dimension_numbers = #tpu.dot_dimension_numbers<[1], [0], [0], [1], [0, 0, 1, 1], [], []>} : vector<8x16xbf16>, vector<16x128xbf16>, vector<8x128xf32> -> vector<8x128xf32>
    %87 = arith.truncf %86 : vector<8x128xf32> to vector<8x128xbf16>
    %c2_72 = arith.constant 2 : index
    %c0_73 = arith.constant 0 : index
    %c0_74 = arith.constant 0 : index
    %88 = vector.load %arg11[%c2_72, %c0_73, %c0_74] : memref<4x8x16xbf16, #tpu.memory_space<vmem>>, vector<1x8x16xbf16>
    %89 = vector.shape_cast %88 : vector<1x8x16xbf16> to vector<8x16xbf16>
    %cst_75 = arith.constant dense<0.000000e+00> : vector<8x128xf32>
    %90 = tpu.matmul %89, %79, %cst_75 {dimension_numbers = #tpu.dot_dimension_numbers<[1], [0], [0], [1], [0, 0, 1, 1], [], []>} : vector<8x16xbf16>, vector<16x128xbf16>, vector<8x128xf32> -> vector<8x128xf32>
    %91 = arith.truncf %90 : vector<8x128xf32> to vector<8x128xbf16>
    %c3_76 = arith.constant 3 : index
    %c0_77 = arith.constant 0 : index
    %c0_78 = arith.constant 0 : index
    %92 = vector.load %arg11[%c3_76, %c0_77, %c0_78] : memref<4x8x16xbf16, #tpu.memory_space<vmem>>, vector<1x8x16xbf16>
    %93 = vector.shape_cast %92 : vector<1x8x16xbf16> to vector<8x16xbf16>
    %cst_79 = arith.constant dense<0.000000e+00> : vector<8x128xf32>
    %94 = tpu.matmul %93, %79, %cst_79 {dimension_numbers = #tpu.dot_dimension_numbers<[1], [0], [0], [1], [0, 0, 1, 1], [], []>} : vector<8x16xbf16>, vector<16x128xbf16>, vector<8x128xf32> -> vector<8x128xf32>
    %95 = arith.truncf %94 : vector<8x128xf32> to vector<8x128xbf16>
    %96 = tpu.concatenate %83, %87, %91, %95 in 1 : vector<8x128xbf16>, vector<8x128xbf16>, vector<8x128xbf16>, vector<8x128xbf16> -> vector<8x512xbf16>
    %c0_80 = arith.constant 0 : index
    %c0_81 = arith.constant 0 : index
    %97 = vector.load %arg12[%c0_80, %c0_81] : memref<512x128xbf16, #tpu.memory_space<vmem>>, vector<512x128xbf16>
    %cst_82 = arith.constant dense<0.000000e+00> : vector<8x128xf32>
    %98 = tpu.matmul %96, %97, %cst_82 {dimension_numbers = #tpu.dot_dimension_numbers<[1], [0], [0], [1], [0, 0, 1, 1], [], []>} : vector<8x512xbf16>, vector<512x128xbf16>, vector<8x128xf32> -> vector<8x128xf32>
    %c0_83 = arith.constant 0 : index
    %c0_84 = arith.constant 0 : index
    %99 = vector.load %arg13[%c0_83, %c0_84] : memref<1x128xf32, #tpu.memory_space<vmem>>, vector<1x128xf32>
    %100 = vector.broadcast %99 : vector<1x128xf32> to vector<8x128xf32>
    %101 = arith.addf %98, %100 : vector<8x128xf32>
    %cst_85 = arith.constant 2.000000e-01 : f32
    %102 = vector.broadcast %cst_85 : f32 to vector<8x128xf32>
    %103 = arith.mulf %102, %101 : vector<8x128xf32>
    %104 = arith.maximumf %101, %103 : vector<8x128xf32>
    %c0_86 = arith.constant 0 : index
    %c0_87 = arith.constant 0 : index
    %c0_88 = arith.constant 0 : index
    %105 = vector.load %arg14[%c0_86, %c0_87, %c0_88] : memref<1x8x128xf32, #tpu.memory_space<vmem>>, vector<1x8x128xf32>
    %106 = vector.shape_cast %105 : vector<1x8x128xf32> to vector<8x128xf32>
    %107 = vector.shape_cast %104 : vector<8x128xf32> to vector<1x8x128xf32>
    tpu.vector_store %arg14[%c0_86, %c0_87, %c0_88], %107 {strides = array<i32>} : memref<1x8x128xf32, #tpu.memory_space<vmem>>, vector<1x8x128xf32>,
    return
  }
  func.func @transform_0(%arg0: i32) -> (i32, i32, i32) {
    %c0_i32 = arith.constant 0 : i32
    %c0_i32_0 = arith.constant 0 : i32
    %c0_i32_1 = arith.constant 0 : i32
    return %arg0, %c0_i32, %c0_i32_0 : i32, i32, i32
  }
  func.func @transform_1(%arg0: i32) -> (i32, i32, i32) {
    %c0_i32 = arith.constant 0 : i32
    %c0_i32_0 = arith.constant 0 : i32
    %c0_i32_1 = arith.constant 0 : i32
    %c0_i32_2 = arith.constant 0 : i32
    return %c0_i32, %c0_i32_0, %c0_i32_1 : i32, i32, i32
  }
  func.func @transform_2(%arg0: i32) -> (i32, i32) {
    %c0_i32 = arith.constant 0 : i32
    %c0_i32_0 = arith.constant 0 : i32
    %c0_i32_1 = arith.constant 0 : i32
    return %c0_i32, %c0_i32_0 : i32, i32
  }
  func.func @transform_3(%arg0: i32) -> (i32, i32) {
    %c0_i32 = arith.constant 0 : i32
    %c0_i32_0 = arith.constant 0 : i32
    %c0_i32_1 = arith.constant 0 : i32
    return %c0_i32, %c0_i32_0 : i32, i32
  }
  func.func @transform_4(%arg0: i32) -> (i32, i32, i32) {
    %c0_i32 = arith.constant 0 : i32
    %c0_i32_0 = arith.constant 0 : i32
    %c0_i32_1 = arith.constant 0 : i32
    %c0_i32_2 = arith.constant 0 : i32
    return %c0_i32, %c0_i32_0, %c0_i32_1 : i32, i32, i32
  }
  func.func @transform_5(%arg0: i32) -> (i32, i32) {
    %c0_i32 = arith.constant 0 : i32
    %c0_i32_0 = arith.constant 0 : i32
    %c0_i32_1 = arith.constant 0 : i32
    return %c0_i32, %c0_i32_0 : i32, i32
  }
  func.func @transform_6(%arg0: i32) -> (i32, i32) {
    %c0_i32 = arith.constant 0 : i32
    %c0_i32_0 = arith.constant 0 : i32
    %c0_i32_1 = arith.constant 0 : i32
    return %c0_i32, %c0_i32_0 : i32, i32
  }
  func.func @transform_7(%arg0: i32) -> (i32, i32, i32) {
    %c0_i32 = arith.constant 0 : i32
    %c0_i32_0 = arith.constant 0 : i32
    %c0_i32_1 = arith.constant 0 : i32
    %c0_i32_2 = arith.constant 0 : i32
    return %c0_i32, %c0_i32_0, %c0_i32_1 : i32, i32, i32
  }
  func.func @transform_8(%arg0: i32) -> (i32, i32) {
    %c0_i32 = arith.constant 0 : i32
    %c0_i32_0 = arith.constant 0 : i32
    %c0_i32_1 = arith.constant 0 : i32
    return %c0_i32, %c0_i32_0 : i32, i32
  }
  func.func @transform_9(%arg0: i32) -> (i32, i32) {
    %c0_i32 = arith.constant 0 : i32
    %c0_i32_0 = arith.constant 0 : i32
    %c0_i32_1 = arith.constant 0 : i32
    return %c0_i32, %c0_i32_0 : i32, i32
  }
  func.func @transform_10(%arg0: i32) -> (i32, i32, i32) {
    %c0_i32 = arith.constant 0 : i32
    %c0_i32_0 = arith.constant 0 : i32
    %c0_i32_1 = arith.constant 0 : i32
    %c0_i32_2 = arith.constant 0 : i32
    return %c0_i32, %c0_i32_0, %c0_i32_1 : i32, i32, i32
  }
  func.func @transform_11(%arg0: i32) -> (i32, i32) {
    %c0_i32 = arith.constant 0 : i32
    %c0_i32_0 = arith.constant 0 : i32
    %c0_i32_1 = arith.constant 0 : i32
    return %c0_i32, %c0_i32_0 : i32, i32
  }
  func.func @transform_12(%arg0: i32) -> (i32, i32) {
    %c0_i32 = arith.constant 0 : i32
    %c0_i32_0 = arith.constant 0 : i32
    %c0_i32_1 = arith.constant 0 : i32
    return %c0_i32, %c0_i32_0 : i32, i32
  }
  func.func @transform_13(%arg0: i32) -> (i32, i32, i32) {
    %c0_i32 = arith.constant 0 : i32
    %c0_i32_0 = arith.constant 0 : i32
    %c0_i32_1 = arith.constant 0 : i32
    return %arg0, %c0_i32, %c0_i32_0 : i32, i32, i32
  }
}

</mosaic_0001>

<llo_original>
// kernel: d1_forward.1
$region0: #{d1_forward.1}
  #allocation0 [shape = 'u32[]', space=smem, size = 0x4, offset = 0x4, fixed_abs, tag = 'smem constant byte address 0x4 - core index']
  #allocation1 [shape = 'u32[144,128]{1,0:T(1,128)}', space=vmem, size = 0x12000, scoped, tag = 'internal scratch']
  %s0 = inlined_call_operand.vmem [shape: bf16[2,128,256], index: 0, kind: input, shape index: {}]
  %s1 = inlined_call_operand.vmem [shape: bf16[4,64,128], index: 1, kind: input, shape index: {}]
  %s2 = inlined_call_operand.vmem [shape: bf16[1024,128], index: 2, kind: input, shape index: {}]
  %s3 = inlined_call_operand.vmem [shape: f32[1,128], index: 3, kind: input, shape index: {}]
  %s4 = inlined_call_operand.vmem [shape: bf16[4,32,64], index: 4, kind: input, shape index: {}]
  %s5 = inlined_call_operand.vmem [shape: bf16[512,128], index: 5, kind: input, shape index: {}]
  %s6 = inlined_call_operand.vmem [shape: f32[1,128], index: 6, kind: input, shape index: {}]
  %s7 = inlined_call_operand.vmem [shape: bf16[4,16,32], index: 7, kind: input, shape index: {}]
  %s8 = inlined_call_operand.vmem [shape: bf16[512,128], index: 8, kind: input, shape index: {}]
  %s9 = inlined_call_operand.vmem [shape: f32[1,128], index: 9, kind: input, shape index: {}]
  %s10 = inlined_call_operand.vmem [shape: bf16[4,8,16], index: 10, kind: input, shape index: {}]
  %s11 = inlined_call_operand.vmem [shape: bf16[512,128], index: 11, kind: input, shape index: {}]
  %s12 = inlined_call_operand.vmem [shape: f32[1,128], index: 12, kind: input, shape index: {}]
  %s13 = inlined_call_operand.vmem [shape: f32[2,8,128], index: 13, kind: output, shape index: {}]
  %s14 = sld [smem:[#allocation0]]
  $region85: #{d1_forward.1} parent=0
    _
  %s16 = ssub.s32 1, %s14
  %s17 = scalar_select 0, %s16, %s14
  loop: start=0, step=1, limit=4
  $region2: #{d1_forward.1} parent=0 // loop_pre_header
    _
  $region3: #{d1_forward.1} parent=0 // loop_header
    %s19 = sphi 0, %s23
    %p20 = scmp.ge.s32.totalorder %s19, 4
    %s29 = sphi 0, %s31
    %s32 = sphi 0, %s29
    %s33 = sphi 0, %s32
    %s49 = sphi 0, %s33
    %s53 = sphi 0, %s53
    %s55 = sphi 0, %s53
    %s56 = sphi 0, %s55
    %s70 = sphi 0, %s56
    %s74 = sphi 0, %s74
    %s76 = sphi 0, %s74
    %s77 = sphi 0, %s76
    %s91 = sphi 0, %s77
    %s95 = sphi 0, %s95
    %s97 = sphi 0, %s95
    %s98 = sphi 0, %s97
    %s112 = sphi 0, %s98
    %s116 = sphi 0, %s116
    %s118 = sphi 0, %s116
    %s119 = sphi 0, %s118
    %s133 = sphi 0, %s119
    %s137 = sphi 0, %s137
    %s139 = sphi 0, %s137
    %s140 = sphi 0, %s139
    %s154 = sphi 0, %s140
    %s158 = sphi 0, %s158
    %s160 = sphi 0, %s158
    %s161 = sphi 0, %s160
    %s175 = sphi 0, %s161
    %s179 = sphi 0, %s179
    %s181 = sphi 0, %s179
    %s182 = sphi 0, %s181
    %s196 = sphi 0, %s182
    %s200 = sphi 0, %s200
    %s202 = sphi 0, %s200
    %s203 = sphi 0, %s202
    %s217 = sphi 0, %s203
    %s221 = sphi 0, %s221
    %s223 = sphi 0, %s221
    %s224 = sphi 0, %s223
    %s238 = sphi 0, %s224
    %s242 = sphi 0, %s242
    %s244 = sphi 0, %s242
    %s245 = sphi 0, %s244
    %s259 = sphi 0, %s245
    %s263 = sphi 0, %s263
    %s265 = sphi 0, %s263
    %s266 = sphi 0, %s265
    %s280 = sphi 0, %s266
    %s284 = sphi 0, %s284
    %s286 = sphi 0, %s284
    %s287 = sphi 0, %s286
    %s301 = sphi 0, %s287
    %s307 = sphi 0, %s309
    %s310 = sphi 0, %s307
    %s311 = sphi 0, %s310
    %s327 = sphi 0, %s311
  $region4: #{d1_forward.1} parent=0 // loop_header_branch
    %22 = sbr.rel (%p20) target = $region8
  $region5: #{d1_forward.1} parent=0 // loop_body
    %s24 = ssub.s32 %s19, 1
    %s25 = ssub.s32 %s19, 2
    %s26 = sadd.s32 %s19, 1
    %s27 = ssub.s32 %s19, %s26
    %p28 = scmp.eq.s32.totalorder %s27, 0
    %s30 = sadd.s32 %s29, 1
    %s31 = scalar_select %p28, %s29, %s30
    %p34 = pneg %p28
    %p35 = scmp.eq.s32.totalorder %s19, 1
    %p36 = por %p34, %p35
    %p37 = scmp.ne.s32.totalorder %s29, %s32
    %p38 = scmp.eq.s32.totalorder %s19, 0
    %p39 = por %p37, %p38
    %p40 = scmp.ne.s32.totalorder %s29, %s32
    %p41 = scmp.eq.s32.totalorder %s24, 1
    %p42 = por %p40, %p41
    %p43 = scmp.ne.s32.totalorder %s32, %s33
    %p44 = scmp.eq.s32.totalorder %s24, 0
    %p45 = por %p43, %p44
    %p46 = scmp.ne.s32.totalorder %s32, %s33
    %p47 = scmp.eq.s32.totalorder %s25, 1
    %p48 = por %p46, %p47
    %p50 = scmp.ne.s32.totalorder %s33, %s49
    %p51 = scmp.eq.s32.totalorder %s25, 0
    %p52 = por %p50, %p51
    %s54 = sadd.s32 %s53, 1
    %p57 = scmp.eq.s32.totalorder %s19, 1
    %p58 = scmp.ne.s32.totalorder %s53, %s55
    %p59 = scmp.eq.s32.totalorder %s19, 0
    %p60 = por %p58, %p59
    %p61 = scmp.ne.s32.totalorder %s53, %s55
    %p62 = scmp.eq.s32.totalorder %s24, 1
    %p63 = por %p61, %p62
    %p64 = scmp.ne.s32.totalorder %s55, %s56
    %p65 = scmp.eq.s32.totalorder %s24, 0
    %p66 = por %p64, %p65
    %p67 = scmp.ne.s32.totalorder %s55, %s56
    %p68 = scmp.eq.s32.totalorder %s25, 1
    %p69 = por %p67, %p68
    %p71 = scmp.ne.s32.totalorder %s56, %s70
    %p72 = scmp.eq.s32.totalorder %s25, 0
    %p73 = por %p71, %p72
    %s75 = sadd.s32 %s74, 1
    %p78 = scmp.eq.s32.totalorder %s19, 1
    %p79 = scmp.ne.s32.totalorder %s74, %s76
    %p80 = scmp.eq.s32.totalorder %s19, 0
    %p81 = por %p79, %p80
    %p82 = scmp.ne.s32.totalorder %s74, %s76
    %p83 = scmp.eq.s32.totalorder %s24, 1
    %p84 = por %p82, %p83
    %p85 = scmp.ne.s32.totalorder %s76, %s77
    %p86 = scmp.eq.s32.totalorder %s24, 0
    %p87 = por %p85, %p86
    %p88 = scmp.ne.s32.totalorder %s76, %s77
    %p89 = scmp.eq.s32.totalorder %s25, 1
    %p90 = por %p88, %p89
    %p92 = scmp.ne.s32.totalorder %s77, %s91
    %p93 = scmp.eq.s32.totalorder %s25, 0
    %p94 = por %p92, %p93
    %s96 = sadd.s32 %s95, 1
    %p99 = scmp.eq.s32.totalorder %s19, 1
    %p100 = scmp.ne.s32.totalorder %s95, %s97
    %p101 = scmp.eq.s32.totalorder %s19, 0
    %p102 = por %p100, %p101
    %p103 = scmp.ne.s32.totalorder %s95, %s97
    %p104 = scmp.eq.s32.totalorder %s24, 1
    %p105 = por %p103, %p104
    %p106 = scmp.ne.s32.totalorder %s97, %s98
    %p107 = scmp.eq.s32.totalorder %s24, 0
    %p108 = por %p106, %p107
    %p109 = scmp.ne.s32.totalorder %s97, %s98
    %p110 = scmp.eq.s32.totalorder %s25, 1
    %p111 = por %p109, %p110
    %p113 = scmp.ne.s32.totalorder %s98, %s112
    %p114 = scmp.eq.s32.totalorder %s25, 0
    %p115 = por %p113, %p114
    %s117 = sadd.s32 %s116, 1
    %p120 = scmp.eq.s32.totalorder %s19, 1
    %p121 = scmp.ne.s32.totalorder %s116, %s118
    %p122 = scmp.eq.s32.totalorder %s19, 0
    %p123 = por %p121, %p122
    %p124 = scmp.ne.s32.totalorder %s116, %s118
    %p125 = scmp.eq.s32.totalorder %s24, 1
    %p126 = por %p124, %p125
    %p127 = scmp.ne.s32.totalorder %s118, %s119
    %p128 = scmp.eq.s32.totalorder %s24, 0
    %p129 = por %p127, %p128
    %p130 = scmp.ne.s32.totalorder %s118, %s119
    %p131 = scmp.eq.s32.totalorder %s25, 1
    %p132 = por %p130, %p131
    %p134 = scmp.ne.s32.totalorder %s119, %s133
    %p135 = scmp.eq.s32.totalorder %s25, 0
    %p136 = por %p134, %p135
    %s138 = sadd.s32 %s137, 1
    %p141 = scmp.eq.s32.totalorder %s19, 1
    %p142 = scmp.ne.s32.totalorder %s137, %s139
    %p143 = scmp.eq.s32.totalorder %s19, 0
    %p144 = por %p142, %p143
    %p145 = scmp.ne.s32.totalorder %s137, %s139
    %p146 = scmp.eq.s32.totalorder %s24, 1
    %p147 = por %p145, %p146
    %p148 = scmp.ne.s32.totalorder %s139, %s140
    %p149 = scmp.eq.s32.totalorder %s24, 0
    %p150 = por %p148, %p149
    %p151 = scmp.ne.s32.totalorder %s139, %s140
    %p152 = scmp.eq.s32.totalorder %s25, 1
    %p153 = por %p151, %p152
    %p155 = scmp.ne.s32.totalorder %s140, %s154
    %p156 = scmp.eq.s32.totalorder %s25, 0
    %p157 = por %p155, %p156
    %s159 = sadd.s32 %s158, 1
    %p162 = scmp.eq.s32.totalorder %s19, 1
    %p163 = scmp.ne.s32.totalorder %s158, %s160
    %p164 = scmp.eq.s32.totalorder %s19, 0
    %p165 = por %p163, %p164
    %p166 = scmp.ne.s32.totalorder %s158, %s160
    %p167 = scmp.eq.s32.totalorder %s24, 1
    %p168 = por %p166, %p167
    %p169 = scmp.ne.s32.totalorder %s160, %s161
    %p170 = scmp.eq.s32.totalorder %s24, 0
    %p171 = por %p169, %p170
    %p172 = scmp.ne.s32.totalorder %s160, %s161
    %p173 = scmp.eq.s32.totalorder %s25, 1
    %p174 = por %p172, %p173
    %p176 = scmp.ne.s32.totalorder %s161, %s175
    %p177 = scmp.eq.s32.totalorder %s25, 0
    %p178 = por %p176, %p177
    %s180 = sadd.s32 %s179, 1
    %p183 = scmp.eq.s32.totalorder %s19, 1
    %p184 = scmp.ne.s32.totalorder %s179, %s181
    %p185 = scmp.eq.s32.totalorder %s19, 0
    %p186 = por %p184, %p185
    %p187 = scmp.ne.s32.totalorder %s179, %s181
    %p188 = scmp.eq.s32.totalorder %s24, 1
    %p189 = por %p187, %p188
    %p190 = scmp.ne.s32.totalorder %s181, %s182
    %p191 = scmp.eq.s32.totalorder %s24, 0
    %p192 = por %p190, %p191
    %p193 = scmp.ne.s32.totalorder %s181, %s182
    %p194 = scmp.eq.s32.totalorder %s25, 1
    %p195 = por %p193, %p194
    %p197 = scmp.ne.s32.totalorder %s182, %s196
    %p198 = scmp.eq.s32.totalorder %s25, 0
    %p199 = por %p197, %p198
    %s201 = sadd.s32 %s200, 1
    %p204 = scmp.eq.s32.totalorder %s19, 1
    %p205 = scmp.ne.s32.totalorder %s200, %s202
    %p206 = scmp.eq.s32.totalorder %s19, 0
    %p207 = por %p205, %p206
    %p208 = scmp.ne.s32.totalorder %s200, %s202
    %p209 = scmp.eq.s32.totalorder %s24, 1
    %p210 = por %p208, %p209
    %p211 = scmp.ne.s32.totalorder %s202, %s203
    %p212 = scmp.eq.s32.totalorder %s24, 0
    %p213 = por %p211, %p212
    %p214 = scmp.ne.s32.totalorder %s202, %s203
    %p215 = scmp.eq.s32.totalorder %s25, 1
    %p216 = por %p214, %p215
    %p218 = scmp.ne.s32.totalorder %s203, %s217
    %p219 = scmp.eq.s32.totalorder %s25, 0
    %p220 = por %p218, %p219
    %s222 = sadd.s32 %s221, 1
    %p225 = scmp.eq.s32.totalorder %s19, 1
    %p226 = scmp.ne.s32.totalorder %s221, %s223
    %p227 = scmp.eq.s32.totalorder %s19, 0
    %p228 = por %p226, %p227
    %p229 = scmp.ne.s32.totalorder %s221, %s223
    %p230 = scmp.eq.s32.totalorder %s24, 1
    %p231 = por %p229, %p230
    %p232 = scmp.ne.s32.totalorder %s223, %s224
    %p233 = scmp.eq.s32.totalorder %s24, 0
    %p234 = por %p232, %p233
    %p235 = scmp.ne.s32.totalorder %s223, %s224
    %p236 = scmp.eq.s32.totalorder %s25, 1
    %p237 = por %p235, %p236
    %p239 = scmp.ne.s32.totalorder %s224, %s238
    %p240 = scmp.eq.s32.totalorder %s25, 0
    %p241 = por %p239, %p240
    %s243 = sadd.s32 %s242, 1
    %p246 = scmp.eq.s32.totalorder %s19, 1
    %p247 = scmp.ne.s32.totalorder %s242, %s244
    %p248 = scmp.eq.s32.totalorder %s19, 0
    %p249 = por %p247, %p248
    %p250 = scmp.ne.s32.totalorder %s242, %s244
    %p251 = scmp.eq.s32.totalorder %s24, 1
    %p252 = por %p250, %p251
    %p253 = scmp.ne.s32.totalorder %s244, %s245
    %p254 = scmp.eq.s32.totalorder %s24, 0
    %p255 = por %p253, %p254
    %p256 = scmp.ne.s32.totalorder %s244, %s245
    %p257 = scmp.eq.s32.totalorder %s25, 1
    %p258 = por %p256, %p257
    %p260 = scmp.ne.s32.totalorder %s245, %s259
    %p261 = scmp.eq.s32.totalorder %s25, 0
    %p262 = por %p260, %p261
    %s264 = sadd.s32 %s263, 1
    %p267 = scmp.eq.s32.totalorder %s19, 1
    %p268 = scmp.ne.s32.totalorder %s263, %s265
    %p269 = scmp.eq.s32.totalorder %s19, 0
    %p270 = por %p268, %p269
    %p271 = scmp.ne.s32.totalorder %s263, %s265
    %p272 = scmp.eq.s32.totalorder %s24, 1
    %p273 = por %p271, %p272
    %p274 = scmp.ne.s32.totalorder %s265, %s266
    %p275 = scmp.eq.s32.totalorder %s24, 0
    %p276 = por %p274, %p275
    %p277 = scmp.ne.s32.totalorder %s265, %s266
    %p278 = scmp.eq.s32.totalorder %s25, 1
    %p279 = por %p277, %p278
    %p281 = scmp.ne.s32.totalorder %s266, %s280
    %p282 = scmp.eq.s32.totalorder %s25, 0
    %p283 = por %p281, %p282
    %s285 = sadd.s32 %s284, 1
    %p288 = scmp.eq.s32.totalorder %s19, 1
    %p289 = scmp.ne.s32.totalorder %s284, %s286
    %p290 = scmp.eq.s32.totalorder %s19, 0
    %p291 = por %p289, %p290
    %p292 = scmp.ne.s32.totalorder %s284, %s286
    %p293 = scmp.eq.s32.totalorder %s24, 1
    %p294 = por %p292, %p293
    %p295 = scmp.ne.s32.totalorder %s286, %s287
    %p296 = scmp.eq.s32.totalorder %s24, 0
    %p297 = por %p295, %p296
    %p298 = scmp.ne.s32.totalorder %s286, %s287
    %p299 = scmp.eq.s32.totalorder %s25, 1
    %p300 = por %p298, %p299
    %p302 = scmp.ne.s32.totalorder %s287, %s301
    %p303 = scmp.eq.s32.totalorder %s25, 0
    %p304 = por %p302, %p303
    %s305 = ssub.s32 %s19, %s26
    %p306 = scmp.eq.s32.totalorder %s305, 0
    %s308 = sadd.s32 %s307, 1
    %s309 = scalar_select %p306, %s307, %s308
    %p312 = pneg %p306
    %p313 = scmp.eq.s32.totalorder %s19, 1
    %p314 = por %p312, %p313
    %p315 = scmp.ne.s32.totalorder %s307, %s310
    %p316 = scmp.eq.s32.totalorder %s19, 0
    %p317 = por %p315, %p316
    %p318 = scmp.ne.s32.totalorder %s307, %s310
    %p319 = scmp.eq.s32.totalorder %s24, 1
    %p320 = por %p318, %p319
    %p321 = scmp.ne.s32.totalorder %s310, %s311
    %p322 = scmp.eq.s32.totalorder %s24, 0
    %p323 = por %p321, %p322
    %p324 = scmp.ne.s32.totalorder %s310, %s311
    %p325 = scmp.eq.s32.totalorder %s25, 1
    %p326 = por %p324, %p325
    %p328 = scmp.ne.s32.totalorder %s311, %s327
    %p329 = scmp.eq.s32.totalorder %s25, 0
    %p330 = por %p328, %p329
    %p331 = scmp.le.s32.totalorder 1, %s19
    %p332 = scmp.lt.s32.totalorder %s19, 3
    %p333 = pnand %p331, %p332
    %p334 = pneg %p333
    // Predicated region
    $region9: #{d1_forward.1} parent=5 // pred_check
      _
    $region10: #{d1_forward.1} parent=5 // pred_check_branch
      %336 = sbr.rel (%p333) target = $region12
    $region11: #{d1_forward.1} parent=5 // pred_region
      %s337 = ssub.s32 %s19, 1
      // Predicated region
      $region13: #{d1_forward.1} parent=11 // pred_check
        %p338 = pneg %p66
      $region14: #{d1_forward.1} parent=11 // pred_check_branch
        %340 = sbr.rel (%p338) target = $region16
      $region15: #{d1_forward.1} parent=11 // pred_region
        _
      $region16: #{d1_forward.1} parent=11 // pred_fallthru
        _
      // Predicated region
      $region17: #{d1_forward.1} parent=11 // pred_check
        %p341 = pneg %p87
      $region18: #{d1_forward.1} parent=11 // pred_check_branch
        %343 = sbr.rel (%p341) target = $region20
      $region19: #{d1_forward.1} parent=11 // pred_region
        _
      $region20: #{d1_forward.1} parent=11 // pred_fallthru
        _
      // Predicated region
      $region21: #{d1_forward.1} parent=11 // pred_check
        %p344 = pneg %p108
      $region22: #{d1_forward.1} parent=11 // pred_check_branch
        %346 = sbr.rel (%p344) target = $region24
      $region23: #{d1_forward.1} parent=11 // pred_region
        _
      $region24: #{d1_forward.1} parent=11 // pred_fallthru
        _
      // Predicated region
      $region25: #{d1_forward.1} parent=11 // pred_check
        %p347 = pneg %p129
      $region26: #{d1_forward.1} parent=11 // pred_check_branch
        %349 = sbr.rel (%p347) target = $region28
      $region27: #{d1_forward.1} parent=11 // pred_region
        _
      $region28: #{d1_forward.1} parent=11 // pred_fallthru
        _
      // Predicated region
      $region29: #{d1_forward.1} parent=11 // pred_check
        %p350 = pneg %p150
      $region30: #{d1_forward.1} parent=11 // pred_check_branch
        %352 = sbr.rel (%p350) target = $region32
      $region31: #{d1_forward.1} parent=11 // pred_region
        _
      $region32: #{d1_forward.1} parent=11 // pred_fallthru
        _
      // Predicated region
      $region33: #{d1_forward.1} parent=11 // pred_check
        %p353 = pneg %p171
      $region34: #{d1_forward.1} parent=11 // pred_check_branch
        %355 = sbr.rel (%p353) target = $region36
      $region35: #{d1_forward.1} parent=11 // pred_region
        _
      $region36: #{d1_forward.1} parent=11 // pred_fallthru
        _
      // Predicated region
      $region37: #{d1_forward.1} parent=11 // pred_check
        %p356 = pneg %p192
      $region38: #{d1_forward.1} parent=11 // pred_check_branch
        %358 = sbr.rel (%p356) target = $region40
      $region39: #{d1_forward.1} parent=11 // pred_region
        _
      $region40: #{d1_forward.1} parent=11 // pred_fallthru
        _
      // Predicated region
      $region41: #{d1_forward.1} parent=11 // pred_check
        %p359 = pneg %p213
      $region42: #{d1_forward.1} parent=11 // pred_check_branch
        %361 = sbr.rel (%p359) target = $region44
      $region43: #{d1_forward.1} parent=11 // pred_region
        _
      $region44: #{d1_forward.1} parent=11 // pred_fallthru
        _
      // Predicated region
      $region45: #{d1_forward.1} parent=11 // pred_check
        %p362 = pneg %p234
      $region46: #{d1_forward.1} parent=11 // pred_check_branch
        %364 = sbr.rel (%p362) target = $region48
      $region47: #{d1_forward.1} parent=11 // pred_region
        _
      $region48: #{d1_forward.1} parent=11 // pred_fallthru
        _
      // Predicated region
      $region49: #{d1_forward.1} parent=11 // pred_check
        %p365 = pneg %p255
      $region50: #{d1_forward.1} parent=11 // pred_check_branch
        %367 = sbr.rel (%p365) target = $region52
      $region51: #{d1_forward.1} parent=11 // pred_region
        _
      $region52: #{d1_forward.1} parent=11 // pred_fallthru
        _
      // Predicated region
      $region53: #{d1_forward.1} parent=11 // pred_check
        %p368 = pneg %p276
      $region54: #{d1_forward.1} parent=11 // pred_check_branch
        %370 = sbr.rel (%p368) target = $region56
      $region55: #{d1_forward.1} parent=11 // pred_region
        _
      $region56: #{d1_forward.1} parent=11 // pred_fallthru
        _
      // Predicated region
      $region57: #{d1_forward.1} parent=11 // pred_check
        %p371 = pneg %p297
      $region58: #{d1_forward.1} parent=11 // pred_check_branch
        %373 = sbr.rel (%p371) target = $region60
      $region59: #{d1_forward.1} parent=11 // pred_region
        _
      $region60: #{d1_forward.1} parent=11 // pred_fallthru
        _
    $region12: #{d1_forward.1} parent=5 // pred_fallthru
      _
    %p374 = scmp.lt.s32.totalorder %s19, 2
    // Predicated region
    $region61: #{d1_forward.1} parent=5 // pred_check
      %p375 = pneg %p374
    $region62: #{d1_forward.1} parent=5 // pred_check_branch
      %377 = sbr.rel (%p375) target = $region64
    $region63: #{d1_forward.1} parent=5 // pred_region
      // Predicated region
      $region65: #{d1_forward.1} parent=63 // pred_check
        %p378 = pneg %p39
      $region66: #{d1_forward.1} parent=63 // pred_check_branch
        %380 = sbr.rel (%p378) target = $region68
      $region67: #{d1_forward.1} parent=63 // pred_region
        %p381 = scmp.lt.s32.totalorder %s19, 1
        %s382 = scalar_select %p381, %s19, 1
        %s383 = smul.addr %s382, 32
        %s384 = smul.addr %s383, 4
        %s385 = scalar_lea.vmem %s0, %s384
      $region68: #{d1_forward.1} parent=63 // pred_fallthru
        _
    $region64: #{d1_forward.1} parent=5 // pred_fallthru
      _
    %p386 = scmp.le.s32.totalorder 1, %s19
    %p387 = scmp.lt.s32.totalorder %s19, 3
    %p388 = pnand %p386, %p387
    %p389 = pneg %p388
    // Predicated region
    $region69: #{d1_forward.1} parent=5 // pred_check
      _
    $region70: #{d1_forward.1} parent=5 // pred_check_branch
      %391 = sbr.rel (%p388) target = $region72
    $region71: #{d1_forward.1} parent=5 // pred_region
      %s392 = ssub.s32 %s19, 1
      %p393 = scmp.lt.s32.totalorder %s24, 1
      %s394 = scalar_select %p393, %s24, 1
      %s395 = smul.addr %s394, 32
      %s396 = smul.addr %s395, 4
      %s397 = scalar_lea.vmem %s0, %s396
      %p398 = pneg %p45
      %p399 = pneg %p42
      %p400 = pneg %p66
      %p401 = pneg %p63
      %p402 = pneg %p87
      %p403 = pneg %p84
      %p404 = pneg %p108
      %p405 = pneg %p105
      %p406 = pneg %p129
      %p407 = pneg %p126
      %p408 = pneg %p150
      %p409 = pneg %p147
      %p410 = pneg %p171
      %p411 = pneg %p168
      %p412 = pneg %p192
      %p413 = pneg %p189
      %p414 = pneg %p213
      %p415 = pneg %p210
      %p416 = pneg %p234
      %p417 = pneg %p231
      %p418 = pneg %p255
      %p419 = pneg %p252
      %p420 = pneg %p276
      %p421 = pneg %p273
      %p422 = pneg %p297
      %p423 = pneg %p294
      %p424 = pneg %p323
      %p425 = pneg %p320
      %p426 = scmp.lt.s32.totalorder %s24, 1
      %s427 = scalar_select %p426, %s24, 1
      %s428 = smul.addr %s427, 8
      %s429 = scalar_lea.vmem %s13, %s428
      %p430 = scmp.lt.s32.totalorder %s24, 1
      %s431 = scalar_select %p430, %s24, 1
      %s432 = smul.addr %s431, 32
      %s433 = smul.addr %s432, 4
      %s434 = scalar_lea.vmem %s0, %s433
      %p435 = scmp.lt.s32.totalorder %s24, 1
      %s436 = scalar_select %p435, %s24, 1
      %s437 = smul.addr %s436, 8
      %s438 = scalar_lea.vmem %s13, %s437
      %v440 = vld [vmem:[%s434] sm:$0xff]
      %v441 = vld [vmem:[%s434 + $0x8] sm:$0xff]
      %v442 = vld [vmem:[%s434 + $0x10] sm:$0xff]
      %v443 = vld [vmem:[%s434 + $0x18] sm:$0xff]
      %v444 = vld [vmem:[%s434 + $0x20] sm:$0xff]
      %v445 = vld [vmem:[%s434 + $0x28] sm:$0xff]
      %v446 = vld [vmem:[%s434 + $0x30] sm:$0xff]
      %v447 = vld [vmem:[%s434 + $0x38] sm:$0xff]
      %v448 = vld [vmem:[%s434 + $0x40] sm:$0xff]
      %v449 = vld [vmem:[%s434 + $0x48] sm:$0xff]
      %v450 = vld [vmem:[%s434 + $0x50] sm:$0xff]
      %v451 = vld [vmem:[%s434 + $0x58] sm:$0xff]
      %v452 = vld [vmem:[%s434 + $0x60] sm:$0xff]
      %v453 = vld [vmem:[%s434 + $0x68] sm:$0xff]
      %v454 = vld [vmem:[%s434 + $0x70] sm:$0xff]
      %v455 = vld [vmem:[%s434 + $0x78] sm:$0xff]
      %v456 = vld [vmem:[%s1] sm:$0xf]
      %v457 = vld [vmem:[%s1 + $0x4] sm:$0xf]
      %v458 = vld [vmem:[%s1 + $0x8] sm:$0xf]
      %v459 = vld [vmem:[%s1 + $0xc] sm:$0xf]
      %v460 = vld [vmem:[%s1 + $0x10] sm:$0xf]
      %v461 = vld [vmem:[%s1 + $0x14] sm:$0xf]
      %v462 = vld [vmem:[%s1 + $0x18] sm:$0xf]
      %v463 = vld [vmem:[%s1 + $0x1c] sm:$0xf]
      %v472 = vunpack.c.l.b16 %v456
      %v473 = vunpack.c.l.b16 %v457
      %v474 = vunpack.c.l.b16 %v458
      %v475 = vunpack.c.l.b16 %v459
      %v476 = vunpack.c.l.b16 %v460
      %v477 = vunpack.c.l.b16 %v461
      %v478 = vunpack.c.l.b16 %v462
      %v479 = vunpack.c.l.b16 %v463
      %v480 = vpack.c.b16 %v473, %v472
      %v481 = vpack.c.b16 %v475, %v474
      %v482 = vpack.c.b16 %v477, %v476
      %v483 = vpack.c.b16 %v479, %v478
      %v504 = vunpack.c.l.b16 %v440
      %v505 = vunpack.c.h.b16 %v440
      %v506 = vunpack.c.l.b16 %v441
      %v507 = vunpack.c.h.b16 %v441
      %v508 = vunpack.c.l.b16 %v442
      %v509 = vunpack.c.h.b16 %v442
      %v510 = vunpack.c.l.b16 %v443
      %v511 = vunpack.c.h.b16 %v443
      %v512 = vunpack.c.l.b16 %v444
      %v513 = vunpack.c.h.b16 %v444
      %v514 = vunpack.c.l.b16 %v445
      %v515 = vunpack.c.h.b16 %v445
      %v516 = vunpack.c.l.b16 %v446
      %v517 = vunpack.c.h.b16 %v446
      %v518 = vunpack.c.l.b16 %v447
      %v519 = vunpack.c.h.b16 %v447
      %v520 = vunpack.c.l.b16 %v448
      %v521 = vunpack.c.h.b16 %v448
      %v522 = vunpack.c.l.b16 %v449
      %v523 = vunpack.c.h.b16 %v449
      %v524 = vunpack.c.l.b16 %v450
      %v525 = vunpack.c.h.b16 %v450
      %v526 = vunpack.c.l.b16 %v451
      %v527 = vunpack.c.h.b16 %v451
      %v528 = vunpack.c.l.b16 %v452
      %v529 = vunpack.c.h.b16 %v452
      %v530 = vunpack.c.l.b16 %v453
      %v531 = vunpack.c.h.b16 %v453
      %v532 = vunpack.c.l.b16 %v454
      %v533 = vunpack.c.h.b16 %v454
      %v534 = vunpack.c.l.b16 %v455
      %v535 = vunpack.c.h.b16 %v455
      %v536 = vpack.c.b16 %v506, %v504
      %v537 = vpack.c.b16 %v507, %v505
      %v538 = vpack.c.b16 %v510, %v508
      %v539 = vpack.c.b16 %v511, %v509
      %v540 = vpack.c.b16 %v514, %v512
      %v541 = vpack.c.b16 %v515, %v513
      %v542 = vpack.c.b16 %v518, %v516
      %v543 = vpack.c.b16 %v519, %v517
      %v544 = vpack.c.b16 %v522, %v520
      %v545 = vpack.c.b16 %v523, %v521
      %v546 = vpack.c.b16 %v526, %v524
      %v547 = vpack.c.b16 %v527, %v525
      %v548 = vpack.c.b16 %v530, %v528
      %v549 = vpack.c.b16 %v531, %v529
      %v550 = vpack.c.b16 %v534, %v532
      %v551 = vpack.c.b16 %v535, %v533
      %568 = vmatprep.subr.bf16.mxu0 %v551
      %569 = vmatpush1.bf16.msra.mxu0 %v550
      %570 = vmatprep.subr.bf16.mxu0 %v549
      %571 = vmatpush1.bf16.msra.mxu0 %v548
      %572 = vmatprep.subr.bf16.mxu0 %v547
      %573 = vmatpush1.bf16.msra.mxu0 %v546
      %574 = vmatprep.subr.bf16.mxu0 %v545
      %575 = vmatpush1.bf16.msra.mxu0 %v544
      %576 = vmatprep.subr.bf16.mxu0 %v543
      %577 = vmatpush1.bf16.msra.mxu0 %v542
      %578 = vmatprep.subr.bf16.mxu0 %v541
      %579 = vmatpush1.bf16.msra.mxu0 %v540
      %580 = vmatprep.subr.bf16.mxu0 %v539
      %581 = vmatpush1.bf16.msra.mxu0 %v538
      %582 = vmatprep.subr.bf16.mxu0 %v537
      %583 = vmatpush1.bf16.msra.mxu0 %v536
      %584 = vmatprep.subr.bf16.mxu0 0
      %585 = vmatpush2.bf16.msra.mxu0 0
      %586 = vmatprep.subr.bf16.mxu0 0
      %587 = vmatpush2.bf16.msra.mxu0 0
      %588 = vmatprep.subr.bf16.mxu0 0
      %589 = vmatpush2.bf16.msra.mxu0 0
      %590 = vmatprep.subr.bf16.mxu0 0
      %591 = vmatpush2.bf16.msra.mxu0 0
      %592 = vmatprep.subr.bf16.mxu0 0
      %593 = vmatpush2.bf16.msra.mxu0 0
      %594 = vmatprep.subr.bf16.mxu0 0
      %595 = vmatpush2.bf16.msra.mxu0 0
      %596 = vmatprep.subr.bf16.mxu0 0
      %597 = vmatpush2.bf16.msra.mxu0 0
      %598 = vmatprep.subr.bf16.mxu0 0
      %599 = vmatpush2.bf16.msra.mxu0 0
      %600 = vmatprep.mubr.bf16.mxu0 0
      %601 = vmatmul.mubr.bf16.gmra.mxu0 %v480
      %v602 = vpop.f32.mrf.mxu0
      %v603 = vadd.f32 0.0, %v602
      %v604 = vpop.f32.mrf.mxu0
      %v605 = vadd.f32 0.0, %v604
      %v606 = vpop.f32.mrf.mxu0
      %v607 = vadd.f32 0.0, %v606
      %v608 = vpop.f32.mrf.mxu0
      %v609 = vadd.f32 0.0, %v608
      %610 = vmatprep.mubr.bf16.mxu0 0
      %611 = vmatmul.mubr.bf16.gmra.mxu0 %v481
      %v612 = vpop.f32.mrf.mxu0
      %v613 = vadd.f32 0.0, %v612
      %v614 = vpop.f32.mrf.mxu0
      %v615 = vadd.f32 0.0, %v614
      %v616 = vpop.f32.mrf.mxu0
      %v617 = vadd.f32 0.0, %v616
      %v618 = vpop.f32.mrf.mxu0
      %v619 = vadd.f32 0.0, %v618
      %620 = vmatprep.mubr.bf16.mxu0 0
      %621 = vmatmul.mubr.bf16.gmra.mxu0 %v482
      %v622 = vpop.f32.mrf.mxu0
      %v623 = vadd.f32 0.0, %v622
      %v624 = vpop.f32.mrf.mxu0
      %v625 = vadd.f32 0.0, %v624
      %v626 = vpop.f32.mrf.mxu0
      %v627 = vadd.f32 0.0, %v626
      %v628 = vpop.f32.mrf.mxu0
      %v629 = vadd.f32 0.0, %v628
      %630 = vmatprep.mubr.bf16.mxu0 0
      %631 = vmatmul.mubr.bf16.gmra.mxu0 %v483
      %v632 = vpop.f32.mrf.mxu0
      %v633 = vadd.f32 0.0, %v632
      %v634 = vpop.f32.mrf.mxu0
      %v635 = vadd.f32 0.0, %v634
      %v636 = vpop.f32.mrf.mxu0
      %v637 = vadd.f32 0.0, %v636
      %v638 = vpop.f32.mrf.mxu0
      %v639 = vadd.f32 0.0, %v638
      %640 = vdwg.mxu0
      %v641 = vpack.c.bf16 %v607, %v603
      %v642 = vpack.c.bf16 %v609, %v605
      %v643 = vpack.c.bf16 %v617, %v613
      %v644 = vpack.c.bf16 %v619, %v615
      %v645 = vpack.c.bf16 %v627, %v623
      %v646 = vpack.c.bf16 %v629, %v625
      %v647 = vpack.c.bf16 %v637, %v633
      %v648 = vpack.c.bf16 %v639, %v635
      %s649 = scalar_lea.vmem %s1, 32
      %v650 = vld [vmem:[%s649] sm:$0xf]
      %v651 = vld [vmem:[%s649 + $0x4] sm:$0xf]
      %v652 = vld [vmem:[%s649 + $0x8] sm:$0xf]
      %v653 = vld [vmem:[%s649 + $0xc] sm:$0xf]
      %v654 = vld [vmem:[%s649 + $0x10] sm:$0xf]
      %v655 = vld [vmem:[%s649 + $0x14] sm:$0xf]
      %v656 = vld [vmem:[%s649 + $0x18] sm:$0xf]
      %v657 = vld [vmem:[%s649 + $0x1c] sm:$0xf]
      %v666 = vunpack.c.l.b16 %v650
      %v667 = vunpack.c.l.b16 %v651
      %v668 = vunpack.c.l.b16 %v652
      %v669 = vunpack.c.l.b16 %v653
      %v670 = vunpack.c.l.b16 %v654
      %v671 = vunpack.c.l.b16 %v655
      %v672 = vunpack.c.l.b16 %v656
      %v673 = vunpack.c.l.b16 %v657
      %v674 = vpack.c.b16 %v667, %v666
      %v675 = vpack.c.b16 %v669, %v668
      %v676 = vpack.c.b16 %v671, %v670
      %v677 = vpack.c.b16 %v673, %v672
      %682 = vmatprep.subr.bf16.mxu0 %v551
      %683 = vmatpush1.bf16.msra.mxu0 %v550
      %684 = vmatprep.subr.bf16.mxu0 %v549
      %685 = vmatpush1.bf16.msra.mxu0 %v548
      %686 = vmatprep.subr.bf16.mxu0 %v547
      %687 = vmatpush1.bf16.msra.mxu0 %v546
      %688 = vmatprep.subr.bf16.mxu0 %v545
      %689 = vmatpush1.bf16.msra.mxu0 %v544
      %690 = vmatprep.subr.bf16.mxu0 %v543
      %691 = vmatpush1.bf16.msra.mxu0 %v542
      %692 = vmatprep.subr.bf16.mxu0 %v541
      %693 = vmatpush1.bf16.msra.mxu0 %v540
      %694 = vmatprep.subr.bf16.mxu0 %v539
      %695 = vmatpush1.bf16.msra.mxu0 %v538
      %696 = vmatprep.subr.bf16.mxu0 %v537
      %697 = vmatpush1.bf16.msra.mxu0 %v536
      %698 = vmatprep.subr.bf16.mxu0 0
      %699 = vmatpush2.bf16.msra.mxu0 0
      %700 = vmatprep.subr.bf16.mxu0 0
      %701 = vmatpush2.bf16.msra.mxu0 0
      %702 = vmatprep.subr.bf16.mxu0 0
      %703 = vmatpush2.bf16.msra.mxu0 0
      %704 = vmatprep.subr.bf16.mxu0 0
      %705 = vmatpush2.bf16.msra.mxu0 0
      %706 = vmatprep.subr.bf16.mxu0 0
      %707 = vmatpush2.bf16.msra.mxu0 0
      %708 = vmatprep.subr.bf16.mxu0 0
      %709 = vmatpush2.bf16.msra.mxu0 0
      %710 = vmatprep.subr.bf16.mxu0 0
      %711 = vmatpush2.bf16.msra.mxu0 0
      %712 = vmatprep.subr.bf16.mxu0 0
      %713 = vmatpush2.bf16.msra.mxu0 0
      %714 = vmatprep.mubr.bf16.mxu0 0
      %715 = vmatmul.mubr.bf16.gmra.mxu0 %v674
      %v716 = vpop.f32.mrf.mxu0
      %v717 = vadd.f32 0.0, %v716
      %v718 = vpop.f32.mrf.mxu0
      %v719 = vadd.f32 0.0, %v718
      %v720 = vpop.f32.mrf.mxu0
      %v721 = vadd.f32 0.0, %v720
      %v722 = vpop.f32.mrf.mxu0
      %v723 = vadd.f32 0.0, %v722
      %724 = vmatprep.mubr.bf16.mxu0 0
      %725 = vmatmul.mubr.bf16.gmra.mxu0 %v675
      %v726 = vpop.f32.mrf.mxu0
      %v727 = vadd.f32 0.0, %v726
      %v728 = vpop.f32.mrf.mxu0
      %v729 = vadd.f32 0.0, %v728
      %v730 = vpop.f32.mrf.mxu0
      %v731 = vadd.f32 0.0, %v730
      %v732 = vpop.f32.mrf.mxu0
      %v733 = vadd.f32 0.0, %v732
      %734 = vmatprep.mubr.bf16.mxu0 0
      %735 = vmatmul.mubr.bf16.gmra.mxu0 %v676
      %v736 = vpop.f32.mrf.mxu0
      %v737 = vadd.f32 0.0, %v736
      %v738 = vpop.f32.mrf.mxu0
      %v739 = vadd.f32 0.0, %v738
      %v740 = vpop.f32.mrf.mxu0
      %v741 = vadd.f32 0.0, %v740
      %v742 = vpop.f32.mrf.mxu0
      %v743 = vadd.f32 0.0, %v742
      %744 = vmatprep.mubr.bf16.mxu0 0
      %745 = vmatmul.mubr.bf16.gmra.mxu0 %v677
      %v746 = vpop.f32.mrf.mxu0
      %v747 = vadd.f32 0.0, %v746
      %v748 = vpop.f32.mrf.mxu0
      %v749 = vadd.f32 0.0, %v748
      %v750 = vpop.f32.mrf.mxu0
      %v751 = vadd.f32 0.0, %v750
      %v752 = vpop.f32.mrf.mxu0
      %v753 = vadd.f32 0.0, %v752
      %754 = vdwg.mxu0
      %v755 = vpack.c.bf16 %v721, %v717
      %v756 = vpack.c.bf16 %v723, %v719
      %v757 = vpack.c.bf16 %v731, %v727
      %v758 = vpack.c.bf16 %v733, %v729
      %v759 = vpack.c.bf16 %v741, %v737
      %v760 = vpack.c.bf16 %v743, %v739
      %v761 = vpack.c.bf16 %v751, %v747
      %v762 = vpack.c.bf16 %v753, %v749
      %s763 = scalar_lea.vmem %s1, 64
      %v764 = vld [vmem:[%s763] sm:$0xf]
      %v765 = vld [vmem:[%s763 + $0x4] sm:$0xf]
      %v766 = vld [vmem:[%s763 + $0x8] sm:$0xf]
      %v767 = vld [vmem:[%s763 + $0xc] sm:$0xf]
      %v768 = vld [vmem:[%s763 + $0x10] sm:$0xf]
      %v769 = vld [vmem:[%s763 + $0x14] sm:$0xf]
      %v770 = vld [vmem:[%s763 + $0x18] sm:$0xf]
      %v771 = vld [vmem:[%s763 + $0x1c] sm:$0xf]
      %v780 = vunpack.c.l.b16 %v764
      %v781 = vunpack.c.l.b16 %v765
      %v782 = vunpack.c.l.b16 %v766
      %v783 = vunpack.c.l.b16 %v767
      %v784 = vunpack.c.l.b16 %v768
      %v785 = vunpack.c.l.b16 %v769
      %v786 = vunpack.c.l.b16 %v770
      %v787 = vunpack.c.l.b16 %v771
      %v788 = vpack.c.b16 %v781, %v780
      %v789 = vpack.c.b16 %v783, %v782
      %v790 = vpack.c.b16 %v785, %v784
      %v791 = vpack.c.b16 %v787, %v786
      %796 = vmatprep.subr.bf16.mxu0 %v551
      %797 = vmatpush1.bf16.msra.mxu0 %v550
      %798 = vmatprep.subr.bf16.mxu0 %v549
      %799 = vmatpush1.bf16.msra.mxu0 %v548
      %800 = vmatprep.subr.bf16.mxu0 %v547
      %801 = vmatpush1.bf16.msra.mxu0 %v546
      %802 = vmatprep.subr.bf16.mxu0 %v545
      %803 = vmatpush1.bf16.msra.mxu0 %v544
      %804 = vmatprep.subr.bf16.mxu0 %v543
      %805 = vmatpush1.bf16.msra.mxu0 %v542
      %806 = vmatprep.subr.bf16.mxu0 %v541
      %807 = vmatpush1.bf16.msra.mxu0 %v540
      %808 = vmatprep.subr.bf16.mxu0 %v539
      %809 = vmatpush1.bf16.msra.mxu0 %v538
      %810 = vmatprep.subr.bf16.mxu0 %v537
      %811 = vmatpush1.bf16.msra.mxu0 %v536
      %812 = vmatprep.subr.bf16.mxu0 0
      %813 = vmatpush2.bf16.msra.mxu0 0
      %814 = vmatprep.subr.bf16.mxu0 0
      %815 = vmatpush2.bf16.msra.mxu0 0
      %816 = vmatprep.subr.bf16.mxu0 0
      %817 = vmatpush2.bf16.msra.mxu0 0
      %818 = vmatprep.subr.bf16.mxu0 0
      %819 = vmatpush2.bf16.msra.mxu0 0
      %820 = vmatprep.subr.bf16.mxu0 0
      %821 = vmatpush2.bf16.msra.mxu0 0
      %822 = vmatprep.subr.bf16.mxu0 0
      %823 = vmatpush2.bf16.msra.mxu0 0
      %824 = vmatprep.subr.bf16.mxu0 0
      %825 = vmatpush2.bf16.msra.mxu0 0
      %826 = vmatprep.subr.bf16.mxu0 0
      %827 = vmatpush2.bf16.msra.mxu0 0
      %828 = vmatprep.mubr.bf16.mxu0 0
      %829 = vmatmul.mubr.bf16.gmra.mxu0 %v788
      %v830 = vpop.f32.mrf.mxu0
      %v831 = vadd.f32 0.0, %v830
      %v832 = vpop.f32.mrf.mxu0
      %v833 = vadd.f32 0.0, %v832
      %v834 = vpop.f32.mrf.mxu0
      %v835 = vadd.f32 0.0, %v834
      %v836 = vpop.f32.mrf.mxu0
      %v837 = vadd.f32 0.0, %v836
      %838 = vmatprep.mubr.bf16.mxu0 0
      %839 = vmatmul.mubr.bf16.gmra.mxu0 %v789
      %v840 = vpop.f32.mrf.mxu0
      %v841 = vadd.f32 0.0, %v840
      %v842 = vpop.f32.mrf.mxu0
      %v843 = vadd.f32 0.0, %v842
      %v844 = vpop.f32.mrf.mxu0
      %v845 = vadd.f32 0.0, %v844
      %v846 = vpop.f32.mrf.mxu0
      %v847 = vadd.f32 0.0, %v846
      %848 = vmatprep.mubr.bf16.mxu0 0
      %849 = vmatmul.mubr.bf16.gmra.mxu0 %v790
      %v850 = vpop.f32.mrf.mxu0
      %v851 = vadd.f32 0.0, %v850
      %v852 = vpop.f32.mrf.mxu0
      %v853 = vadd.f32 0.0, %v852
      %v854 = vpop.f32.mrf.mxu0
      %v855 = vadd.f32 0.0, %v854
      %v856 = vpop.f32.mrf.mxu0
      %v857 = vadd.f32 0.0, %v856
      %858 = vmatprep.mubr.bf16.mxu0 0
      %859 = vmatmul.mubr.bf16.gmra.mxu0 %v791
      %v860 = vpop.f32.mrf.mxu0
      %v861 = vadd.f32 0.0, %v860
      %v862 = vpop.f32.mrf.mxu0
      %v863 = vadd.f32 0.0, %v862
      %v864 = vpop.f32.mrf.mxu0
      %v865 = vadd.f32 0.0, %v864
      %v866 = vpop.f32.mrf.mxu0
      %v867 = vadd.f32 0.0, %v866
      %868 = vdwg.mxu0
      %v869 = vpack.c.bf16 %v835, %v831
      %v870 = vpack.c.bf16 %v837, %v833
      %v871 = vpack.c.bf16 %v845, %v841
      %v872 = vpack.c.bf16 %v847, %v843
      %v873 = vpack.c.bf16 %v855, %v851
      %v874 = vpack.c.bf16 %v857, %v853
      %v875 = vpack.c.bf16 %v865, %v861
      %v876 = vpack.c.bf16 %v867, %v863
      %s877 = scalar_lea.vmem %s1, 96
      %v878 = vld [vmem:[%s877] sm:$0xf]
      %v879 = vld [vmem:[%s877 + $0x4] sm:$0xf]
      %v880 = vld [vmem:[%s877 + $0x8] sm:$0xf]
      %v881 = vld [vmem:[%s877 + $0xc] sm:$0xf]
      %v882 = vld [vmem:[%s877 + $0x10] sm:$0xf]
      %v883 = vld [vmem:[%s877 + $0x14] sm:$0xf]
      %v884 = vld [vmem:[%s877 + $0x18] sm:$0xf]
      %v885 = vld [vmem:[%s877 + $0x1c] sm:$0xf]
      %v894 = vunpack.c.l.b16 %v878
      %v895 = vunpack.c.l.b16 %v879
      %v896 = vunpack.c.l.b16 %v880
      %v897 = vunpack.c.l.b16 %v881
      %v898 = vunpack.c.l.b16 %v882
      %v899 = vunpack.c.l.b16 %v883
      %v900 = vunpack.c.l.b16 %v884
      %v901 = vunpack.c.l.b16 %v885
      %v902 = vpack.c.b16 %v895, %v894
      %v903 = vpack.c.b16 %v897, %v896
      %v904 = vpack.c.b16 %v899, %v898
      %v905 = vpack.c.b16 %v901, %v900
      %910 = vmatprep.subr.bf16.mxu0 %v551
      %911 = vmatpush1.bf16.msra.mxu0 %v550
      %912 = vmatprep.subr.bf16.mxu0 %v549
      %913 = vmatpush1.bf16.msra.mxu0 %v548
      %914 = vmatprep.subr.bf16.mxu0 %v547
      %915 = vmatpush1.bf16.msra.mxu0 %v546
      %916 = vmatprep.subr.bf16.mxu0 %v545
      %917 = vmatpush1.bf16.msra.mxu0 %v544
      %918 = vmatprep.subr.bf16.mxu0 %v543
      %919 = vmatpush1.bf16.msra.mxu0 %v542
      %920 = vmatprep.subr.bf16.mxu0 %v541
      %921 = vmatpush1.bf16.msra.mxu0 %v540
      %922 = vmatprep.subr.bf16.mxu0 %v539
      %923 = vmatpush1.bf16.msra.mxu0 %v538
      %924 = vmatprep.subr.bf16.mxu0 %v537
      %925 = vmatpush1.bf16.msra.mxu0 %v536
      %926 = vmatprep.subr.bf16.mxu0 0
      %927 = vmatpush2.bf16.msra.mxu0 0
      %928 = vmatprep.subr.bf16.mxu0 0
      %929 = vmatpush2.bf16.msra.mxu0 0
      %930 = vmatprep.subr.bf16.mxu0 0
      %931 = vmatpush2.bf16.msra.mxu0 0
      %932 = vmatprep.subr.bf16.mxu0 0
      %933 = vmatpush2.bf16.msra.mxu0 0
      %934 = vmatprep.subr.bf16.mxu0 0
      %935 = vmatpush2.bf16.msra.mxu0 0
      %936 = vmatprep.subr.bf16.mxu0 0
      %937 = vmatpush2.bf16.msra.mxu0 0
      %938 = vmatprep.subr.bf16.mxu0 0
      %939 = vmatpush2.bf16.msra.mxu0 0
      %940 = vmatprep.subr.bf16.mxu0 0
      %941 = vmatpush2.bf16.msra.mxu0 0
      %942 = vmatprep.mubr.bf16.mxu0 0
      %943 = vmatmul.mubr.bf16.gmra.mxu0 %v902
      %v944 = vpop.f32.mrf.mxu0
      %v945 = vadd.f32 0.0, %v944
      %v946 = vpop.f32.mrf.mxu0
      %v947 = vadd.f32 0.0, %v946
      %v948 = vpop.f32.mrf.mxu0
      %v949 = vadd.f32 0.0, %v948
      %v950 = vpop.f32.mrf.mxu0
      %v951 = vadd.f32 0.0, %v950
      %952 = vmatprep.mubr.bf16.mxu0 0
      %953 = vmatmul.mubr.bf16.gmra.mxu0 %v903
      %v954 = vpop.f32.mrf.mxu0
      %v955 = vadd.f32 0.0, %v954
      %v956 = vpop.f32.mrf.mxu0
      %v957 = vadd.f32 0.0, %v956
      %v958 = vpop.f32.mrf.mxu0
      %v959 = vadd.f32 0.0, %v958
      %v960 = vpop.f32.mrf.mxu0
      %v961 = vadd.f32 0.0, %v960
      %962 = vmatprep.mubr.bf16.mxu0 0
      %963 = vmatmul.mubr.bf16.gmra.mxu0 %v904
      %v964 = vpop.f32.mrf.mxu0
      %v965 = vadd.f32 0.0, %v964
      %v966 = vpop.f32.mrf.mxu0
      %v967 = vadd.f32 0.0, %v966
      %v968 = vpop.f32.mrf.mxu0
      %v969 = vadd.f32 0.0, %v968
      %v970 = vpop.f32.mrf.mxu0
      %v971 = vadd.f32 0.0, %v970
      %972 = vmatprep.mubr.bf16.mxu0 0
      %973 = vmatmul.mubr.bf16.gmra.mxu0 %v905
      %v974 = vpop.f32.mrf.mxu0
      %v975 = vadd.f32 0.0, %v974
      %v976 = vpop.f32.mrf.mxu0
      %v977 = vadd.f32 0.0, %v976
      %v978 = vpop.f32.mrf.mxu0
      %v979 = vadd.f32 0.0, %v978
      %v980 = vpop.f32.mrf.mxu0
      %v981 = vadd.f32 0.0, %v980
      %982 = vdwg.mxu0
      %v983 = vpack.c.bf16 %v949, %v945
      %v984 = vpack.c.bf16 %v951, %v947
      %v985 = vpack.c.bf16 %v959, %v955
      %v986 = vpack.c.bf16 %v961, %v957
      %v987 = vpack.c.bf16 %v969, %v965
      %v988 = vpack.c.bf16 %v971, %v967
      %v989 = vpack.c.bf16 %v979, %v975
      %v990 = vpack.c.bf16 %v981, %v977
      %v991 = vld [vmem:[%s2] sm:$0xf]
      %v992 = vld [vmem:[%s2 + $0x4] sm:$0xf]
      %v993 = vld [vmem:[%s2 + $0x8] sm:$0xf]
      %v994 = vld [vmem:[%s2 + $0xc] sm:$0xf]
      %v995 = vld [vmem:[%s2 + $0x10] sm:$0xf]
      %v996 = vld [vmem:[%s2 + $0x14] sm:$0xf]
      %v997 = vld [vmem:[%s2 + $0x18] sm:$0xf]
      %v998 = vld [vmem:[%s2 + $0x1c] sm:$0xf]
      %v999 = vld [vmem:[%s2 + $0x20] sm:$0xf]
      %v1000 = vld [vmem:[%s2 + $0x24] sm:$0xf]
      %v1001 = vld [vmem:[%s2 + $0x28] sm:$0xf]
      %v1002 = vld [vmem:[%s2 + $0x2c] sm:$0xf]
      %v1003 = vld [vmem:[%s2 + $0x30] sm:$0xf]
      %v1004 = vld [vmem:[%s2 + $0x34] sm:$0xf]
      %v1005 = vld [vmem:[%s2 + $0x38] sm:$0xf]
      %v1006 = vld [vmem:[%s2 + $0x3c] sm:$0xf]
      %v1007 = vld [vmem:[%s2 + $0x40] sm:$0xf]
      %v1008 = vld [vmem:[%s2 + $0x44] sm:$0xf]
      %v1009 = vld [vmem:[%s2 + $0x48] sm:$0xf]
      %v1010 = vld [vmem:[%s2 + $0x4c] sm:$0xf]
      %v1011 = vld [vmem:[%s2 + $0x50] sm:$0xf]
      %v1012 = vld [vmem:[%s2 + $0x54] sm:$0xf]
      %v1013 = vld [vmem:[%s2 + $0x58] sm:$0xf]
      %v1014 = vld [vmem:[%s2 + $0x5c] sm:$0xf]
      %v1015 = vld [vmem:[%s2 + $0x60] sm:$0xf]
      %v1016 = vld [vmem:[%s2 + $0x64] sm:$0xf]
      %v1017 = vld [vmem:[%s2 + $0x68] sm:$0xf]
      %v1018 = vld [vmem:[%s2 + $0x6c] sm:$0xf]
      %v1019 = vld [vmem:[%s2 + $0x70] sm:$0xf]
      %v1020 = vld [vmem:[%s2 + $0x74] sm:$0xf]
      %v1021 = vld [vmem:[%s2 + $0x78] sm:$0xf]
      %v1022 = vld [vmem:[%s2 + $0x7c] sm:$0xf]
      %v1023 = vld [vmem:[%s2 + $0x80] sm:$0xf]
      %v1024 = vld [vmem:[%s2 + $0x84] sm:$0xf]
      %v1025 = vld [vmem:[%s2 + $0x88] sm:$0xf]
      %v1026 = vld [vmem:[%s2 + $0x8c] sm:$0xf]
      %v1027 = vld [vmem:[%s2 + $0x90] sm:$0xf]
      %v1028 = vld [vmem:[%s2 + $0x94] sm:$0xf]
      %v1029 = vld [vmem:[%s2 + $0x98] sm:$0xf]
      %v1030 = vld [vmem:[%s2 + $0x9c] sm:$0xf]
      %v1031 = vld [vmem:[%s2 + $0xa0] sm:$0xf]
      %v1032 = vld [vmem:[%s2 + $0xa4] sm:$0xf]
      %v1033 = vld [vmem:[%s2 + $0xa8] sm:$0xf]
      %v1034 = vld [vmem:[%s2 + $0xac] sm:$0xf]
      %v1035 = vld [vmem:[%s2 + $0xb0] sm:$0xf]
      %v1036 = vld [vmem:[%s2 + $0xb4] sm:$0xf]
      %v1037 = vld [vmem:[%s2 + $0xb8] sm:$0xf]
      %v1038 = vld [vmem:[%s2 + $0xbc] sm:$0xf]
      %v1039 = vld [vmem:[%s2 + $0xc0] sm:$0xf]
      %v1040 = vld [vmem:[%s2 + $0xc4] sm:$0xf]
      %v1041 = vld [vmem:[%s2 + $0xc8] sm:$0xf]
      %v1042 = vld [vmem:[%s2 + $0xcc] sm:$0xf]
      %v1043 = vld [vmem:[%s2 + $0xd0] sm:$0xf]
      %v1044 = vld [vmem:[%s2 + $0xd4] sm:$0xf]
      %v1045 = vld [vmem:[%s2 + $0xd8] sm:$0xf]
      %v1046 = vld [vmem:[%s2 + $0xdc] sm:$0xf]
      %v1047 = vld [vmem:[%s2 + $0xe0] sm:$0xf]
      %v1048 = vld [vmem:[%s2 + $0xe4] sm:$0xf]
      %v1049 = vld [vmem:[%s2 + $0xe8] sm:$0xf]
      %v1050 = vld [vmem:[%s2 + $0xec] sm:$0xf]
      %v1051 = vld [vmem:[%s2 + $0xf0] sm:$0xf]
      %v1052 = vld [vmem:[%s2 + $0xf4] sm:$0xf]
      %v1053 = vld [vmem:[%s2 + $0xf8] sm:$0xf]
      %v1054 = vld [vmem:[%s2 + $0xfc] sm:$0xf]
      %v1055 = vld [vmem:[%s2 + $0x100] sm:$0xf]
      %v1056 = vld [vmem:[%s2 + $0x104] sm:$0xf]
      %v1057 = vld [vmem:[%s2 + $0x108] sm:$0xf]
      %v1058 = vld [vmem:[%s2 + $0x10c] sm:$0xf]
      %v1059 = vld [vmem:[%s2 + $0x110] sm:$0xf]
      %v1060 = vld [vmem:[%s2 + $0x114] sm:$0xf]
      %v1061 = vld [vmem:[%s2 + $0x118] sm:$0xf]
      %v1062 = vld [vmem:[%s2 + $0x11c] sm:$0xf]
      %v1063 = vld [vmem:[%s2 + $0x120] sm:$0xf]
      %v1064 = vld [vmem:[%s2 + $0x124] sm:$0xf]
      %v1065 = vld [vmem:[%s2 + $0x128] sm:$0xf]
      %v1066 = vld [vmem:[%s2 + $0x12c] sm:$0xf]
      %v1067 = vld [vmem:[%s2 + $0x130] sm:$0xf]
      %v1068 = vld [vmem:[%s2 + $0x134] sm:$0xf]
      %v1069 = vld [vmem:[%s2 + $0x138] sm:$0xf]
      %v1070 = vld [vmem:[%s2 + $0x13c] sm:$0xf]
      %v1071 = vld [vmem:[%s2 + $0x140] sm:$0xf]
      %v1072 = vld [vmem:[%s2 + $0x144] sm:$0xf]
      %v1073 = vld [vmem:[%s2 + $0x148] sm:$0xf]
      %v1074 = vld [vmem:[%s2 + $0x14c] sm:$0xf]
      %v1075 = vld [vmem:[%s2 + $0x150] sm:$0xf]
      %v1076 = vld [vmem:[%s2 + $0x154] sm:$0xf]
      %v1077 = vld [vmem:[%s2 + $0x158] sm:$0xf]
      %v1078 = vld [vmem:[%s2 + $0x15c] sm:$0xf]
      %v1079 = vld [vmem:[%s2 + $0x160] sm:$0xf]
      %v1080 = vld [vmem:[%s2 + $0x164] sm:$0xf]
      %v1081 = vld [vmem:[%s2 + $0x168] sm:$0xf]
      %v1082 = vld [vmem:[%s2 + $0x16c] sm:$0xf]
      %v1083 = vld [vmem:[%s2 + $0x170] sm:$0xf]
      %v1084 = vld [vmem:[%s2 + $0x174] sm:$0xf]
      %v1085 = vld [vmem:[%s2 + $0x178] sm:$0xf]
      %v1086 = vld [vmem:[%s2 + $0x17c] sm:$0xf]
      %v1087 = vld [vmem:[%s2 + $0x180] sm:$0xf]
      %v1088 = vld [vmem:[%s2 + $0x184] sm:$0xf]
      %v1089 = vld [vmem:[%s2 + $0x188] sm:$0xf]
      %v1090 = vld [vmem:[%s2 + $0x18c] sm:$0xf]
      %v1091 = vld [vmem:[%s2 + $0x190] sm:$0xf]
      %v1092 = vld [vmem:[%s2 + $0x194] sm:$0xf]
      %v1093 = vld [vmem:[%s2 + $0x198] sm:$0xf]
      %v1094 = vld [vmem:[%s2 + $0x19c] sm:$0xf]
      %v1095 = vld [vmem:[%s2 + $0x1a0] sm:$0xf]
      %v1096 = vld [vmem:[%s2 + $0x1a4] sm:$0xf]
      %v1097 = vld [vmem:[%s2 + $0x1a8] sm:$0xf]
      %v1098 = vld [vmem:[%s2 + $0x1ac] sm:$0xf]
      %v1099 = vld [vmem:[%s2 + $0x1b0] sm:$0xf]
      %v1100 = vld [vmem:[%s2 + $0x1b4] sm:$0xf]
      %v1101 = vld [vmem:[%s2 + $0x1b8] sm:$0xf]
      %v1102 = vld [vmem:[%s2 + $0x1bc] sm:$0xf]
      %v1103 = vld [vmem:[%s2 + $0x1c0] sm:$0xf]
      %v1104 = vld [vmem:[%s2 + $0x1c4] sm:$0xf]
      %v1105 = vld [vmem:[%s2 + $0x1c8] sm:$0xf]
      %v1106 = vld [vmem:[%s2 + $0x1cc] sm:$0xf]
      %v1107 = vld [vmem:[%s2 + $0x1d0] sm:$0xf]
      %v1108 = vld [vmem:[%s2 + $0x1d4] sm:$0xf]
      %v1109 = vld [vmem:[%s2 + $0x1d8] sm:$0xf]
      %v1110 = vld [vmem:[%s2 + $0x1dc] sm:$0xf]
      %v1111 = vld [vmem:[%s2 + $0x1e0] sm:$0xf]
      %v1112 = vld [vmem:[%s2 + $0x1e4] sm:$0xf]
      %v1113 = vld [vmem:[%s2 + $0x1e8] sm:$0xf]
      %v1114 = vld [vmem:[%s2 + $0x1ec] sm:$0xf]
      %v1115 = vld [vmem:[%s2 + $0x1f0] sm:$0xf]
      %v1116 = vld [vmem:[%s2 + $0x1f4] sm:$0xf]
      %v1117 = vld [vmem:[%s2 + $0x1f8] sm:$0xf]
      %v1118 = vld [vmem:[%s2 + $0x1fc] sm:$0xf]
      %v1119 = vld [vmem:[%s3] sm:$0x1]
      %v1121 = vlaneseq
      %v1122 = vshrl.u32 %v1121, 7
      %v1123 = vsub.s32 0, %v1122
      %v1124 = vrot.slane %v1119, %v1123
      %v1254 = vunpack.c.l.b16 %v991
      %v1255 = vunpack.c.l.b16 %v992
      %v1256 = vunpack.c.l.b16 %v993
      %v1257 = vunpack.c.l.b16 %v994
      %v1258 = vunpack.c.l.b16 %v995
      %v1259 = vunpack.c.l.b16 %v996
      %v1260 = vunpack.c.l.b16 %v997
      %v1261 = vunpack.c.l.b16 %v998
      %v1262 = vunpack.c.l.b16 %v999
      %v1263 = vunpack.c.l.b16 %v1000
      %v1264 = vunpack.c.l.b16 %v1001
      %v1265 = vunpack.c.l.b16 %v1002
      %v1266 = vunpack.c.l.b16 %v1003
      %v1267 = vunpack.c.l.b16 %v1004
      %v1268 = vunpack.c.l.b16 %v1005
      %v1269 = vunpack.c.l.b16 %v1006
      %v1270 = vunpack.c.l.b16 %v1007
      %v1271 = vunpack.c.l.b16 %v1008
      %v1272 = vunpack.c.l.b16 %v1009
      %v1273 = vunpack.c.l.b16 %v1010
      %v1274 = vunpack.c.l.b16 %v1011
      %v1275 = vunpack.c.l.b16 %v1012
      %v1276 = vunpack.c.l.b16 %v1013
      %v1277 = vunpack.c.l.b16 %v1014
      %v1278 = vunpack.c.l.b16 %v1015
      %v1279 = vunpack.c.l.b16 %v1016
      %v1280 = vunpack.c.l.b16 %v1017
      %v1281 = vunpack.c.l.b16 %v1018
      %v1282 = vunpack.c.l.b16 %v1019
      %v1283 = vunpack.c.l.b16 %v1020
      %v1284 = vunpack.c.l.b16 %v1021
      %v1285 = vunpack.c.l.b16 %v1022
      %v1286 = vunpack.c.l.b16 %v1023
      %v1287 = vunpack.c.l.b16 %v1024
      %v1288 = vunpack.c.l.b16 %v1025
      %v1289 = vunpack.c.l.b16 %v1026
      %v1290 = vunpack.c.l.b16 %v1027
      %v1291 = vunpack.c.l.b16 %v1028
      %v1292 = vunpack.c.l.b16 %v1029
      %v1293 = vunpack.c.l.b16 %v1030
      %v1294 = vunpack.c.l.b16 %v1031
      %v1295 = vunpack.c.l.b16 %v1032
      %v1296 = vunpack.c.l.b16 %v1033
      %v1297 = vunpack.c.l.b16 %v1034
      %v1298 = vunpack.c.l.b16 %v1035
      %v1299 = vunpack.c.l.b16 %v1036
      %v1300 = vunpack.c.l.b16 %v1037
      %v1301 = vunpack.c.l.b16 %v1038
      %v1302 = vunpack.c.l.b16 %v1039
      %v1303 = vunpack.c.l.b16 %v1040
      %v1304 = vunpack.c.l.b16 %v1041
      %v1305 = vunpack.c.l.b16 %v1042
      %v1306 = vunpack.c.l.b16 %v1043
      %v1307 = vunpack.c.l.b16 %v1044
      %v1308 = vunpack.c.l.b16 %v1045
      %v1309 = vunpack.c.l.b16 %v1046
      %v1310 = vunpack.c.l.b16 %v1047
      %v1311 = vunpack.c.l.b16 %v1048
      %v1312 = vunpack.c.l.b16 %v1049
      %v1313 = vunpack.c.l.b16 %v1050
      %v1314 = vunpack.c.l.b16 %v1051
      %v1315 = vunpack.c.l.b16 %v1052
      %v1316 = vunpack.c.l.b16 %v1053
      %v1317 = vunpack.c.l.b16 %v1054
      %v1318 = vunpack.c.l.b16 %v1055
      %v1319 = vunpack.c.l.b16 %v1056
      %v1320 = vunpack.c.l.b16 %v1057
      %v1321 = vunpack.c.l.b16 %v1058
      %v1322 = vunpack.c.l.b16 %v1059
      %v1323 = vunpack.c.l.b16 %v1060
      %v1324 = vunpack.c.l.b16 %v1061
      %v1325 = vunpack.c.l.b16 %v1062
      %v1326 = vunpack.c.l.b16 %v1063
      %v1327 = vunpack.c.l.b16 %v1064
      %v1328 = vunpack.c.l.b16 %v1065
      %v1329 = vunpack.c.l.b16 %v1066
      %v1330 = vunpack.c.l.b16 %v1067
      %v1331 = vunpack.c.l.b16 %v1068
      %v1332 = vunpack.c.l.b16 %v1069
      %v1333 = vunpack.c.l.b16 %v1070
      %v1334 = vunpack.c.l.b16 %v1071
      %v1335 = vunpack.c.l.b16 %v1072
      %v1336 = vunpack.c.l.b16 %v1073
      %v1337 = vunpack.c.l.b16 %v1074
      %v1338 = vunpack.c.l.b16 %v1075
      %v1339 = vunpack.c.l.b16 %v1076
      %v1340 = vunpack.c.l.b16 %v1077
      %v1341 = vunpack.c.l.b16 %v1078
      %v1342 = vunpack.c.l.b16 %v1079
      %v1343 = vunpack.c.l.b16 %v1080
      %v1344 = vunpack.c.l.b16 %v1081
      %v1345 = vunpack.c.l.b16 %v1082
      %v1346 = vunpack.c.l.b16 %v1083
      %v1347 = vunpack.c.l.b16 %v1084
      %v1348 = vunpack.c.l.b16 %v1085
      %v1349 = vunpack.c.l.b16 %v1086
      %v1350 = vunpack.c.l.b16 %v1087
      %v1351 = vunpack.c.l.b16 %v1088
      %v1352 = vunpack.c.l.b16 %v1089
      %v1353 = vunpack.c.l.b16 %v1090
      %v1354 = vunpack.c.l.b16 %v1091
      %v1355 = vunpack.c.l.b16 %v1092
      %v1356 = vunpack.c.l.b16 %v1093
      %v1357 = vunpack.c.l.b16 %v1094
      %v1358 = vunpack.c.l.b16 %v1095
      %v1359 = vunpack.c.l.b16 %v1096
      %v1360 = vunpack.c.l.b16 %v1097
      %v1361 = vunpack.c.l.b16 %v1098
      %v1362 = vunpack.c.l.b16 %v1099
      %v1363 = vunpack.c.l.b16 %v1100
      %v1364 = vunpack.c.l.b16 %v1101
      %v1365 = vunpack.c.l.b16 %v1102
      %v1366 = vunpack.c.l.b16 %v1103
      %v1367 = vunpack.c.l.b16 %v1104
      %v1368 = vunpack.c.l.b16 %v1105
      %v1369 = vunpack.c.l.b16 %v1106
      %v1370 = vunpack.c.l.b16 %v1107
      %v1371 = vunpack.c.l.b16 %v1108
      %v1372 = vunpack.c.l.b16 %v1109
      %v1373 = vunpack.c.l.b16 %v1110
      %v1374 = vunpack.c.l.b16 %v1111
      %v1375 = vunpack.c.l.b16 %v1112
      %v1376 = vunpack.c.l.b16 %v1113
      %v1377 = vunpack.c.l.b16 %v1114
      %v1378 = vunpack.c.l.b16 %v1115
      %v1379 = vunpack.c.l.b16 %v1116
      %v1380 = vunpack.c.l.b16 %v1117
      %v1381 = vunpack.c.l.b16 %v1118
      %v1382 = vpack.c.b16 %v1255, %v1254
      %v1383 = vpack.c.b16 %v1257, %v1256
      %v1384 = vpack.c.b16 %v1259, %v1258
      %v1385 = vpack.c.b16 %v1261, %v1260
      %v1386 = vpack.c.b16 %v1263, %v1262
      %v1387 = vpack.c.b16 %v1265, %v1264
      %v1388 = vpack.c.b16 %v1267, %v1266
      %v1389 = vpack.c.b16 %v1269, %v1268
      %v1390 = vpack.c.b16 %v1271, %v1270
      %v1391 = vpack.c.b16 %v1273, %v1272
      %v1392 = vpack.c.b16 %v1275, %v1274
      %v1393 = vpack.c.b16 %v1277, %v1276
      %v1394 = vpack.c.b16 %v1279, %v1278
      %v1395 = vpack.c.b16 %v1281, %v1280
      %v1396 = vpack.c.b16 %v1283, %v1282
      %v1397 = vpack.c.b16 %v1285, %v1284
      %v1398 = vpack.c.b16 %v1287, %v1286
      %v1399 = vpack.c.b16 %v1289, %v1288
      %v1400 = vpack.c.b16 %v1291, %v1290
      %v1401 = vpack.c.b16 %v1293, %v1292
      %v1402 = vpack.c.b16 %v1295, %v1294
      %v1403 = vpack.c.b16 %v1297, %v1296
      %v1404 = vpack.c.b16 %v1299, %v1298
      %v1405 = vpack.c.b16 %v1301, %v1300
      %v1406 = vpack.c.b16 %v1303, %v1302
      %v1407 = vpack.c.b16 %v1305, %v1304
      %v1408 = vpack.c.b16 %v1307, %v1306
      %v1409 = vpack.c.b16 %v1309, %v1308
      %v1410 = vpack.c.b16 %v1311, %v1310
      %v1411 = vpack.c.b16 %v1313, %v1312
      %v1412 = vpack.c.b16 %v1315, %v1314
      %v1413 = vpack.c.b16 %v1317, %v1316
      %v1414 = vpack.c.b16 %v1319, %v1318
      %v1415 = vpack.c.b16 %v1321, %v1320
      %v1416 = vpack.c.b16 %v1323, %v1322
      %v1417 = vpack.c.b16 %v1325, %v1324
      %v1418 = vpack.c.b16 %v1327, %v1326
      %v1419 = vpack.c.b16 %v1329, %v1328
      %v1420 = vpack.c.b16 %v1331, %v1330
      %v1421 = vpack.c.b16 %v1333, %v1332
      %v1422 = vpack.c.b16 %v1335, %v1334
      %v1423 = vpack.c.b16 %v1337, %v1336
      %v1424 = vpack.c.b16 %v1339, %v1338
      %v1425 = vpack.c.b16 %v1341, %v1340
      %v1426 = vpack.c.b16 %v1343, %v1342
      %v1427 = vpack.c.b16 %v1345, %v1344
      %v1428 = vpack.c.b16 %v1347, %v1346
      %v1429 = vpack.c.b16 %v1349, %v1348
      %v1430 = vpack.c.b16 %v1351, %v1350
      %v1431 = vpack.c.b16 %v1353, %v1352
      %v1432 = vpack.c.b16 %v1355, %v1354
      %v1433 = vpack.c.b16 %v1357, %v1356
      %v1434 = vpack.c.b16 %v1359, %v1358
      %v1435 = vpack.c.b16 %v1361, %v1360
      %v1436 = vpack.c.b16 %v1363, %v1362
      %v1437 = vpack.c.b16 %v1365, %v1364
      %v1438 = vpack.c.b16 %v1367, %v1366
      %v1439 = vpack.c.b16 %v1369, %v1368
      %v1440 = vpack.c.b16 %v1371, %v1370
      %v1441 = vpack.c.b16 %v1373, %v1372
      %v1442 = vpack.c.b16 %v1375, %v1374
      %v1443 = vpack.c.b16 %v1377, %v1376
      %v1444 = vpack.c.b16 %v1379, %v1378
      %v1445 = vpack.c.b16 %v1381, %v1380
      %1510 = vmatprep.subr.bf16.mxu0 0
      %1511 = vmatpush1.bf16.msra.mxu0 %v1389
      %1512 = vmatprep.subr.bf16.mxu0 0
      %1513 = vmatpush1.bf16.msra.mxu0 %v1388
      %1514 = vmatprep.subr.bf16.mxu0 0
      %1515 = vmatpush1.bf16.msra.mxu0 %v1387
      %1516 = vmatprep.subr.bf16.mxu0 0
      %1517 = vmatpush1.bf16.msra.mxu0 %v1386
      %1518 = vmatprep.subr.bf16.mxu0 0
      %1519 = vmatpush1.bf16.msra.mxu0 %v1385
      %1520 = vmatprep.subr.bf16.mxu0 0
      %1521 = vmatpush1.bf16.msra.mxu0 %v1384
      %1522 = vmatprep.subr.bf16.mxu0 0
      %1523 = vmatpush1.bf16.msra.mxu0 %v1383
      %1524 = vmatprep.subr.bf16.mxu0 0
      %1525 = vmatpush1.bf16.msra.mxu0 %v1382
      %1526 = vmatprep.subr.bf16.mxu0 0
      %1527 = vmatpush2.bf16.msra.mxu0 %v1397
      %1528 = vmatprep.subr.bf16.mxu0 0
      %1529 = vmatpush2.bf16.msra.mxu0 %v1396
      %1530 = vmatprep.subr.bf16.mxu0 0
      %1531 = vmatpush2.bf16.msra.mxu0 %v1395
      %1532 = vmatprep.subr.bf16.mxu0 0
      %1533 = vmatpush2.bf16.msra.mxu0 %v1394
      %1534 = vmatprep.subr.bf16.mxu0 0
      %1535 = vmatpush2.bf16.msra.mxu0 %v1393
      %1536 = vmatprep.subr.bf16.mxu0 0
      %1537 = vmatpush2.bf16.msra.mxu0 %v1392
      %1538 = vmatprep.subr.bf16.mxu0 0
      %1539 = vmatpush2.bf16.msra.mxu0 %v1391
      %1540 = vmatprep.subr.bf16.mxu0 0
      %1541 = vmatpush2.bf16.msra.mxu0 %v1390
      %1542 = vmatprep.mubr.bf16.mxu0 %v642
      %1543 = vmatmul.mubr.bf16.gmra.mxu0 %v641
      %v1544 = vpop.f32.mrf.mxu0
      %v1545 = vadd.f32 %v1124, %v1544
      %v1546 = vpop.f32.mrf.mxu0
      %v1547 = vpop.f32.mrf.mxu0
      %v1548 = vadd.f32 %v1124, %v1547
      %v1549 = vpop.f32.mrf.mxu0
      %1550 = vmatprep.mubr.bf16.mxu0 %v644
      %1551 = vmatmul.mubr.bf16.gmra.mxu0 %v643
      %v1552 = vpop.f32.mrf.mxu0
      %v1553 = vadd.f32 %v1124, %v1552
      %v1554 = vpop.f32.mrf.mxu0
      %v1555 = vpop.f32.mrf.mxu0
      %v1556 = vadd.f32 %v1124, %v1555
      %v1557 = vpop.f32.mrf.mxu0
      %1558 = vmatprep.mubr.bf16.mxu0 %v646
      %1559 = vmatmul.mubr.bf16.gmra.mxu0 %v645
      %v1560 = vpop.f32.mrf.mxu0
      %v1561 = vadd.f32 %v1124, %v1560
      %v1562 = vpop.f32.mrf.mxu0
      %v1563 = vpop.f32.mrf.mxu0
      %v1564 = vadd.f32 %v1124, %v1563
      %v1565 = vpop.f32.mrf.mxu0
      %1566 = vmatprep.mubr.bf16.mxu0 %v648
      %1567 = vmatmul.mubr.bf16.gmra.mxu0 %v647
      %v1568 = vpop.f32.mrf.mxu0
      %v1569 = vadd.f32 %v1124, %v1568
      %v1570 = vpop.f32.mrf.mxu0
      %v1571 = vpop.f32.mrf.mxu0
      %v1572 = vadd.f32 %v1124, %v1571
      %v1573 = vpop.f32.mrf.mxu0
      %1574 = vdwg.mxu0
      %1575 = vmatprep.subr.bf16.mxu0 0
      %1576 = vmatpush1.bf16.msra.mxu0 %v1405
      %1577 = vmatprep.subr.bf16.mxu0 0
      %1578 = vmatpush1.bf16.msra.mxu0 %v1404
      %1579 = vmatprep.subr.bf16.mxu0 0
      %1580 = vmatpush1.bf16.msra.mxu0 %v1403
      %1581 = vmatprep.subr.bf16.mxu0 0
      %1582 = vmatpush1.bf16.msra.mxu0 %v1402
      %1583 = vmatprep.subr.bf16.mxu0 0
      %1584 = vmatpush1.bf16.msra.mxu0 %v1401
      %1585 = vmatprep.subr.bf16.mxu0 0
      %1586 = vmatpush1.bf16.msra.mxu0 %v1400
      %1587 = vmatprep.subr.bf16.mxu0 0
      %1588 = vmatpush1.bf16.msra.mxu0 %v1399
      %1589 = vmatprep.subr.bf16.mxu0 0
      %1590 = vmatpush1.bf16.msra.mxu0 %v1398
      %1591 = vmatprep.subr.bf16.mxu0 0
      %1592 = vmatpush2.bf16.msra.mxu0 %v1413
      %1593 = vmatprep.subr.bf16.mxu0 0
      %1594 = vmatpush2.bf16.msra.mxu0 %v1412
      %1595 = vmatprep.subr.bf16.mxu0 0
      %1596 = vmatpush2.bf16.msra.mxu0 %v1411
      %1597 = vmatprep.subr.bf16.mxu0 0
      %1598 = vmatpush2.bf16.msra.mxu0 %v1410
      %1599 = vmatprep.subr.bf16.mxu0 0
      %1600 = vmatpush2.bf16.msra.mxu0 %v1409
      %1601 = vmatprep.subr.bf16.mxu0 0
      %1602 = vmatpush2.bf16.msra.mxu0 %v1408
      %1603 = vmatprep.subr.bf16.mxu0 0
      %1604 = vmatpush2.bf16.msra.mxu0 %v1407
      %1605 = vmatprep.subr.bf16.mxu0 0
      %1606 = vmatpush2.bf16.msra.mxu0 %v1406
      %1607 = vmatprep.mubr.bf16.mxu0 %v756
      %1608 = vmatmul.mubr.bf16.gmra.mxu0 %v755
      %v1609 = vpop.f32.mrf.mxu0
      %v1610 = vadd.f32 %v1545, %v1609
      %v1611 = vpop.f32.mrf.mxu0
      %v1612 = vpop.f32.mrf.mxu0
      %v1613 = vadd.f32 %v1548, %v1612
      %v1614 = vpop.f32.mrf.mxu0
      %1615 = vmatprep.mubr.bf16.mxu0 %v758
      %1616 = vmatmul.mubr.bf16.gmra.mxu0 %v757
      %v1617 = vpop.f32.mrf.mxu0
      %v1618 = vadd.f32 %v1553, %v1617
      %v1619 = vpop.f32.mrf.mxu0
      %v1620 = vpop.f32.mrf.mxu0
      %v1621 = vadd.f32 %v1556, %v1620
      %v1622 = vpop.f32.mrf.mxu0
      %1623 = vmatprep.mubr.bf16.mxu0 %v760
      %1624 = vmatmul.mubr.bf16.gmra.mxu0 %v759
      %v1625 = vpop.f32.mrf.mxu0
      %v1626 = vadd.f32 %v1561, %v1625
      %v1627 = vpop.f32.mrf.mxu0
      %v1628 = vpop.f32.mrf.mxu0
      %v1629 = vadd.f32 %v1564, %v1628
      %v1630 = vpop.f32.mrf.mxu0
      %1631 = vmatprep.mubr.bf16.mxu0 %v762
      %1632 = vmatmul.mubr.bf16.gmra.mxu0 %v761
      %v1633 = vpop.f32.mrf.mxu0
      %v1634 = vadd.f32 %v1569, %v1633
      %v1635 = vpop.f32.mrf.mxu0
      %v1636 = vpop.f32.mrf.mxu0
      %v1637 = vadd.f32 %v1572, %v1636
      %v1638 = vpop.f32.mrf.mxu0
      %1639 = vdwg.mxu0
      %1640 = vmatprep.subr.bf16.mxu0 0
      %1641 = vmatpush1.bf16.msra.mxu0 %v1421
      %1642 = vmatprep.subr.bf16.mxu0 0
      %1643 = vmatpush1.bf16.msra.mxu0 %v1420
      %1644 = vmatprep.subr.bf16.mxu0 0
      %1645 = vmatpush1.bf16.msra.mxu0 %v1419
      %1646 = vmatprep.subr.bf16.mxu0 0
      %1647 = vmatpush1.bf16.msra.mxu0 %v1418
      %1648 = vmatprep.subr.bf16.mxu0 0
      %1649 = vmatpush1.bf16.msra.mxu0 %v1417
      %1650 = vmatprep.subr.bf16.mxu0 0
      %1651 = vmatpush1.bf16.msra.mxu0 %v1416
      %1652 = vmatprep.subr.bf16.mxu0 0
      %1653 = vmatpush1.bf16.msra.mxu0 %v1415
      %1654 = vmatprep.subr.bf16.mxu0 0
      %1655 = vmatpush1.bf16.msra.mxu0 %v1414
      %1656 = vmatprep.subr.bf16.mxu0 0
      %1657 = vmatpush2.bf16.msra.mxu0 %v1429
      %1658 = vmatprep.subr.bf16.mxu0 0
      %1659 = vmatpush2.bf16.msra.mxu0 %v1428
      %1660 = vmatprep.subr.bf16.mxu0 0
      %1661 = vmatpush2.bf16.msra.mxu0 %v1427
      %1662 = vmatprep.subr.bf16.mxu0 0
      %1663 = vmatpush2.bf16.msra.mxu0 %v1426
      %1664 = vmatprep.subr.bf16.mxu0 0
      %1665 = vmatpush2.bf16.msra.mxu0 %v1425
      %1666 = vmatprep.subr.bf16.mxu0 0
      %1667 = vmatpush2.bf16.msra.mxu0 %v1424
      %1668 = vmatprep.subr.bf16.mxu0 0
      %1669 = vmatpush2.bf16.msra.mxu0 %v1423
      %1670 = vmatprep.subr.bf16.mxu0 0
      %1671 = vmatpush2.bf16.msra.mxu0 %v1422
      %1672 = vmatprep.mubr.bf16.mxu0 %v870
      %1673 = vmatmul.mubr.bf16.gmra.mxu0 %v869
      %v1674 = vpop.f32.mrf.mxu0
      %v1675 = vadd.f32 %v1610, %v1674
      %v1676 = vpop.f32.mrf.mxu0
      %v1677 = vpop.f32.mrf.mxu0
      %v1678 = vadd.f32 %v1613, %v1677
      %v1679 = vpop.f32.mrf.mxu0
      %1680 = vmatprep.mubr.bf16.mxu0 %v872
      %1681 = vmatmul.mubr.bf16.gmra.mxu0 %v871
      %v1682 = vpop.f32.mrf.mxu0
      %v1683 = vadd.f32 %v1618, %v1682
      %v1684 = vpop.f32.mrf.mxu0
      %v1685 = vpop.f32.mrf.mxu0
      %v1686 = vadd.f32 %v1621, %v1685
      %v1687 = vpop.f32.mrf.mxu0
      %1688 = vmatprep.mubr.bf16.mxu0 %v874
      %1689 = vmatmul.mubr.bf16.gmra.mxu0 %v873
      %v1690 = vpop.f32.mrf.mxu0
      %v1691 = vadd.f32 %v1626, %v1690
      %v1692 = vpop.f32.mrf.mxu0
      %v1693 = vpop.f32.mrf.mxu0
      %v1694 = vadd.f32 %v1629, %v1693
      %v1695 = vpop.f32.mrf.mxu0
      %1696 = vmatprep.mubr.bf16.mxu0 %v876
      %1697 = vmatmul.mubr.bf16.gmra.mxu0 %v875
      %v1698 = vpop.f32.mrf.mxu0
      %v1699 = vadd.f32 %v1634, %v1698
      %v1700 = vpop.f32.mrf.mxu0
      %v1701 = vpop.f32.mrf.mxu0
      %v1702 = vadd.f32 %v1637, %v1701
      %v1703 = vpop.f32.mrf.mxu0
      %1704 = vdwg.mxu0
      %1705 = vmatprep.subr.bf16.mxu0 0
      %1706 = vmatpush1.bf16.msra.mxu0 %v1437
      %1707 = vmatprep.subr.bf16.mxu0 0
      %1708 = vmatpush1.bf16.msra.mxu0 %v1436
      %1709 = vmatprep.subr.bf16.mxu0 0
      %1710 = vmatpush1.bf16.msra.mxu0 %v1435
      %1711 = vmatprep.subr.bf16.mxu0 0
      %1712 = vmatpush1.bf16.msra.mxu0 %v1434
      %1713 = vmatprep.subr.bf16.mxu0 0
      %1714 = vmatpush1.bf16.msra.mxu0 %v1433
      %1715 = vmatprep.subr.bf16.mxu0 0
      %1716 = vmatpush1.bf16.msra.mxu0 %v1432
      %1717 = vmatprep.subr.bf16.mxu0 0
      %1718 = vmatpush1.bf16.msra.mxu0 %v1431
      %1719 = vmatprep.subr.bf16.mxu0 0
      %1720 = vmatpush1.bf16.msra.mxu0 %v1430
      %1721 = vmatprep.subr.bf16.mxu0 0
      %1722 = vmatpush2.bf16.msra.mxu0 %v1445
      %1723 = vmatprep.subr.bf16.mxu0 0
      %1724 = vmatpush2.bf16.msra.mxu0 %v1444
      %1725 = vmatprep.subr.bf16.mxu0 0
      %1726 = vmatpush2.bf16.msra.mxu0 %v1443
      %1727 = vmatprep.subr.bf16.mxu0 0
      %1728 = vmatpush2.bf16.msra.mxu0 %v1442
      %1729 = vmatprep.subr.bf16.mxu0 0
      %1730 = vmatpush2.bf16.msra.mxu0 %v1441
      %1731 = vmatprep.subr.bf16.mxu0 0
      %1732 = vmatpush2.bf16.msra.mxu0 %v1440
      %1733 = vmatprep.subr.bf16.mxu0 0
      %1734 = vmatpush2.bf16.msra.mxu0 %v1439
      %1735 = vmatprep.subr.bf16.mxu0 0
      %1736 = vmatpush2.bf16.msra.mxu0 %v1438
      %1737 = vmatprep.mubr.bf16.mxu0 %v984
      %1738 = vmatmul.mubr.bf16.gmra.mxu0 %v983
      %v1739 = vpop.f32.mrf.mxu0
      %v1740 = vadd.f32 %v1675, %v1739
      %v1741 = vpop.f32.mrf.mxu0
      %v1742 = vpop.f32.mrf.mxu0
      %v1743 = vadd.f32 %v1678, %v1742
      %v1744 = vpop.f32.mrf.mxu0
      %1745 = vmatprep.mubr.bf16.mxu0 %v986
      %1746 = vmatmul.mubr.bf16.gmra.mxu0 %v985
      %v1747 = vpop.f32.mrf.mxu0
      %v1748 = vadd.f32 %v1683, %v1747
      %v1749 = vpop.f32.mrf.mxu0
      %v1750 = vpop.f32.mrf.mxu0
      %v1751 = vadd.f32 %v1686, %v1750
      %v1752 = vpop.f32.mrf.mxu0
      %1753 = vmatprep.mubr.bf16.mxu0 %v988
      %1754 = vmatmul.mubr.bf16.gmra.mxu0 %v987
      %v1755 = vpop.f32.mrf.mxu0
      %v1756 = vadd.f32 %v1691, %v1755
      %v1757 = vpop.f32.mrf.mxu0
      %v1758 = vpop.f32.mrf.mxu0
      %v1759 = vadd.f32 %v1694, %v1758
      %v1760 = vpop.f32.mrf.mxu0
      %1761 = vmatprep.mubr.bf16.mxu0 %v990
      %1762 = vmatmul.mubr.bf16.gmra.mxu0 %v989
      %v1763 = vpop.f32.mrf.mxu0
      %v1764 = vadd.f32 %v1699, %v1763
      %v1765 = vpop.f32.mrf.mxu0
      %v1766 = vpop.f32.mrf.mxu0
      %v1767 = vadd.f32 %v1702, %v1766
      %v1768 = vpop.f32.mrf.mxu0
      %1769 = vdwg.mxu0
      %v1770 = vmul.f32 %v1740, 0.2
      %v1771 = vmul.f32 %v1743, 0.2
      %v1772 = vmul.f32 %v1748, 0.2
      %v1773 = vmul.f32 %v1751, 0.2
      %v1774 = vmul.f32 %v1756, 0.2
      %v1775 = vmul.f32 %v1759, 0.2
      %v1776 = vmul.f32 %v1764, 0.2
      %v1777 = vmul.f32 %v1767, 0.2
      %v1778 = vmax.f32 %v1740, %v1770
      %v1779 = vmax.f32 %v1743, %v1771
      %v1780 = vmax.f32 %v1748, %v1772
      %v1781 = vmax.f32 %v1751, %v1773
      %v1782 = vmax.f32 %v1756, %v1774
      %v1783 = vmax.f32 %v1759, %v1775
      %v1784 = vmax.f32 %v1764, %v1776
      %v1785 = vmax.f32 %v1767, %v1777
      %v1786 = vpack.c.bf16 %v1779, %v1778
      %v1787 = vpack.c.bf16 %v1781, %v1780
      %v1788 = vpack.c.bf16 %v1783, %v1782
      %v1789 = vpack.c.bf16 %v1785, %v1784
      %v1790 = vld [vmem:[%s4] sm:$0xf]
      %v1791 = vld [vmem:[%s4 + $0x4] sm:$0xf]
      %v1792 = vld [vmem:[%s4 + $0x8] sm:$0xf]
      %v1793 = vld [vmem:[%s4 + $0xc] sm:$0xf]
      %v1798 = vunpack.c.l.b16 %v1790
      %v1799 = vunpack.c.l.b16 %v1791
      %v1800 = vunpack.c.l.b16 %v1792
      %v1801 = vunpack.c.l.b16 %v1793
      %v1802 = vpack.c.b16 %v1799, %v1798
      %v1803 = vpack.c.b16 %v1801, %v1800
      %vm1804 = vcmask 523264
      %v1806 = vsel %vm1804, %v1802, 0
      %v1809 = vsel %vm1804, %v1803, 0
      %1811 = vmatprep.subr.bf16.mxu0 0
      %1812 = vmatpush1.bf16.msra.mxu0 0
      %1813 = vmatprep.subr.bf16.mxu0 0
      %1814 = vmatpush1.bf16.msra.mxu0 0
      %1815 = vmatprep.subr.bf16.mxu0 0
      %1816 = vmatpush1.bf16.msra.mxu0 0
      %1817 = vmatprep.subr.bf16.mxu0 0
      %1818 = vmatpush1.bf16.msra.mxu0 0
      %1819 = vmatprep.subr.bf16.mxu0 0
      %1820 = vmatpush1.bf16.msra.mxu0 %v1789
      %1821 = vmatprep.subr.bf16.mxu0 0
      %1822 = vmatpush1.bf16.msra.mxu0 %v1788
      %1823 = vmatprep.subr.bf16.mxu0 0
      %1824 = vmatpush1.bf16.msra.mxu0 %v1787
      %1825 = vmatprep.subr.bf16.mxu0 0
      %1826 = vmatpush1.bf16.msra.mxu0 %v1786
      %1827 = vmatprep.subr.bf16.mxu0 0
      %1828 = vmatpush2.bf16.msra.mxu0 0
      %1829 = vmatprep.subr.bf16.mxu0 0
      %1830 = vmatpush2.bf16.msra.mxu0 0
      %1831 = vmatprep.subr.bf16.mxu0 0
      %1832 = vmatpush2.bf16.msra.mxu0 0
      %1833 = vmatprep.subr.bf16.mxu0 0
      %1834 = vmatpush2.bf16.msra.mxu0 0
      %1835 = vmatprep.subr.bf16.mxu0 0
      %1836 = vmatpush2.bf16.msra.mxu0 0
      %1837 = vmatprep.subr.bf16.mxu0 0
      %1838 = vmatpush2.bf16.msra.mxu0 0
      %1839 = vmatprep.subr.bf16.mxu0 0
      %1840 = vmatpush2.bf16.msra.mxu0 0
      %1841 = vmatprep.subr.bf16.mxu0 0
      %1842 = vmatpush2.bf16.msra.mxu0 0
      %1843 = vmatprep.mubr.bf16.mxu0 0
      %1844 = vmatmul.mubr.bf16.gmra.mxu0 %v1806
      %v1845 = vpop.f32.mrf.mxu0
      %v1846 = vadd.f32 0.0, %v1845
      %v1847 = vpop.f32.mrf.mxu0
      %v1848 = vpop.f32.mrf.mxu0
      %v1849 = vadd.f32 0.0, %v1848
      %v1850 = vpop.f32.mrf.mxu0
      %1851 = vmatprep.mubr.bf16.mxu0 0
      %1852 = vmatmul.mubr.bf16.gmra.mxu0 %v1809
      %v1853 = vpop.f32.mrf.mxu0
      %v1854 = vadd.f32 0.0, %v1853
      %v1855 = vpop.f32.mrf.mxu0
      %v1856 = vpop.f32.mrf.mxu0
      %v1857 = vadd.f32 0.0, %v1856
      %v1858 = vpop.f32.mrf.mxu0
      %1859 = vdwg.mxu0
      %v1860 = vpack.c.bf16 %v1849, %v1846
      %v1861 = vpack.c.bf16 %v1857, %v1854
      %s1862 = scalar_lea.vmem %s4, 16
      %v1863 = vld [vmem:[%s1862] sm:$0xf]
      %v1864 = vld [vmem:[%s1862 + $0x4] sm:$0xf]
      %v1865 = vld [vmem:[%s1862 + $0x8] sm:$0xf]
      %v1866 = vld [vmem:[%s1862 + $0xc] sm:$0xf]
      %v1871 = vunpack.c.l.b16 %v1863
      %v1872 = vunpack.c.l.b16 %v1864
      %v1873 = vunpack.c.l.b16 %v1865
      %v1874 = vunpack.c.l.b16 %v1866
      %v1875 = vpack.c.b16 %v1872, %v1871
      %v1876 = vpack.c.b16 %v1874, %v1873
      %v1878 = vsel %vm1804, %v1875, 0
      %v1881 = vsel %vm1804, %v1876, 0
      %1883 = vmatprep.subr.bf16.mxu0 0
      %1884 = vmatpush1.bf16.msra.mxu0 0
      %1885 = vmatprep.subr.bf16.mxu0 0
      %1886 = vmatpush1.bf16.msra.mxu0 0
      %1887 = vmatprep.subr.bf16.mxu0 0
      %1888 = vmatpush1.bf16.msra.mxu0 0
      %1889 = vmatprep.subr.bf16.mxu0 0
      %1890 = vmatpush1.bf16.msra.mxu0 0
      %1891 = vmatprep.subr.bf16.mxu0 0
      %1892 = vmatpush1.bf16.msra.mxu0 %v1789
      %1893 = vmatprep.subr.bf16.mxu0 0
      %1894 = vmatpush1.bf16.msra.mxu0 %v1788
      %1895 = vmatprep.subr.bf16.mxu0 0
      %1896 = vmatpush1.bf16.msra.mxu0 %v1787
      %1897 = vmatprep.subr.bf16.mxu0 0
      %1898 = vmatpush1.bf16.msra.mxu0 %v1786
      %1899 = vmatprep.subr.bf16.mxu0 0
      %1900 = vmatpush2.bf16.msra.mxu0 0
      %1901 = vmatprep.subr.bf16.mxu0 0
      %1902 = vmatpush2.bf16.msra.mxu0 0
      %1903 = vmatprep.subr.bf16.mxu0 0
      %1904 = vmatpush2.bf16.msra.mxu0 0
      %1905 = vmatprep.subr.bf16.mxu0 0
      %1906 = vmatpush2.bf16.msra.mxu0 0
      %1907 = vmatprep.subr.bf16.mxu0 0
      %1908 = vmatpush2.bf16.msra.mxu0 0
      %1909 = vmatprep.subr.bf16.mxu0 0
      %1910 = vmatpush2.bf16.msra.mxu0 0
      %1911 = vmatprep.subr.bf16.mxu0 0
      %1912 = vmatpush2.bf16.msra.mxu0 0
      %1913 = vmatprep.subr.bf16.mxu0 0
      %1914 = vmatpush2.bf16.msra.mxu0 0
      %1915 = vmatprep.mubr.bf16.mxu0 0
      %1916 = vmatmul.mubr.bf16.gmra.mxu0 %v1878
      %v1917 = vpop.f32.mrf.mxu0
      %v1918 = vadd.f32 0.0, %v1917
      %v1919 = vpop.f32.mrf.mxu0
      %v1920 = vpop.f32.mrf.mxu0
      %v1921 = vadd.f32 0.0, %v1920
      %v1922 = vpop.f32.mrf.mxu0
      %1923 = vmatprep.mubr.bf16.mxu0 0
      %1924 = vmatmul.mubr.bf16.gmra.mxu0 %v1881
      %v1925 = vpop.f32.mrf.mxu0
      %v1926 = vadd.f32 0.0, %v1925
      %v1927 = vpop.f32.mrf.mxu0
      %v1928 = vpop.f32.mrf.mxu0
      %v1929 = vadd.f32 0.0, %v1928
      %v1930 = vpop.f32.mrf.mxu0
      %1931 = vdwg.mxu0
      %v1932 = vpack.c.bf16 %v1921, %v1918
      %v1933 = vpack.c.bf16 %v1929, %v1926
      %s1934 = scalar_lea.vmem %s4, 32
      %v1935 = vld [vmem:[%s1934] sm:$0xf]
      %v1936 = vld [vmem:[%s1934 + $0x4] sm:$0xf]
      %v1937 = vld [vmem:[%s1934 + $0x8] sm:$0xf]
      %v1938 = vld [vmem:[%s1934 + $0xc] sm:$0xf]
      %v1943 = vunpack.c.l.b16 %v1935
      %v1944 = vunpack.c.l.b16 %v1936
      %v1945 = vunpack.c.l.b16 %v1937
      %v1946 = vunpack.c.l.b16 %v1938
      %v1947 = vpack.c.b16 %v1944, %v1943
      %v1948 = vpack.c.b16 %v1946, %v1945
      %v1950 = vsel %vm1804, %v1947, 0
      %v1953 = vsel %vm1804, %v1948, 0
      %1955 = vmatprep.subr.bf16.mxu0 0
      %1956 = vmatpush1.bf16.msra.mxu0 0
      %1957 = vmatprep.subr.bf16.mxu0 0
      %1958 = vmatpush1.bf16.msra.mxu0 0
      %1959 = vmatprep.subr.bf16.mxu0 0
      %1960 = vmatpush1.bf16.msra.mxu0 0
      %1961 = vmatprep.subr.bf16.mxu0 0
      %1962 = vmatpush1.bf16.msra.mxu0 0
      %1963 = vmatprep.subr.bf16.mxu0 0
      %1964 = vmatpush1.bf16.msra.mxu0 %v1789
      %1965 = vmatprep.subr.bf16.mxu0 0
      %1966 = vmatpush1.bf16.msra.mxu0 %v1788
      %1967 = vmatprep.subr.bf16.mxu0 0
      %1968 = vmatpush1.bf16.msra.mxu0 %v1787
      %1969 = vmatprep.subr.bf16.mxu0 0
      %1970 = vmatpush1.bf16.msra.mxu0 %v1786
      %1971 = vmatprep.subr.bf16.mxu0 0
      %1972 = vmatpush2.bf16.msra.mxu0 0
      %1973 = vmatprep.subr.bf16.mxu0 0
      %1974 = vmatpush2.bf16.msra.mxu0 0
      %1975 = vmatprep.subr.bf16.mxu0 0
      %1976 = vmatpush2.bf16.msra.mxu0 0
      %1977 = vmatprep.subr.bf16.mxu0 0
      %1978 = vmatpush2.bf16.msra.mxu0 0
      %1979 = vmatprep.subr.bf16.mxu0 0
      %1980 = vmatpush2.bf16.msra.mxu0 0
      %1981 = vmatprep.subr.bf16.mxu0 0
      %1982 = vmatpush2.bf16.msra.mxu0 0
      %1983 = vmatprep.subr.bf16.mxu0 0
      %1984 = vmatpush2.bf16.msra.mxu0 0
      %1985 = vmatprep.subr.bf16.mxu0 0
      %1986 = vmatpush2.bf16.msra.mxu0 0
      %1987 = vmatprep.mubr.bf16.mxu0 0
      %1988 = vmatmul.mubr.bf16.gmra.mxu0 %v1950
      %v1989 = vpop.f32.mrf.mxu0
      %v1990 = vadd.f32 0.0, %v1989
      %v1991 = vpop.f32.mrf.mxu0
      %v1992 = vpop.f32.mrf.mxu0
      %v1993 = vadd.f32 0.0, %v1992
      %v1994 = vpop.f32.mrf.mxu0
      %1995 = vmatprep.mubr.bf16.mxu0 0
      %1996 = vmatmul.mubr.bf16.gmra.mxu0 %v1953
      %v1997 = vpop.f32.mrf.mxu0
      %v1998 = vadd.f32 0.0, %v1997
      %v1999 = vpop.f32.mrf.mxu0
      %v2000 = vpop.f32.mrf.mxu0
      %v2001 = vadd.f32 0.0, %v2000
      %v2002 = vpop.f32.mrf.mxu0
      %2003 = vdwg.mxu0
      %v2004 = vpack.c.bf16 %v1993, %v1990
      %v2005 = vpack.c.bf16 %v2001, %v1998
      %s2006 = scalar_lea.vmem %s4, 48
      %v2007 = vld [vmem:[%s2006] sm:$0xf]
      %v2008 = vld [vmem:[%s2006 + $0x4] sm:$0xf]
      %v2009 = vld [vmem:[%s2006 + $0x8] sm:$0xf]
      %v2010 = vld [vmem:[%s2006 + $0xc] sm:$0xf]
      %v2015 = vunpack.c.l.b16 %v2007
      %v2016 = vunpack.c.l.b16 %v2008
      %v2017 = vunpack.c.l.b16 %v2009
      %v2018 = vunpack.c.l.b16 %v2010
      %v2019 = vpack.c.b16 %v2016, %v2015
      %v2020 = vpack.c.b16 %v2018, %v2017
      %v2022 = vsel %vm1804, %v2019, 0
      %v2025 = vsel %vm1804, %v2020, 0
      %2027 = vmatprep.subr.bf16.mxu0 0
      %2028 = vmatpush1.bf16.msra.mxu0 0
      %2029 = vmatprep.subr.bf16.mxu0 0
      %2030 = vmatpush1.bf16.msra.mxu0 0
      %2031 = vmatprep.subr.bf16.mxu0 0
      %2032 = vmatpush1.bf16.msra.mxu0 0
      %2033 = vmatprep.subr.bf16.mxu0 0
      %2034 = vmatpush1.bf16.msra.mxu0 0
      %2035 = vmatprep.subr.bf16.mxu0 0
      %2036 = vmatpush1.bf16.msra.mxu0 %v1789
      %2037 = vmatprep.subr.bf16.mxu0 0
      %2038 = vmatpush1.bf16.msra.mxu0 %v1788
      %2039 = vmatprep.subr.bf16.mxu0 0
      %2040 = vmatpush1.bf16.msra.mxu0 %v1787
      %2041 = vmatprep.subr.bf16.mxu0 0
      %2042 = vmatpush1.bf16.msra.mxu0 %v1786
      %2043 = vmatprep.subr.bf16.mxu0 0
      %2044 = vmatpush2.bf16.msra.mxu0 0
      %2045 = vmatprep.subr.bf16.mxu0 0
      %2046 = vmatpush2.bf16.msra.mxu0 0
      %2047 = vmatprep.subr.bf16.mxu0 0
      %2048 = vmatpush2.bf16.msra.mxu0 0
      %2049 = vmatprep.subr.bf16.mxu0 0
      %2050 = vmatpush2.bf16.msra.mxu0 0
      %2051 = vmatprep.subr.bf16.mxu0 0
      %2052 = vmatpush2.bf16.msra.mxu0 0
      %2053 = vmatprep.subr.bf16.mxu0 0
      %2054 = vmatpush2.bf16.msra.mxu0 0
      %2055 = vmatprep.subr.bf16.mxu0 0
      %2056 = vmatpush2.bf16.msra.mxu0 0
      %2057 = vmatprep.subr.bf16.mxu0 0
      %2058 = vmatpush2.bf16.msra.mxu0 0
      %2059 = vmatprep.mubr.bf16.mxu0 0
      %2060 = vmatmul.mubr.bf16.gmra.mxu0 %v2022
      %v2061 = vpop.f32.mrf.mxu0
      %v2062 = vadd.f32 0.0, %v2061
      %v2063 = vpop.f32.mrf.mxu0
      %v2064 = vpop.f32.mrf.mxu0
      %v2065 = vadd.f32 0.0, %v2064
      %v2066 = vpop.f32.mrf.mxu0
      %2067 = vmatprep.mubr.bf16.mxu0 0
      %2068 = vmatmul.mubr.bf16.gmra.mxu0 %v2025
      %v2069 = vpop.f32.mrf.mxu0
      %v2070 = vadd.f32 0.0, %v2069
      %v2071 = vpop.f32.mrf.mxu0
      %v2072 = vpop.f32.mrf.mxu0
      %v2073 = vadd.f32 0.0, %v2072
      %v2074 = vpop.f32.mrf.mxu0
      %2075 = vdwg.mxu0
      %v2076 = vpack.c.bf16 %v2065, %v2062
      %v2077 = vpack.c.bf16 %v2073, %v2070
      %v2078 = vld [vmem:[%s5] sm:$0xf]
      %v2079 = vld [vmem:[%s5 + $0x4] sm:$0xf]
      %v2080 = vld [vmem:[%s5 + $0x8] sm:$0xf]
      %v2081 = vld [vmem:[%s5 + $0xc] sm:$0xf]
      %v2082 = vld [vmem:[%s5 + $0x10] sm:$0xf]
      %v2083 = vld [vmem:[%s5 + $0x14] sm:$0xf]
      %v2084 = vld [vmem:[%s5 + $0x18] sm:$0xf]
      %v2085 = vld [vmem:[%s5 + $0x1c] sm:$0xf]
      %v2086 = vld [vmem:[%s5 + $0x20] sm:$0xf]
      %v2087 = vld [vmem:[%s5 + $0x24] sm:$0xf]
      %v2088 = vld [vmem:[%s5 + $0x28] sm:$0xf]
      %v2089 = vld [vmem:[%s5 + $0x2c] sm:$0xf]
      %v2090 = vld [vmem:[%s5 + $0x30] sm:$0xf]
      %v2091 = vld [vmem:[%s5 + $0x34] sm:$0xf]
      %v2092 = vld [vmem:[%s5 + $0x38] sm:$0xf]
      %v2093 = vld [vmem:[%s5 + $0x3c] sm:$0xf]
      %v2094 = vld [vmem:[%s5 + $0x40] sm:$0xf]
      %v2095 = vld [vmem:[%s5 + $0x44] sm:$0xf]
      %v2096 = vld [vmem:[%s5 + $0x48] sm:$0xf]
      %v2097 = vld [vmem:[%s5 + $0x4c] sm:$0xf]
      %v2098 = vld [vmem:[%s5 + $0x50] sm:$0xf]
      %v2099 = vld [vmem:[%s5 + $0x54] sm:$0xf]
      %v2100 = vld [vmem:[%s5 + $0x58] sm:$0xf]
      %v2101 = vld [vmem:[%s5 + $0x5c] sm:$0xf]
      %v2102 = vld [vmem:[%s5 + $0x60] sm:$0xf]
      %v2103 = vld [vmem:[%s5 + $0x64] sm:$0xf]
      %v2104 = vld [vmem:[%s5 + $0x68] sm:$0xf]
      %v2105 = vld [vmem:[%s5 + $0x6c] sm:$0xf]
      %v2106 = vld [vmem:[%s5 + $0x70] sm:$0xf]
      %v2107 = vld [vmem:[%s5 + $0x74] sm:$0xf]
      %v2108 = vld [vmem:[%s5 + $0x78] sm:$0xf]
      %v2109 = vld [vmem:[%s5 + $0x7c] sm:$0xf]
      %v2110 = vld [vmem:[%s5 + $0x80] sm:$0xf]
      %v2111 = vld [vmem:[%s5 + $0x84] sm:$0xf]
      %v2112 = vld [vmem:[%s5 + $0x88] sm:$0xf]
      %v2113 = vld [vmem:[%s5 + $0x8c] sm:$0xf]
      %v2114 = vld [vmem:[%s5 + $0x90] sm:$0xf]
      %v2115 = vld [vmem:[%s5 + $0x94] sm:$0xf]
      %v2116 = vld [vmem:[%s5 + $0x98] sm:$0xf]
      %v2117 = vld [vmem:[%s5 + $0x9c] sm:$0xf]
      %v2118 = vld [vmem:[%s5 + $0xa0] sm:$0xf]
      %v2119 = vld [vmem:[%s5 + $0xa4] sm:$0xf]
      %v2120 = vld [vmem:[%s5 + $0xa8] sm:$0xf]
      %v2121 = vld [vmem:[%s5 + $0xac] sm:$0xf]
      %v2122 = vld [vmem:[%s5 + $0xb0] sm:$0xf]
      %v2123 = vld [vmem:[%s5 + $0xb4] sm:$0xf]
      %v2124 = vld [vmem:[%s5 + $0xb8] sm:$0xf]
      %v2125 = vld [vmem:[%s5 + $0xbc] sm:$0xf]
      %v2126 = vld [vmem:[%s5 + $0xc0] sm:$0xf]
      %v2127 = vld [vmem:[%s5 + $0xc4] sm:$0xf]
      %v2128 = vld [vmem:[%s5 + $0xc8] sm:$0xf]
      %v2129 = vld [vmem:[%s5 + $0xcc] sm:$0xf]
      %v2130 = vld [vmem:[%s5 + $0xd0] sm:$0xf]
      %v2131 = vld [vmem:[%s5 + $0xd4] sm:$0xf]
      %v2132 = vld [vmem:[%s5 + $0xd8] sm:$0xf]
      %v2133 = vld [vmem:[%s5 + $0xdc] sm:$0xf]
      %v2134 = vld [vmem:[%s5 + $0xe0] sm:$0xf]
      %v2135 = vld [vmem:[%s5 + $0xe4] sm:$0xf]
      %v2136 = vld [vmem:[%s5 + $0xe8] sm:$0xf]
      %v2137 = vld [vmem:[%s5 + $0xec] sm:$0xf]
      %v2138 = vld [vmem:[%s5 + $0xf0] sm:$0xf]
      %v2139 = vld [vmem:[%s5 + $0xf4] sm:$0xf]
      %v2140 = vld [vmem:[%s5 + $0xf8] sm:$0xf]
      %v2141 = vld [vmem:[%s5 + $0xfc] sm:$0xf]
      %v2142 = vld [vmem:[%s6] sm:$0x1]
      %v2144 = vlaneseq
      %v2145 = vshrl.u32 %v2144, 7
      %v2146 = vsub.s32 0, %v2145
      %v2147 = vrot.slane %v2142, %v2146
      %v2213 = vunpack.c.l.b16 %v2078
      %v2214 = vunpack.c.l.b16 %v2079
      %v2215 = vunpack.c.l.b16 %v2080
      %v2216 = vunpack.c.l.b16 %v2081
      %v2217 = vunpack.c.l.b16 %v2082
      %v2218 = vunpack.c.l.b16 %v2083
      %v2219 = vunpack.c.l.b16 %v2084
      %v2220 = vunpack.c.l.b16 %v2085
      %v2221 = vunpack.c.l.b16 %v2086
      %v2222 = vunpack.c.l.b16 %v2087
      %v2223 = vunpack.c.l.b16 %v2088
      %v2224 = vunpack.c.l.b16 %v2089
      %v2225 = vunpack.c.l.b16 %v2090
      %v2226 = vunpack.c.l.b16 %v2091
      %v2227 = vunpack.c.l.b16 %v2092
      %v2228 = vunpack.c.l.b16 %v2093
      %v2229 = vunpack.c.l.b16 %v2094
      %v2230 = vunpack.c.l.b16 %v2095
      %v2231 = vunpack.c.l.b16 %v2096
      %v2232 = vunpack.c.l.b16 %v2097
      %v2233 = vunpack.c.l.b16 %v2098
      %v2234 = vunpack.c.l.b16 %v2099
      %v2235 = vunpack.c.l.b16 %v2100
      %v2236 = vunpack.c.l.b16 %v2101
      %v2237 = vunpack.c.l.b16 %v2102
      %v2238 = vunpack.c.l.b16 %v2103
      %v2239 = vunpack.c.l.b16 %v2104
      %v2240 = vunpack.c.l.b16 %v2105
      %v2241 = vunpack.c.l.b16 %v2106
      %v2242 = vunpack.c.l.b16 %v2107
      %v2243 = vunpack.c.l.b16 %v2108
      %v2244 = vunpack.c.l.b16 %v2109
      %v2245 = vunpack.c.l.b16 %v2110
      %v2246 = vunpack.c.l.b16 %v2111
      %v2247 = vunpack.c.l.b16 %v2112
      %v2248 = vunpack.c.l.b16 %v2113
      %v2249 = vunpack.c.l.b16 %v2114
      %v2250 = vunpack.c.l.b16 %v2115
      %v2251 = vunpack.c.l.b16 %v2116
      %v2252 = vunpack.c.l.b16 %v2117
      %v2253 = vunpack.c.l.b16 %v2118
      %v2254 = vunpack.c.l.b16 %v2119
      %v2255 = vunpack.c.l.b16 %v2120
      %v2256 = vunpack.c.l.b16 %v2121
      %v2257 = vunpack.c.l.b16 %v2122
      %v2258 = vunpack.c.l.b16 %v2123
      %v2259 = vunpack.c.l.b16 %v2124
      %v2260 = vunpack.c.l.b16 %v2125
      %v2261 = vunpack.c.l.b16 %v2126
      %v2262 = vunpack.c.l.b16 %v2127
      %v2263 = vunpack.c.l.b16 %v2128
      %v2264 = vunpack.c.l.b16 %v2129
      %v2265 = vunpack.c.l.b16 %v2130
      %v2266 = vunpack.c.l.b16 %v2131
      %v2267 = vunpack.c.l.b16 %v2132
      %v2268 = vunpack.c.l.b16 %v2133
      %v2269 = vunpack.c.l.b16 %v2134
      %v2270 = vunpack.c.l.b16 %v2135
      %v2271 = vunpack.c.l.b16 %v2136
      %v2272 = vunpack.c.l.b16 %v2137
      %v2273 = vunpack.c.l.b16 %v2138
      %v2274 = vunpack.c.l.b16 %v2139
      %v2275 = vunpack.c.l.b16 %v2140
      %v2276 = vunpack.c.l.b16 %v2141
      %v2277 = vpack.c.b16 %v2214, %v2213
      %v2278 = vpack.c.b16 %v2216, %v2215
      %v2279 = vpack.c.b16 %v2218, %v2217
      %v2280 = vpack.c.b16 %v2220, %v2219
      %v2281 = vpack.c.b16 %v2222, %v2221
      %v2282 = vpack.c.b16 %v2224, %v2223
      %v2283 = vpack.c.b16 %v2226, %v2225
      %v2284 = vpack.c.b16 %v2228, %v2227
      %v2285 = vpack.c.b16 %v2230, %v2229
      %v2286 = vpack.c.b16 %v2232, %v2231
      %v2287 = vpack.c.b16 %v2234, %v2233
      %v2288 = vpack.c.b16 %v2236, %v2235
      %v2289 = vpack.c.b16 %v2238, %v2237
      %v2290 = vpack.c.b16 %v2240, %v2239
      %v2291 = vpack.c.b16 %v2242, %v2241
      %v2292 = vpack.c.b16 %v2244, %v2243
      %v2293 = vpack.c.b16 %v2246, %v2245
      %v2294 = vpack.c.b16 %v2248, %v2247
      %v2295 = vpack.c.b16 %v2250, %v2249
      %v2296 = vpack.c.b16 %v2252, %v2251
      %v2297 = vpack.c.b16 %v2254, %v2253
      %v2298 = vpack.c.b16 %v2256, %v2255
      %v2299 = vpack.c.b16 %v2258, %v2257
      %v2300 = vpack.c.b16 %v2260, %v2259
      %v2301 = vpack.c.b16 %v2262, %v2261
      %v2302 = vpack.c.b16 %v2264, %v2263
      %v2303 = vpack.c.b16 %v2266, %v2265
      %v2304 = vpack.c.b16 %v2268, %v2267
      %v2305 = vpack.c.b16 %v2270, %v2269
      %v2306 = vpack.c.b16 %v2272, %v2271
      %v2307 = vpack.c.b16 %v2274, %v2273
      %v2308 = vpack.c.b16 %v2276, %v2275
      %2341 = vmatprep.subr.bf16.mxu0 0
      %2342 = vmatpush1.bf16.msra.mxu0 %v2284
      %2343 = vmatprep.subr.bf16.mxu0 0
      %2344 = vmatpush1.bf16.msra.mxu0 %v2283
      %2345 = vmatprep.subr.bf16.mxu0 0
      %2346 = vmatpush1.bf16.msra.mxu0 %v2282
      %2347 = vmatprep.subr.bf16.mxu0 0
      %2348 = vmatpush1.bf16.msra.mxu0 %v2281
      %2349 = vmatprep.subr.bf16.mxu0 0
      %2350 = vmatpush1.bf16.msra.mxu0 %v2280
      %2351 = vmatprep.subr.bf16.mxu0 0
      %2352 = vmatpush1.bf16.msra.mxu0 %v2279
      %2353 = vmatprep.subr.bf16.mxu0 0
      %2354 = vmatpush1.bf16.msra.mxu0 %v2278
      %2355 = vmatprep.subr.bf16.mxu0 0
      %2356 = vmatpush1.bf16.msra.mxu0 %v2277
      %2357 = vmatprep.subr.bf16.mxu0 0
      %2358 = vmatpush2.bf16.msra.mxu0 %v2292
      %2359 = vmatprep.subr.bf16.mxu0 0
      %2360 = vmatpush2.bf16.msra.mxu0 %v2291
      %2361 = vmatprep.subr.bf16.mxu0 0
      %2362 = vmatpush2.bf16.msra.mxu0 %v2290
      %2363 = vmatprep.subr.bf16.mxu0 0
      %2364 = vmatpush2.bf16.msra.mxu0 %v2289
      %2365 = vmatprep.subr.bf16.mxu0 0
      %2366 = vmatpush2.bf16.msra.mxu0 %v2288
      %2367 = vmatprep.subr.bf16.mxu0 0
      %2368 = vmatpush2.bf16.msra.mxu0 %v2287
      %2369 = vmatprep.subr.bf16.mxu0 0
      %2370 = vmatpush2.bf16.msra.mxu0 %v2286
      %2371 = vmatprep.subr.bf16.mxu0 0
      %2372 = vmatpush2.bf16.msra.mxu0 %v2285
      %2373 = vmatprep.mubr.bf16.mxu0 %v1932
      %2374 = vmatmul.mubr.bf16.gmra.mxu0 %v1860
      %v2375 = vpop.f32.mrf.mxu0
      %v2376 = vadd.f32 %v2147, %v2375
      %v2377 = vpop.f32.mrf.mxu0
      %v2378 = vpop.f32.mrf.mxu0
      %v2379 = vadd.f32 %v2147, %v2378
      %v2380 = vpop.f32.mrf.mxu0
      %2381 = vmatprep.mubr.bf16.mxu0 %v1933
      %2382 = vmatmul.mubr.bf16.gmra.mxu0 %v1861
      %v2383 = vpop.f32.mrf.mxu0
      %v2384 = vadd.f32 %v2147, %v2383
      %v2385 = vpop.f32.mrf.mxu0
      %v2386 = vpop.f32.mrf.mxu0
      %v2387 = vadd.f32 %v2147, %v2386
      %v2388 = vpop.f32.mrf.mxu0
      %2389 = vdwg.mxu0
      %2390 = vmatprep.subr.bf16.mxu0 0
      %2391 = vmatpush1.bf16.msra.mxu0 %v2300
      %2392 = vmatprep.subr.bf16.mxu0 0
      %2393 = vmatpush1.bf16.msra.mxu0 %v2299
      %2394 = vmatprep.subr.bf16.mxu0 0
      %2395 = vmatpush1.bf16.msra.mxu0 %v2298
      %2396 = vmatprep.subr.bf16.mxu0 0
      %2397 = vmatpush1.bf16.msra.mxu0 %v2297
      %2398 = vmatprep.subr.bf16.mxu0 0
      %2399 = vmatpush1.bf16.msra.mxu0 %v2296
      %2400 = vmatprep.subr.bf16.mxu0 0
      %2401 = vmatpush1.bf16.msra.mxu0 %v2295
      %2402 = vmatprep.subr.bf16.mxu0 0
      %2403 = vmatpush1.bf16.msra.mxu0 %v2294
      %2404 = vmatprep.subr.bf16.mxu0 0
      %2405 = vmatpush1.bf16.msra.mxu0 %v2293
      %2406 = vmatprep.subr.bf16.mxu0 0
      %2407 = vmatpush2.bf16.msra.mxu0 %v2308
      %2408 = vmatprep.subr.bf16.mxu0 0
      %2409 = vmatpush2.bf16.msra.mxu0 %v2307
      %2410 = vmatprep.subr.bf16.mxu0 0
      %2411 = vmatpush2.bf16.msra.mxu0 %v2306
      %2412 = vmatprep.subr.bf16.mxu0 0
      %2413 = vmatpush2.bf16.msra.mxu0 %v2305
      %2414 = vmatprep.subr.bf16.mxu0 0
      %2415 = vmatpush2.bf16.msra.mxu0 %v2304
      %2416 = vmatprep.subr.bf16.mxu0 0
      %2417 = vmatpush2.bf16.msra.mxu0 %v2303
      %2418 = vmatprep.subr.bf16.mxu0 0
      %2419 = vmatpush2.bf16.msra.mxu0 %v2302
      %2420 = vmatprep.subr.bf16.mxu0 0
      %2421 = vmatpush2.bf16.msra.mxu0 %v2301
      %2422 = vmatprep.mubr.bf16.mxu0 %v2076
      %2423 = vmatmul.mubr.bf16.gmra.mxu0 %v2004
      %v2424 = vpop.f32.mrf.mxu0
      %v2425 = vadd.f32 %v2376, %v2424
      %v2426 = vpop.f32.mrf.mxu0
      %v2427 = vpop.f32.mrf.mxu0
      %v2428 = vadd.f32 %v2379, %v2427
      %v2429 = vpop.f32.mrf.mxu0
      %2430 = vmatprep.mubr.bf16.mxu0 %v2077
      %2431 = vmatmul.mubr.bf16.gmra.mxu0 %v2005
      %v2432 = vpop.f32.mrf.mxu0
      %v2433 = vadd.f32 %v2384, %v2432
      %v2434 = vpop.f32.mrf.mxu0
      %v2435 = vpop.f32.mrf.mxu0
      %v2436 = vadd.f32 %v2387, %v2435
      %v2437 = vpop.f32.mrf.mxu0
      %2438 = vdwg.mxu0
      %v2439 = vmul.f32 %v2425, 0.2
      %v2440 = vmul.f32 %v2428, 0.2
      %v2441 = vmul.f32 %v2433, 0.2
      %v2442 = vmul.f32 %v2436, 0.2
      %v2443 = vmax.f32 %v2425, %v2439
      %v2444 = vmax.f32 %v2428, %v2440
      %v2445 = vmax.f32 %v2433, %v2441
      %v2446 = vmax.f32 %v2436, %v2442
      %v2447 = vpack.c.bf16 %v2444, %v2443
      %v2448 = vpack.c.bf16 %v2446, %v2445
      %v2449 = vld [vmem:[%s7] sm:$0xf]
      %v2450 = vld [vmem:[%s7 + $0x4] sm:$0xf]
      %v2453 = vunpack.c.l.b16 %v2449
      %v2454 = vunpack.c.l.b16 %v2450
      %v2455 = vpack.c.b16 %v2454, %v2453
      %vm2456 = vcmask 261120
      %v2458 = vsel %vm2456, %v2455, 0
      %2460 = vmatprep.subr.bf16.mxu0 0
      %2461 = vmatpush1.bf16.msra.mxu0 0
      %2462 = vmatprep.subr.bf16.mxu0 0
      %2463 = vmatpush1.bf16.msra.mxu0 0
      %2464 = vmatprep.subr.bf16.mxu0 0
      %2465 = vmatpush1.bf16.msra.mxu0 0
      %2466 = vmatprep.subr.bf16.mxu0 0
      %2467 = vmatpush1.bf16.msra.mxu0 0
      %2468 = vmatprep.subr.bf16.mxu0 0
      %2469 = vmatpush1.bf16.msra.mxu0 0
      %2470 = vmatprep.subr.bf16.mxu0 0
      %2471 = vmatpush1.bf16.msra.mxu0 0
      %2472 = vmatprep.subr.bf16.mxu0 0
      %2473 = vmatpush1.bf16.msra.mxu0 %v2448
      %2474 = vmatprep.subr.bf16.mxu0 0
      %2475 = vmatpush1.bf16.msra.mxu0 %v2447
      %2476 = vmatprep.subr.bf16.mxu0 0
      %2477 = vmatpush2.bf16.msra.mxu0 0
      %2478 = vmatprep.subr.bf16.mxu0 0
      %2479 = vmatpush2.bf16.msra.mxu0 0
      %2480 = vmatprep.subr.bf16.mxu0 0
      %2481 = vmatpush2.bf16.msra.mxu0 0
      %2482 = vmatprep.subr.bf16.mxu0 0
      %2483 = vmatpush2.bf16.msra.mxu0 0
      %2484 = vmatprep.subr.bf16.mxu0 0
      %2485 = vmatpush2.bf16.msra.mxu0 0
      %2486 = vmatprep.subr.bf16.mxu0 0
      %2487 = vmatpush2.bf16.msra.mxu0 0
      %2488 = vmatprep.subr.bf16.mxu0 0
      %2489 = vmatpush2.bf16.msra.mxu0 0
      %2490 = vmatprep.subr.bf16.mxu0 0
      %2491 = vmatpush2.bf16.msra.mxu0 0
      %2492 = vmatprep.mubr.bf16.mxu0 0
      %2493 = vmatmul.mubr.bf16.gmra.mxu0 %v2458
      %v2494 = vpop.f32.mrf.mxu0
      %v2495 = vadd.f32 0.0, %v2494
      %v2496 = vpop.f32.mrf.mxu0
      %v2497 = vpop.f32.mrf.mxu0
      %v2498 = vadd.f32 0.0, %v2497
      %v2499 = vpop.f32.mrf.mxu0
      %2500 = vdwg.mxu0
      %v2501 = vpack.c.bf16 %v2498, %v2495
      %s2502 = scalar_lea.vmem %s7, 8
      %v2503 = vld [vmem:[%s2502] sm:$0xf]
      %v2504 = vld [vmem:[%s2502 + $0x4] sm:$0xf]
      %v2507 = vunpack.c.l.b16 %v2503
      %v2508 = vunpack.c.l.b16 %v2504
      %v2509 = vpack.c.b16 %v2508, %v2507
      %v2511 = vsel %vm2456, %v2509, 0
      %2513 = vmatprep.subr.bf16.mxu0 0
      %2514 = vmatpush1.bf16.msra.mxu0 0
      %2515 = vmatprep.subr.bf16.mxu0 0
      %2516 = vmatpush1.bf16.msra.mxu0 0
      %2517 = vmatprep.subr.bf16.mxu0 0
      %2518 = vmatpush1.bf16.msra.mxu0 0
      %2519 = vmatprep.subr.bf16.mxu0 0
      %2520 = vmatpush1.bf16.msra.mxu0 0
      %2521 = vmatprep.subr.bf16.mxu0 0
      %2522 = vmatpush1.bf16.msra.mxu0 0
      %2523 = vmatprep.subr.bf16.mxu0 0
      %2524 = vmatpush1.bf16.msra.mxu0 0
      %2525 = vmatprep.subr.bf16.mxu0 0
      %2526 = vmatpush1.bf16.msra.mxu0 %v2448
      %2527 = vmatprep.subr.bf16.mxu0 0
      %2528 = vmatpush1.bf16.msra.mxu0 %v2447
      %2529 = vmatprep.subr.bf16.mxu0 0
      %2530 = vmatpush2.bf16.msra.mxu0 0
      %2531 = vmatprep.subr.bf16.mxu0 0
      %2532 = vmatpush2.bf16.msra.mxu0 0
      %2533 = vmatprep.subr.bf16.mxu0 0
      %2534 = vmatpush2.bf16.msra.mxu0 0
      %2535 = vmatprep.subr.bf16.mxu0 0
      %2536 = vmatpush2.bf16.msra.mxu0 0
      %2537 = vmatprep.subr.bf16.mxu0 0
      %2538 = vmatpush2.bf16.msra.mxu0 0
      %2539 = vmatprep.subr.bf16.mxu0 0
      %2540 = vmatpush2.bf16.msra.mxu0 0
      %2541 = vmatprep.subr.bf16.mxu0 0
      %2542 = vmatpush2.bf16.msra.mxu0 0
      %2543 = vmatprep.subr.bf16.mxu0 0
      %2544 = vmatpush2.bf16.msra.mxu0 0
      %2545 = vmatprep.mubr.bf16.mxu0 0
      %2546 = vmatmul.mubr.bf16.gmra.mxu0 %v2511
      %v2547 = vpop.f32.mrf.mxu0
      %v2548 = vadd.f32 0.0, %v2547
      %v2549 = vpop.f32.mrf.mxu0
      %v2550 = vpop.f32.mrf.mxu0
      %v2551 = vadd.f32 0.0, %v2550
      %v2552 = vpop.f32.mrf.mxu0
      %2553 = vdwg.mxu0
      %v2554 = vpack.c.bf16 %v2551, %v2548
      %s2555 = scalar_lea.vmem %s7, 16
      %v2556 = vld [vmem:[%s2555] sm:$0xf]
      %v2557 = vld [vmem:[%s2555 + $0x4] sm:$0xf]
      %v2560 = vunpack.c.l.b16 %v2556
      %v2561 = vunpack.c.l.b16 %v2557
      %v2562 = vpack.c.b16 %v2561, %v2560
      %v2564 = vsel %vm2456, %v2562, 0
      %2566 = vmatprep.subr.bf16.mxu0 0
      %2567 = vmatpush1.bf16.msra.mxu0 0
      %2568 = vmatprep.subr.bf16.mxu0 0
      %2569 = vmatpush1.bf16.msra.mxu0 0
      %2570 = vmatprep.subr.bf16.mxu0 0
      %2571 = vmatpush1.bf16.msra.mxu0 0
      %2572 = vmatprep.subr.bf16.mxu0 0
      %2573 = vmatpush1.bf16.msra.mxu0 0
      %2574 = vmatprep.subr.bf16.mxu0 0
      %2575 = vmatpush1.bf16.msra.mxu0 0
      %2576 = vmatprep.subr.bf16.mxu0 0
      %2577 = vmatpush1.bf16.msra.mxu0 0
      %2578 = vmatprep.subr.bf16.mxu0 0
      %2579 = vmatpush1.bf16.msra.mxu0 %v2448
      %2580 = vmatprep.subr.bf16.mxu0 0
      %2581 = vmatpush1.bf16.msra.mxu0 %v2447
      %2582 = vmatprep.subr.bf16.mxu0 0
      %2583 = vmatpush2.bf16.msra.mxu0 0
      %2584 = vmatprep.subr.bf16.mxu0 0
      %2585 = vmatpush2.bf16.msra.mxu0 0
      %2586 = vmatprep.subr.bf16.mxu0 0
      %2587 = vmatpush2.bf16.msra.mxu0 0
      %2588 = vmatprep.subr.bf16.mxu0 0
      %2589 = vmatpush2.bf16.msra.mxu0 0
      %2590 = vmatprep.subr.bf16.mxu0 0
      %2591 = vmatpush2.bf16.msra.mxu0 0
      %2592 = vmatprep.subr.bf16.mxu0 0
      %2593 = vmatpush2.bf16.msra.mxu0 0
      %2594 = vmatprep.subr.bf16.mxu0 0
      %2595 = vmatpush2.bf16.msra.mxu0 0
      %2596 = vmatprep.subr.bf16.mxu0 0
      %2597 = vmatpush2.bf16.msra.mxu0 0
      %2598 = vmatprep.mubr.bf16.mxu0 0
      %2599 = vmatmul.mubr.bf16.gmra.mxu0 %v2564
      %v2600 = vpop.f32.mrf.mxu0
      %v2601 = vadd.f32 0.0, %v2600
      %v2602 = vpop.f32.mrf.mxu0
      %v2603 = vpop.f32.mrf.mxu0
      %v2604 = vadd.f32 0.0, %v2603
      %v2605 = vpop.f32.mrf.mxu0
      %2606 = vdwg.mxu0
      %v2607 = vpack.c.bf16 %v2604, %v2601
      %s2608 = scalar_lea.vmem %s7, 24
      %v2609 = vld [vmem:[%s2608] sm:$0xf]
      %v2610 = vld [vmem:[%s2608 + $0x4] sm:$0xf]
      %v2613 = vunpack.c.l.b16 %v2609
      %v2614 = vunpack.c.l.b16 %v2610
      %v2615 = vpack.c.b16 %v2614, %v2613
      %v2617 = vsel %vm2456, %v2615, 0
      %2619 = vmatprep.subr.bf16.mxu0 0
      %2620 = vmatpush1.bf16.msra.mxu0 0
      %2621 = vmatprep.subr.bf16.mxu0 0
      %2622 = vmatpush1.bf16.msra.mxu0 0
      %2623 = vmatprep.subr.bf16.mxu0 0
      %2624 = vmatpush1.bf16.msra.mxu0 0
      %2625 = vmatprep.subr.bf16.mxu0 0
      %2626 = vmatpush1.bf16.msra.mxu0 0
      %2627 = vmatprep.subr.bf16.mxu0 0
      %2628 = vmatpush1.bf16.msra.mxu0 0
      %2629 = vmatprep.subr.bf16.mxu0 0
      %2630 = vmatpush1.bf16.msra.mxu0 0
      %2631 = vmatprep.subr.bf16.mxu0 0
      %2632 = vmatpush1.bf16.msra.mxu0 %v2448
      %2633 = vmatprep.subr.bf16.mxu0 0
      %2634 = vmatpush1.bf16.msra.mxu0 %v2447
      %2635 = vmatprep.subr.bf16.mxu0 0
      %2636 = vmatpush2.bf16.msra.mxu0 0
      %2637 = vmatprep.subr.bf16.mxu0 0
      %2638 = vmatpush2.bf16.msra.mxu0 0
      %2639 = vmatprep.subr.bf16.mxu0 0
      %2640 = vmatpush2.bf16.msra.mxu0 0
      %2641 = vmatprep.subr.bf16.mxu0 0
      %2642 = vmatpush2.bf16.msra.mxu0 0
      %2643 = vmatprep.subr.bf16.mxu0 0
      %2644 = vmatpush2.bf16.msra.mxu0 0
      %2645 = vmatprep.subr.bf16.mxu0 0
      %2646 = vmatpush2.bf16.msra.mxu0 0
      %2647 = vmatprep.subr.bf16.mxu0 0
      %2648 = vmatpush2.bf16.msra.mxu0 0
      %2649 = vmatprep.subr.bf16.mxu0 0
      %2650 = vmatpush2.bf16.msra.mxu0 0
      %2651 = vmatprep.mubr.bf16.mxu0 0
      %2652 = vmatmul.mubr.bf16.gmra.mxu0 %v2617
      %v2653 = vpop.f32.mrf.mxu0
      %v2654 = vadd.f32 0.0, %v2653
      %v2655 = vpop.f32.mrf.mxu0
      %v2656 = vpop.f32.mrf.mxu0
      %v2657 = vadd.f32 0.0, %v2656
      %v2658 = vpop.f32.mrf.mxu0
      %2659 = vdwg.mxu0
      %v2660 = vpack.c.bf16 %v2657, %v2654
      %v2661 = vld [vmem:[%s8] sm:$0xf]
      %v2662 = vld [vmem:[%s8 + $0x4] sm:$0xf]
      %v2663 = vld [vmem:[%s8 + $0x8] sm:$0xf]
      %v2664 = vld [vmem:[%s8 + $0xc] sm:$0xf]
      %v2665 = vld [vmem:[%s8 + $0x10] sm:$0xf]
      %v2666 = vld [vmem:[%s8 + $0x14] sm:$0xf]
      %v2667 = vld [vmem:[%s8 + $0x18] sm:$0xf]
      %v2668 = vld [vmem:[%s8 + $0x1c] sm:$0xf]
      %v2669 = vld [vmem:[%s8 + $0x20] sm:$0xf]
      %v2670 = vld [vmem:[%s8 + $0x24] sm:$0xf]
      %v2671 = vld [vmem:[%s8 + $0x28] sm:$0xf]
      %v2672 = vld [vmem:[%s8 + $0x2c] sm:$0xf]
      %v2673 = vld [vmem:[%s8 + $0x30] sm:$0xf]
      %v2674 = vld [vmem:[%s8 + $0x34] sm:$0xf]
      %v2675 = vld [vmem:[%s8 + $0x38] sm:$0xf]
      %v2676 = vld [vmem:[%s8 + $0x3c] sm:$0xf]
      %v2677 = vld [vmem:[%s8 + $0x40] sm:$0xf]
      %v2678 = vld [vmem:[%s8 + $0x44] sm:$0xf]
      %v2679 = vld [vmem:[%s8 + $0x48] sm:$0xf]
      %v2680 = vld [vmem:[%s8 + $0x4c] sm:$0xf]
      %v2681 = vld [vmem:[%s8 + $0x50] sm:$0xf]
      %v2682 = vld [vmem:[%s8 + $0x54] sm:$0xf]
      %v2683 = vld [vmem:[%s8 + $0x58] sm:$0xf]
      %v2684 = vld [vmem:[%s8 + $0x5c] sm:$0xf]
      %v2685 = vld [vmem:[%s8 + $0x60] sm:$0xf]
      %v2686 = vld [vmem:[%s8 + $0x64] sm:$0xf]
      %v2687 = vld [vmem:[%s8 + $0x68] sm:$0xf]
      %v2688 = vld [vmem:[%s8 + $0x6c] sm:$0xf]
      %v2689 = vld [vmem:[%s8 + $0x70] sm:$0xf]
      %v2690 = vld [vmem:[%s8 + $0x74] sm:$0xf]
      %v2691 = vld [vmem:[%s8 + $0x78] sm:$0xf]
      %v2692 = vld [vmem:[%s8 + $0x7c] sm:$0xf]
      %v2693 = vld [vmem:[%s8 + $0x80] sm:$0xf]
      %v2694 = vld [vmem:[%s8 + $0x84] sm:$0xf]
      %v2695 = vld [vmem:[%s8 + $0x88] sm:$0xf]
      %v2696 = vld [vmem:[%s8 + $0x8c] sm:$0xf]
      %v2697 = vld [vmem:[%s8 + $0x90] sm:$0xf]
      %v2698 = vld [vmem:[%s8 + $0x94] sm:$0xf]
      %v2699 = vld [vmem:[%s8 + $0x98] sm:$0xf]
      %v2700 = vld [vmem:[%s8 + $0x9c] sm:$0xf]
      %v2701 = vld [vmem:[%s8 + $0xa0] sm:$0xf]
      %v2702 = vld [vmem:[%s8 + $0xa4] sm:$0xf]
      %v2703 = vld [vmem:[%s8 + $0xa8] sm:$0xf]
      %v2704 = vld [vmem:[%s8 + $0xac] sm:$0xf]
      %v2705 = vld [vmem:[%s8 + $0xb0] sm:$0xf]
      %v2706 = vld [vmem:[%s8 + $0xb4] sm:$0xf]
      %v2707 = vld [vmem:[%s8 + $0xb8] sm:$0xf]
      %v2708 = vld [vmem:[%s8 + $0xbc] sm:$0xf]
      %v2709 = vld [vmem:[%s8 + $0xc0] sm:$0xf]
      %v2710 = vld [vmem:[%s8 + $0xc4] sm:$0xf]
      %v2711 = vld [vmem:[%s8 + $0xc8] sm:$0xf]
      %v2712 = vld [vmem:[%s8 + $0xcc] sm:$0xf]
      %v2713 = vld [vmem:[%s8 + $0xd0] sm:$0xf]
      %v2714 = vld [vmem:[%s8 + $0xd4] sm:$0xf]
      %v2715 = vld [vmem:[%s8 + $0xd8] sm:$0xf]
      %v2716 = vld [vmem:[%s8 + $0xdc] sm:$0xf]
      %v2717 = vld [vmem:[%s8 + $0xe0] sm:$0xf]
      %v2718 = vld [vmem:[%s8 + $0xe4] sm:$0xf]
      %v2719 = vld [vmem:[%s8 + $0xe8] sm:$0xf]
      %v2720 = vld [vmem:[%s8 + $0xec] sm:$0xf]
      %v2721 = vld [vmem:[%s8 + $0xf0] sm:$0xf]
      %v2722 = vld [vmem:[%s8 + $0xf4] sm:$0xf]
      %v2723 = vld [vmem:[%s8 + $0xf8] sm:$0xf]
      %v2724 = vld [vmem:[%s8 + $0xfc] sm:$0xf]
      %v2725 = vld [vmem:[%s9] sm:$0x1]
      %v2727 = vlaneseq
      %v2728 = vshrl.u32 %v2727, 7
      %v2729 = vsub.s32 0, %v2728
      %v2730 = vrot.slane %v2725, %v2729
      %v2796 = vunpack.c.l.b16 %v2661
      %v2797 = vunpack.c.l.b16 %v2662
      %v2798 = vunpack.c.l.b16 %v2663
      %v2799 = vunpack.c.l.b16 %v2664
      %v2800 = vunpack.c.l.b16 %v2665
      %v2801 = vunpack.c.l.b16 %v2666
      %v2802 = vunpack.c.l.b16 %v2667
      %v2803 = vunpack.c.l.b16 %v2668
      %v2804 = vunpack.c.l.b16 %v2669
      %v2805 = vunpack.c.l.b16 %v2670
      %v2806 = vunpack.c.l.b16 %v2671
      %v2807 = vunpack.c.l.b16 %v2672
      %v2808 = vunpack.c.l.b16 %v2673
      %v2809 = vunpack.c.l.b16 %v2674
      %v2810 = vunpack.c.l.b16 %v2675
      %v2811 = vunpack.c.l.b16 %v2676
      %v2812 = vunpack.c.l.b16 %v2677
      %v2813 = vunpack.c.l.b16 %v2678
      %v2814 = vunpack.c.l.b16 %v2679
      %v2815 = vunpack.c.l.b16 %v2680
      %v2816 = vunpack.c.l.b16 %v2681
      %v2817 = vunpack.c.l.b16 %v2682
      %v2818 = vunpack.c.l.b16 %v2683
      %v2819 = vunpack.c.l.b16 %v2684
      %v2820 = vunpack.c.l.b16 %v2685
      %v2821 = vunpack.c.l.b16 %v2686
      %v2822 = vunpack.c.l.b16 %v2687
      %v2823 = vunpack.c.l.b16 %v2688
      %v2824 = vunpack.c.l.b16 %v2689
      %v2825 = vunpack.c.l.b16 %v2690
      %v2826 = vunpack.c.l.b16 %v2691
      %v2827 = vunpack.c.l.b16 %v2692
      %v2828 = vunpack.c.l.b16 %v2693
      %v2829 = vunpack.c.l.b16 %v2694
      %v2830 = vunpack.c.l.b16 %v2695
      %v2831 = vunpack.c.l.b16 %v2696
      %v2832 = vunpack.c.l.b16 %v2697
      %v2833 = vunpack.c.l.b16 %v2698
      %v2834 = vunpack.c.l.b16 %v2699
      %v2835 = vunpack.c.l.b16 %v2700
      %v2836 = vunpack.c.l.b16 %v2701
      %v2837 = vunpack.c.l.b16 %v2702
      %v2838 = vunpack.c.l.b16 %v2703
      %v2839 = vunpack.c.l.b16 %v2704
      %v2840 = vunpack.c.l.b16 %v2705
      %v2841 = vunpack.c.l.b16 %v2706
      %v2842 = vunpack.c.l.b16 %v2707
      %v2843 = vunpack.c.l.b16 %v2708
      %v2844 = vunpack.c.l.b16 %v2709
      %v2845 = vunpack.c.l.b16 %v2710
      %v2846 = vunpack.c.l.b16 %v2711
      %v2847 = vunpack.c.l.b16 %v2712
      %v2848 = vunpack.c.l.b16 %v2713
      %v2849 = vunpack.c.l.b16 %v2714
      %v2850 = vunpack.c.l.b16 %v2715
      %v2851 = vunpack.c.l.b16 %v2716
      %v2852 = vunpack.c.l.b16 %v2717
      %v2853 = vunpack.c.l.b16 %v2718
      %v2854 = vunpack.c.l.b16 %v2719
      %v2855 = vunpack.c.l.b16 %v2720
      %v2856 = vunpack.c.l.b16 %v2721
      %v2857 = vunpack.c.l.b16 %v2722
      %v2858 = vunpack.c.l.b16 %v2723
      %v2859 = vunpack.c.l.b16 %v2724
      %v2860 = vpack.c.b16 %v2797, %v2796
      %v2861 = vpack.c.b16 %v2799, %v2798
      %v2862 = vpack.c.b16 %v2801, %v2800
      %v2863 = vpack.c.b16 %v2803, %v2802
      %v2864 = vpack.c.b16 %v2805, %v2804
      %v2865 = vpack.c.b16 %v2807, %v2806
      %v2866 = vpack.c.b16 %v2809, %v2808
      %v2867 = vpack.c.b16 %v2811, %v2810
      %v2868 = vpack.c.b16 %v2813, %v2812
      %v2869 = vpack.c.b16 %v2815, %v2814
      %v2870 = vpack.c.b16 %v2817, %v2816
      %v2871 = vpack.c.b16 %v2819, %v2818
      %v2872 = vpack.c.b16 %v2821, %v2820
      %v2873 = vpack.c.b16 %v2823, %v2822
      %v2874 = vpack.c.b16 %v2825, %v2824
      %v2875 = vpack.c.b16 %v2827, %v2826
      %v2876 = vpack.c.b16 %v2829, %v2828
      %v2877 = vpack.c.b16 %v2831, %v2830
      %v2878 = vpack.c.b16 %v2833, %v2832
      %v2879 = vpack.c.b16 %v2835, %v2834
      %v2880 = vpack.c.b16 %v2837, %v2836
      %v2881 = vpack.c.b16 %v2839, %v2838
      %v2882 = vpack.c.b16 %v2841, %v2840
      %v2883 = vpack.c.b16 %v2843, %v2842
      %v2884 = vpack.c.b16 %v2845, %v2844
      %v2885 = vpack.c.b16 %v2847, %v2846
      %v2886 = vpack.c.b16 %v2849, %v2848
      %v2887 = vpack.c.b16 %v2851, %v2850
      %v2888 = vpack.c.b16 %v2853, %v2852
      %v2889 = vpack.c.b16 %v2855, %v2854
      %v2890 = vpack.c.b16 %v2857, %v2856
      %v2891 = vpack.c.b16 %v2859, %v2858
      %2924 = vmatprep.subr.bf16.mxu0 0
      %2925 = vmatpush1.bf16.msra.mxu0 %v2867
      %2926 = vmatprep.subr.bf16.mxu0 0
      %2927 = vmatpush1.bf16.msra.mxu0 %v2866
      %2928 = vmatprep.subr.bf16.mxu0 0
      %2929 = vmatpush1.bf16.msra.mxu0 %v2865
      %2930 = vmatprep.subr.bf16.mxu0 0
      %2931 = vmatpush1.bf16.msra.mxu0 %v2864
      %2932 = vmatprep.subr.bf16.mxu0 0
      %2933 = vmatpush1.bf16.msra.mxu0 %v2863
      %2934 = vmatprep.subr.bf16.mxu0 0
      %2935 = vmatpush1.bf16.msra.mxu0 %v2862
      %2936 = vmatprep.subr.bf16.mxu0 0
      %2937 = vmatpush1.bf16.msra.mxu0 %v2861
      %2938 = vmatprep.subr.bf16.mxu0 0
      %2939 = vmatpush1.bf16.msra.mxu0 %v2860
      %2940 = vmatprep.subr.bf16.mxu0 0
      %2941 = vmatpush2.bf16.msra.mxu0 %v2875
      %2942 = vmatprep.subr.bf16.mxu0 0
      %2943 = vmatpush2.bf16.msra.mxu0 %v2874
      %2944 = vmatprep.subr.bf16.mxu0 0
      %2945 = vmatpush2.bf16.msra.mxu0 %v2873
      %2946 = vmatprep.subr.bf16.mxu0 0
      %2947 = vmatpush2.bf16.msra.mxu0 %v2872
      %2948 = vmatprep.subr.bf16.mxu0 0
      %2949 = vmatpush2.bf16.msra.mxu0 %v2871
      %2950 = vmatprep.subr.bf16.mxu0 0
      %2951 = vmatpush2.bf16.msra.mxu0 %v2870
      %2952 = vmatprep.subr.bf16.mxu0 0
      %2953 = vmatpush2.bf16.msra.mxu0 %v2869
      %2954 = vmatprep.subr.bf16.mxu0 0
      %2955 = vmatpush2.bf16.msra.mxu0 %v2868
      %2956 = vmatprep.mubr.bf16.mxu0 %v2554
      %2957 = vmatmul.mubr.bf16.gmra.mxu0 %v2501
      %v2958 = vpop.f32.mrf.mxu0
      %v2959 = vadd.f32 %v2730, %v2958
      %v2960 = vpop.f32.mrf.mxu0
      %v2961 = vpop.f32.mrf.mxu0
      %v2962 = vadd.f32 %v2730, %v2961
      %v2963 = vpop.f32.mrf.mxu0
      %2964 = vdwg.mxu0
      %2965 = vmatprep.subr.bf16.mxu0 0
      %2966 = vmatpush1.bf16.msra.mxu0 %v2883
      %2967 = vmatprep.subr.bf16.mxu0 0
      %2968 = vmatpush1.bf16.msra.mxu0 %v2882
      %2969 = vmatprep.subr.bf16.mxu0 0
      %2970 = vmatpush1.bf16.msra.mxu0 %v2881
      %2971 = vmatprep.subr.bf16.mxu0 0
      %2972 = vmatpush1.bf16.msra.mxu0 %v2880
      %2973 = vmatprep.subr.bf16.mxu0 0
      %2974 = vmatpush1.bf16.msra.mxu0 %v2879
      %2975 = vmatprep.subr.bf16.mxu0 0
      %2976 = vmatpush1.bf16.msra.mxu0 %v2878
      %2977 = vmatprep.subr.bf16.mxu0 0
      %2978 = vmatpush1.bf16.msra.mxu0 %v2877
      %2979 = vmatprep.subr.bf16.mxu0 0
      %2980 = vmatpush1.bf16.msra.mxu0 %v2876
      %2981 = vmatprep.subr.bf16.mxu0 0
      %2982 = vmatpush2.bf16.msra.mxu0 %v2891
      %2983 = vmatprep.subr.bf16.mxu0 0
      %2984 = vmatpush2.bf16.msra.mxu0 %v2890
      %2985 = vmatprep.subr.bf16.mxu0 0
      %2986 = vmatpush2.bf16.msra.mxu0 %v2889
      %2987 = vmatprep.subr.bf16.mxu0 0
      %2988 = vmatpush2.bf16.msra.mxu0 %v2888
      %2989 = vmatprep.subr.bf16.mxu0 0
      %2990 = vmatpush2.bf16.msra.mxu0 %v2887
      %2991 = vmatprep.subr.bf16.mxu0 0
      %2992 = vmatpush2.bf16.msra.mxu0 %v2886
      %2993 = vmatprep.subr.bf16.mxu0 0
      %2994 = vmatpush2.bf16.msra.mxu0 %v2885
      %2995 = vmatprep.subr.bf16.mxu0 0
      %2996 = vmatpush2.bf16.msra.mxu0 %v2884
      %2997 = vmatprep.mubr.bf16.mxu0 %v2660
      %2998 = vmatmul.mubr.bf16.gmra.mxu0 %v2607
      %v2999 = vpop.f32.mrf.mxu0
      %v3000 = vadd.f32 %v2959, %v2999
      %v3001 = vpop.f32.mrf.mxu0
      %v3002 = vpop.f32.mrf.mxu0
      %v3003 = vadd.f32 %v2962, %v3002
      %v3004 = vpop.f32.mrf.mxu0
      %3005 = vdwg.mxu0
      %v3006 = vmul.f32 %v3000, 0.2
      %v3007 = vmul.f32 %v3003, 0.2
      %v3008 = vmax.f32 %v3000, %v3006
      %v3009 = vmax.f32 %v3003, %v3007
      %v3010 = vpack.c.bf16 %v3009, %v3008
      %v3011 = vld [vmem:[%s10] sm:$0xf]
      %vm3012 = vcmask 130048
      %v3014 = vsel %vm3012, %v3011, 0
      %3016 = vmatprep.subr.bf16.mxu0 0
      %3017 = vmatpush1.bf16.msra.mxu0 0
      %3018 = vmatprep.subr.bf16.mxu0 0
      %3019 = vmatpush1.bf16.msra.mxu0 0
      %3020 = vmatprep.subr.bf16.mxu0 0
      %3021 = vmatpush1.bf16.msra.mxu0 0
      %3022 = vmatprep.subr.bf16.mxu0 0
      %3023 = vmatpush1.bf16.msra.mxu0 0
      %3024 = vmatprep.subr.bf16.mxu0 0
      %3025 = vmatpush1.bf16.msra.mxu0 0
      %3026 = vmatprep.subr.bf16.mxu0 0
      %3027 = vmatpush1.bf16.msra.mxu0 0
      %3028 = vmatprep.subr.bf16.mxu0 0
      %3029 = vmatpush1.bf16.msra.mxu0 0
      %3030 = vmatprep.subr.bf16.mxu0 0
      %3031 = vmatpush1.bf16.msra.mxu0 %v3010
      %3032 = vmatprep.subr.bf16.mxu0 0
      %3033 = vmatpush2.bf16.msra.mxu0 0
      %3034 = vmatprep.subr.bf16.mxu0 0
      %3035 = vmatpush2.bf16.msra.mxu0 0
      %3036 = vmatprep.subr.bf16.mxu0 0
      %3037 = vmatpush2.bf16.msra.mxu0 0
      %3038 = vmatprep.subr.bf16.mxu0 0
      %3039 = vmatpush2.bf16.msra.mxu0 0
      %3040 = vmatprep.subr.bf16.mxu0 0
      %3041 = vmatpush2.bf16.msra.mxu0 0
      %3042 = vmatprep.subr.bf16.mxu0 0
      %3043 = vmatpush2.bf16.msra.mxu0 0
      %3044 = vmatprep.subr.bf16.mxu0 0
      %3045 = vmatpush2.bf16.msra.mxu0 0
      %3046 = vmatprep.subr.bf16.mxu0 0
      %3047 = vmatpush2.bf16.msra.mxu0 0
      %3048 = vmatprep.mubr.bf16.mxu0 0
      %3049 = vmatmul.mubr.bf16.gmra.mxu0 %v3014
      %v3050 = vpop.f32.mrf.mxu0
      %v3051 = vadd.f32 0.0, %v3050
      %v3052 = vpop.f32.mrf.mxu0
      %v3053 = vpop.f32.mrf.mxu0
      %v3054 = vpop.f32.mrf.mxu0
      %3055 = vdwg.mxu0
      %v3056 = vpack.c.bf16 %v3051, %v3051
      %s3057 = scalar_lea.vmem %s10, 4
      %v3058 = vld [vmem:[%s3057] sm:$0xf]
      %v3060 = vsel %vm3012, %v3058, 0
      %3062 = vmatprep.subr.bf16.mxu0 0
      %3063 = vmatpush1.bf16.msra.mxu0 0
      %3064 = vmatprep.subr.bf16.mxu0 0
      %3065 = vmatpush1.bf16.msra.mxu0 0
      %3066 = vmatprep.subr.bf16.mxu0 0
      %3067 = vmatpush1.bf16.msra.mxu0 0
      %3068 = vmatprep.subr.bf16.mxu0 0
      %3069 = vmatpush1.bf16.msra.mxu0 0
      %3070 = vmatprep.subr.bf16.mxu0 0
      %3071 = vmatpush1.bf16.msra.mxu0 0
      %3072 = vmatprep.subr.bf16.mxu0 0
      %3073 = vmatpush1.bf16.msra.mxu0 0
      %3074 = vmatprep.subr.bf16.mxu0 0
      %3075 = vmatpush1.bf16.msra.mxu0 0
      %3076 = vmatprep.subr.bf16.mxu0 0
      %3077 = vmatpush1.bf16.msra.mxu0 %v3010
      %3078 = vmatprep.subr.bf16.mxu0 0
      %3079 = vmatpush2.bf16.msra.mxu0 0
      %3080 = vmatprep.subr.bf16.mxu0 0
      %3081 = vmatpush2.bf16.msra.mxu0 0
      %3082 = vmatprep.subr.bf16.mxu0 0
      %3083 = vmatpush2.bf16.msra.mxu0 0
      %3084 = vmatprep.subr.bf16.mxu0 0
      %3085 = vmatpush2.bf16.msra.mxu0 0
      %3086 = vmatprep.subr.bf16.mxu0 0
      %3087 = vmatpush2.bf16.msra.mxu0 0
      %3088 = vmatprep.subr.bf16.mxu0 0
      %3089 = vmatpush2.bf16.msra.mxu0 0
      %3090 = vmatprep.subr.bf16.mxu0 0
      %3091 = vmatpush2.bf16.msra.mxu0 0
      %3092 = vmatprep.subr.bf16.mxu0 0
      %3093 = vmatpush2.bf16.msra.mxu0 0
      %3094 = vmatprep.mubr.bf16.mxu0 0
      %3095 = vmatmul.mubr.bf16.gmra.mxu0 %v3060
      %v3096 = vpop.f32.mrf.mxu0
      %v3097 = vadd.f32 0.0, %v3096
      %v3098 = vpop.f32.mrf.mxu0
      %v3099 = vpop.f32.mrf.mxu0
      %v3100 = vpop.f32.mrf.mxu0
      %3101 = vdwg.mxu0
      %v3102 = vpack.c.bf16 %v3097, %v3097
      %s3103 = scalar_lea.vmem %s10, 8
      %v3104 = vld [vmem:[%s3103] sm:$0xf]
      %v3106 = vsel %vm3012, %v3104, 0
      %3108 = vmatprep.subr.bf16.mxu0 0
      %3109 = vmatpush1.bf16.msra.mxu0 0
      %3110 = vmatprep.subr.bf16.mxu0 0
      %3111 = vmatpush1.bf16.msra.mxu0 0
      %3112 = vmatprep.subr.bf16.mxu0 0
      %3113 = vmatpush1.bf16.msra.mxu0 0
      %3114 = vmatprep.subr.bf16.mxu0 0
      %3115 = vmatpush1.bf16.msra.mxu0 0
      %3116 = vmatprep.subr.bf16.mxu0 0
      %3117 = vmatpush1.bf16.msra.mxu0 0
      %3118 = vmatprep.subr.bf16.mxu0 0
      %3119 = vmatpush1.bf16.msra.mxu0 0
      %3120 = vmatprep.subr.bf16.mxu0 0
      %3121 = vmatpush1.bf16.msra.mxu0 0
      %3122 = vmatprep.subr.bf16.mxu0 0
      %3123 = vmatpush1.bf16.msra.mxu0 %v3010
      %3124 = vmatprep.subr.bf16.mxu0 0
      %3125 = vmatpush2.bf16.msra.mxu0 0
      %3126 = vmatprep.subr.bf16.mxu0 0
      %3127 = vmatpush2.bf16.msra.mxu0 0
      %3128 = vmatprep.subr.bf16.mxu0 0
      %3129 = vmatpush2.bf16.msra.mxu0 0
      %3130 = vmatprep.subr.bf16.mxu0 0
      %3131 = vmatpush2.bf16.msra.mxu0 0
      %3132 = vmatprep.subr.bf16.mxu0 0
      %3133 = vmatpush2.bf16.msra.mxu0 0
      %3134 = vmatprep.subr.bf16.mxu0 0
      %3135 = vmatpush2.bf16.msra.mxu0 0
      %3136 = vmatprep.subr.bf16.mxu0 0
      %3137 = vmatpush2.bf16.msra.mxu0 0
      %3138 = vmatprep.subr.bf16.mxu0 0
      %3139 = vmatpush2.bf16.msra.mxu0 0
      %3140 = vmatprep.mubr.bf16.mxu0 0
      %3141 = vmatmul.mubr.bf16.gmra.mxu0 %v3106
      %v3142 = vpop.f32.mrf.mxu0
      %v3143 = vadd.f32 0.0, %v3142
      %v3144 = vpop.f32.mrf.mxu0
      %v3145 = vpop.f32.mrf.mxu0
      %v3146 = vpop.f32.mrf.mxu0
      %3147 = vdwg.mxu0
      %v3148 = vpack.c.bf16 %v3143, %v3143
      %s3149 = scalar_lea.vmem %s10, 12
      %v3150 = vld [vmem:[%s3149] sm:$0xf]
      %v3152 = vsel %vm3012, %v3150, 0
      %3154 = vmatprep.subr.bf16.mxu0 0
      %3155 = vmatpush1.bf16.msra.mxu0 0
      %3156 = vmatprep.subr.bf16.mxu0 0
      %3157 = vmatpush1.bf16.msra.mxu0 0
      %3158 = vmatprep.subr.bf16.mxu0 0
      %3159 = vmatpush1.bf16.msra.mxu0 0
      %3160 = vmatprep.subr.bf16.mxu0 0
      %3161 = vmatpush1.bf16.msra.mxu0 0
      %3162 = vmatprep.subr.bf16.mxu0 0
      %3163 = vmatpush1.bf16.msra.mxu0 0
      %3164 = vmatprep.subr.bf16.mxu0 0
      %3165 = vmatpush1.bf16.msra.mxu0 0
      %3166 = vmatprep.subr.bf16.mxu0 0
      %3167 = vmatpush1.bf16.msra.mxu0 0
      %3168 = vmatprep.subr.bf16.mxu0 0
      %3169 = vmatpush1.bf16.msra.mxu0 %v3010
      %3170 = vmatprep.subr.bf16.mxu0 0
      %3171 = vmatpush2.bf16.msra.mxu0 0
      %3172 = vmatprep.subr.bf16.mxu0 0
      %3173 = vmatpush2.bf16.msra.mxu0 0
      %3174 = vmatprep.subr.bf16.mxu0 0
      %3175 = vmatpush2.bf16.msra.mxu0 0
      %3176 = vmatprep.subr.bf16.mxu0 0
      %3177 = vmatpush2.bf16.msra.mxu0 0
      %3178 = vmatprep.subr.bf16.mxu0 0
      %3179 = vmatpush2.bf16.msra.mxu0 0
      %3180 = vmatprep.subr.bf16.mxu0 0
      %3181 = vmatpush2.bf16.msra.mxu0 0
      %3182 = vmatprep.subr.bf16.mxu0 0
      %3183 = vmatpush2.bf16.msra.mxu0 0
      %3184 = vmatprep.subr.bf16.mxu0 0
      %3185 = vmatpush2.bf16.msra.mxu0 0
      %3186 = vmatprep.mubr.bf16.mxu0 0
      %3187 = vmatmul.mubr.bf16.gmra.mxu0 %v3152
      %v3188 = vpop.f32.mrf.mxu0
      %v3189 = vadd.f32 0.0, %v3188
      %v3190 = vpop.f32.mrf.mxu0
      %v3191 = vpop.f32.mrf.mxu0
      %v3192 = vpop.f32.mrf.mxu0
      %3193 = vdwg.mxu0
      %v3194 = vpack.c.bf16 %v3189, %v3189
      %v3195 = vld [vmem:[%s11] sm:$0xf]
      %v3196 = vld [vmem:[%s11 + $0x4] sm:$0xf]
      %v3197 = vld [vmem:[%s11 + $0x8] sm:$0xf]
      %v3198 = vld [vmem:[%s11 + $0xc] sm:$0xf]
      %v3199 = vld [vmem:[%s11 + $0x10] sm:$0xf]
      %v3200 = vld [vmem:[%s11 + $0x14] sm:$0xf]
      %v3201 = vld [vmem:[%s11 + $0x18] sm:$0xf]
      %v3202 = vld [vmem:[%s11 + $0x1c] sm:$0xf]
      %v3203 = vld [vmem:[%s11 + $0x20] sm:$0xf]
      %v3204 = vld [vmem:[%s11 + $0x24] sm:$0xf]
      %v3205 = vld [vmem:[%s11 + $0x28] sm:$0xf]
      %v3206 = vld [vmem:[%s11 + $0x2c] sm:$0xf]
      %v3207 = vld [vmem:[%s11 + $0x30] sm:$0xf]
      %v3208 = vld [vmem:[%s11 + $0x34] sm:$0xf]
      %v3209 = vld [vmem:[%s11 + $0x38] sm:$0xf]
      %v3210 = vld [vmem:[%s11 + $0x3c] sm:$0xf]
      %v3211 = vld [vmem:[%s11 + $0x40] sm:$0xf]
      %v3212 = vld [vmem:[%s11 + $0x44] sm:$0xf]
      %v3213 = vld [vmem:[%s11 + $0x48] sm:$0xf]
      %v3214 = vld [vmem:[%s11 + $0x4c] sm:$0xf]
      %v3215 = vld [vmem:[%s11 + $0x50] sm:$0xf]
      %v3216 = vld [vmem:[%s11 + $0x54] sm:$0xf]
      %v3217 = vld [vmem:[%s11 + $0x58] sm:$0xf]
      %v3218 = vld [vmem:[%s11 + $0x5c] sm:$0xf]
      %v3219 = vld [vmem:[%s11 + $0x60] sm:$0xf]
      %v3220 = vld [vmem:[%s11 + $0x64] sm:$0xf]
      %v3221 = vld [vmem:[%s11 + $0x68] sm:$0xf]
      %v3222 = vld [vmem:[%s11 + $0x6c] sm:$0xf]
      %v3223 = vld [vmem:[%s11 + $0x70] sm:$0xf]
      %v3224 = vld [vmem:[%s11 + $0x74] sm:$0xf]
      %v3225 = vld [vmem:[%s11 + $0x78] sm:$0xf]
      %v3226 = vld [vmem:[%s11 + $0x7c] sm:$0xf]
      %v3227 = vld [vmem:[%s11 + $0x80] sm:$0xf]
      %v3228 = vld [vmem:[%s11 + $0x84] sm:$0xf]
      %v3229 = vld [vmem:[%s11 + $0x88] sm:$0xf]
      %v3230 = vld [vmem:[%s11 + $0x8c] sm:$0xf]
      %v3231 = vld [vmem:[%s11 + $0x90] sm:$0xf]
      %v3232 = vld [vmem:[%s11 + $0x94] sm:$0xf]
      %v3233 = vld [vmem:[%s11 + $0x98] sm:$0xf]
      %v3234 = vld [vmem:[%s11 + $0x9c] sm:$0xf]
      %v3235 = vld [vmem:[%s11 + $0xa0] sm:$0xf]
      %v3236 = vld [vmem:[%s11 + $0xa4] sm:$0xf]
      %v3237 = vld [vmem:[%s11 + $0xa8] sm:$0xf]
      %v3238 = vld [vmem:[%s11 + $0xac] sm:$0xf]
      %v3239 = vld [vmem:[%s11 + $0xb0] sm:$0xf]
      %v3240 = vld [vmem:[%s11 + $0xb4] sm:$0xf]
      %v3241 = vld [vmem:[%s11 + $0xb8] sm:$0xf]
      %v3242 = vld [vmem:[%s11 + $0xbc] sm:$0xf]
      %v3243 = vld [vmem:[%s11 + $0xc0] sm:$0xf]
      %v3244 = vld [vmem:[%s11 + $0xc4] sm:$0xf]
      %v3245 = vld [vmem:[%s11 + $0xc8] sm:$0xf]
      %v3246 = vld [vmem:[%s11 + $0xcc] sm:$0xf]
      %v3247 = vld [vmem:[%s11 + $0xd0] sm:$0xf]
      %v3248 = vld [vmem:[%s11 + $0xd4] sm:$0xf]
      %v3249 = vld [vmem:[%s11 + $0xd8] sm:$0xf]
      %v3250 = vld [vmem:[%s11 + $0xdc] sm:$0xf]
      %v3251 = vld [vmem:[%s11 + $0xe0] sm:$0xf]
      %v3252 = vld [vmem:[%s11 + $0xe4] sm:$0xf]
      %v3253 = vld [vmem:[%s11 + $0xe8] sm:$0xf]
      %v3254 = vld [vmem:[%s11 + $0xec] sm:$0xf]
      %v3255 = vld [vmem:[%s11 + $0xf0] sm:$0xf]
      %v3256 = vld [vmem:[%s11 + $0xf4] sm:$0xf]
      %v3257 = vld [vmem:[%s11 + $0xf8] sm:$0xf]
      %v3258 = vld [vmem:[%s11 + $0xfc] sm:$0xf]
      %v3259 = vld [vmem:[%s12] sm:$0x1]
      %v3261 = vlaneseq
      %v3262 = vshrl.u32 %v3261, 7
      %v3263 = vsub.s32 0, %v3262
      %v3264 = vrot.slane %v3259, %v3263
      %v3330 = vunpack.c.l.b16 %v3195
      %v3331 = vunpack.c.l.b16 %v3196
      %v3332 = vunpack.c.l.b16 %v3197
      %v3333 = vunpack.c.l.b16 %v3198
      %v3334 = vunpack.c.l.b16 %v3199
      %v3335 = vunpack.c.l.b16 %v3200
      %v3336 = vunpack.c.l.b16 %v3201
      %v3337 = vunpack.c.l.b16 %v3202
      %v3338 = vunpack.c.l.b16 %v3203
      %v3339 = vunpack.c.l.b16 %v3204
      %v3340 = vunpack.c.l.b16 %v3205
      %v3341 = vunpack.c.l.b16 %v3206
      %v3342 = vunpack.c.l.b16 %v3207
      %v3343 = vunpack.c.l.b16 %v3208
      %v3344 = vunpack.c.l.b16 %v3209
      %v3345 = vunpack.c.l.b16 %v3210
      %v3346 = vunpack.c.l.b16 %v3211
      %v3347 = vunpack.c.l.b16 %v3212
      %v3348 = vunpack.c.l.b16 %v3213
      %v3349 = vunpack.c.l.b16 %v3214
      %v3350 = vunpack.c.l.b16 %v3215
      %v3351 = vunpack.c.l.b16 %v3216
      %v3352 = vunpack.c.l.b16 %v3217
      %v3353 = vunpack.c.l.b16 %v3218
      %v3354 = vunpack.c.l.b16 %v3219
      %v3355 = vunpack.c.l.b16 %v3220
      %v3356 = vunpack.c.l.b16 %v3221
      %v3357 = vunpack.c.l.b16 %v3222
      %v3358 = vunpack.c.l.b16 %v3223
      %v3359 = vunpack.c.l.b16 %v3224
      %v3360 = vunpack.c.l.b16 %v3225
      %v3361 = vunpack.c.l.b16 %v3226
      %v3362 = vunpack.c.l.b16 %v3227
      %v3363 = vunpack.c.l.b16 %v3228
      %v3364 = vunpack.c.l.b16 %v3229
      %v3365 = vunpack.c.l.b16 %v3230
      %v3366 = vunpack.c.l.b16 %v3231
      %v3367 = vunpack.c.l.b16 %v3232
      %v3368 = vunpack.c.l.b16 %v3233
      %v3369 = vunpack.c.l.b16 %v3234
      %v3370 = vunpack.c.l.b16 %v3235
      %v3371 = vunpack.c.l.b16 %v3236
      %v3372 = vunpack.c.l.b16 %v3237
      %v3373 = vunpack.c.l.b16 %v3238
      %v3374 = vunpack.c.l.b16 %v3239
      %v3375 = vunpack.c.l.b16 %v3240
      %v3376 = vunpack.c.l.b16 %v3241
      %v3377 = vunpack.c.l.b16 %v3242
      %v3378 = vunpack.c.l.b16 %v3243
      %v3379 = vunpack.c.l.b16 %v3244
      %v3380 = vunpack.c.l.b16 %v3245
      %v3381 = vunpack.c.l.b16 %v3246
      %v3382 = vunpack.c.l.b16 %v3247
      %v3383 = vunpack.c.l.b16 %v3248
      %v3384 = vunpack.c.l.b16 %v3249
      %v3385 = vunpack.c.l.b16 %v3250
      %v3386 = vunpack.c.l.b16 %v3251
      %v3387 = vunpack.c.l.b16 %v3252
      %v3388 = vunpack.c.l.b16 %v3253
      %v3389 = vunpack.c.l.b16 %v3254
      %v3390 = vunpack.c.l.b16 %v3255
      %v3391 = vunpack.c.l.b16 %v3256
      %v3392 = vunpack.c.l.b16 %v3257
      %v3393 = vunpack.c.l.b16 %v3258
      %v3394 = vpack.c.b16 %v3331, %v3330
      %v3395 = vpack.c.b16 %v3333, %v3332
      %v3396 = vpack.c.b16 %v3335, %v3334
      %v3397 = vpack.c.b16 %v3337, %v3336
      %v3398 = vpack.c.b16 %v3339, %v3338
      %v3399 = vpack.c.b16 %v3341, %v3340
      %v3400 = vpack.c.b16 %v3343, %v3342
      %v3401 = vpack.c.b16 %v3345, %v3344
      %v3402 = vpack.c.b16 %v3347, %v3346
      %v3403 = vpack.c.b16 %v3349, %v3348
      %v3404 = vpack.c.b16 %v3351, %v3350
      %v3405 = vpack.c.b16 %v3353, %v3352
      %v3406 = vpack.c.b16 %v3355, %v3354
      %v3407 = vpack.c.b16 %v3357, %v3356
      %v3408 = vpack.c.b16 %v3359, %v3358
      %v3409 = vpack.c.b16 %v3361, %v3360
      %v3410 = vpack.c.b16 %v3363, %v3362
      %v3411 = vpack.c.b16 %v3365, %v3364
      %v3412 = vpack.c.b16 %v3367, %v3366
      %v3413 = vpack.c.b16 %v3369, %v3368
      %v3414 = vpack.c.b16 %v3371, %v3370
      %v3415 = vpack.c.b16 %v3373, %v3372
      %v3416 = vpack.c.b16 %v3375, %v3374
      %v3417 = vpack.c.b16 %v3377, %v3376
      %v3418 = vpack.c.b16 %v3379, %v3378
      %v3419 = vpack.c.b16 %v3381, %v3380
      %v3420 = vpack.c.b16 %v3383, %v3382
      %v3421 = vpack.c.b16 %v3385, %v3384
      %v3422 = vpack.c.b16 %v3387, %v3386
      %v3423 = vpack.c.b16 %v3389, %v3388
      %v3424 = vpack.c.b16 %v3391, %v3390
      %v3425 = vpack.c.b16 %v3393, %v3392
      %3458 = vmatprep.subr.bf16.mxu0 0
      %3459 = vmatpush1.bf16.msra.mxu0 %v3401
      %3460 = vmatprep.subr.bf16.mxu0 0
      %3461 = vmatpush1.bf16.msra.mxu0 %v3400
      %3462 = vmatprep.subr.bf16.mxu0 0
      %3463 = vmatpush1.bf16.msra.mxu0 %v3399
      %3464 = vmatprep.subr.bf16.mxu0 0
      %3465 = vmatpush1.bf16.msra.mxu0 %v3398
      %3466 = vmatprep.subr.bf16.mxu0 0
      %3467 = vmatpush1.bf16.msra.mxu0 %v3397
      %3468 = vmatprep.subr.bf16.mxu0 0
      %3469 = vmatpush1.bf16.msra.mxu0 %v3396
      %3470 = vmatprep.subr.bf16.mxu0 0
      %3471 = vmatpush1.bf16.msra.mxu0 %v3395
      %3472 = vmatprep.subr.bf16.mxu0 0
      %3473 = vmatpush1.bf16.msra.mxu0 %v3394
      %3474 = vmatprep.subr.bf16.mxu0 0
      %3475 = vmatpush2.bf16.msra.mxu0 %v3409
      %3476 = vmatprep.subr.bf16.mxu0 0
      %3477 = vmatpush2.bf16.msra.mxu0 %v3408
      %3478 = vmatprep.subr.bf16.mxu0 0
      %3479 = vmatpush2.bf16.msra.mxu0 %v3407
      %3480 = vmatprep.subr.bf16.mxu0 0
      %3481 = vmatpush2.bf16.msra.mxu0 %v3406
      %3482 = vmatprep.subr.bf16.mxu0 0
      %3483 = vmatpush2.bf16.msra.mxu0 %v3405
      %3484 = vmatprep.subr.bf16.mxu0 0
      %3485 = vmatpush2.bf16.msra.mxu0 %v3404
      %3486 = vmatprep.subr.bf16.mxu0 0
      %3487 = vmatpush2.bf16.msra.mxu0 %v3403
      %3488 = vmatprep.subr.bf16.mxu0 0
      %3489 = vmatpush2.bf16.msra.mxu0 %v3402
      %3490 = vmatprep.mubr.bf16.mxu0 %v3102
      %3491 = vmatmul.mubr.bf16.gmra.mxu0 %v3056
      %v3492 = vpop.f32.mrf.mxu0
      %v3493 = vadd.f32 %v3264, %v3492
      %v3494 = vpop.f32.mrf.mxu0
      %v3495 = vpop.f32.mrf.mxu0
      %v3496 = vpop.f32.mrf.mxu0
      %3497 = vdwg.mxu0
      %3498 = vmatprep.subr.bf16.mxu0 0
      %3499 = vmatpush1.bf16.msra.mxu0 %v3417
      %3500 = vmatprep.subr.bf16.mxu0 0
      %3501 = vmatpush1.bf16.msra.mxu0 %v3416
      %3502 = vmatprep.subr.bf16.mxu0 0
      %3503 = vmatpush1.bf16.msra.mxu0 %v3415
      %3504 = vmatprep.subr.bf16.mxu0 0
      %3505 = vmatpush1.bf16.msra.mxu0 %v3414
      %3506 = vmatprep.subr.bf16.mxu0 0
      %3507 = vmatpush1.bf16.msra.mxu0 %v3413
      %3508 = vmatprep.subr.bf16.mxu0 0
      %3509 = vmatpush1.bf16.msra.mxu0 %v3412
      %3510 = vmatprep.subr.bf16.mxu0 0
      %3511 = vmatpush1.bf16.msra.mxu0 %v3411
      %3512 = vmatprep.subr.bf16.mxu0 0
      %3513 = vmatpush1.bf16.msra.mxu0 %v3410
      %3514 = vmatprep.subr.bf16.mxu0 0
      %3515 = vmatpush2.bf16.msra.mxu0 %v3425
      %3516 = vmatprep.subr.bf16.mxu0 0
      %3517 = vmatpush2.bf16.msra.mxu0 %v3424
      %3518 = vmatprep.subr.bf16.mxu0 0
      %3519 = vmatpush2.bf16.msra.mxu0 %v3423
      %3520 = vmatprep.subr.bf16.mxu0 0
      %3521 = vmatpush2.bf16.msra.mxu0 %v3422
      %3522 = vmatprep.subr.bf16.mxu0 0
      %3523 = vmatpush2.bf16.msra.mxu0 %v3421
      %3524 = vmatprep.subr.bf16.mxu0 0
      %3525 = vmatpush2.bf16.msra.mxu0 %v3420
      %3526 = vmatprep.subr.bf16.mxu0 0
      %3527 = vmatpush2.bf16.msra.mxu0 %v3419
      %3528 = vmatprep.subr.bf16.mxu0 0
      %3529 = vmatpush2.bf16.msra.mxu0 %v3418
      %3530 = vmatprep.mubr.bf16.mxu0 %v3194
      %3531 = vmatmul.mubr.bf16.gmra.mxu0 %v3148
      %v3532 = vpop.f32.mrf.mxu0
      %v3533 = vadd.f32 %v3493, %v3532
      %v3534 = vpop.f32.mrf.mxu0
      %v3535 = vpop.f32.mrf.mxu0
      %v3536 = vpop.f32.mrf.mxu0
      %3537 = vdwg.mxu0
      %v3538 = vmul.f32 %v3533, 0.2
      %v3539 = vmax.f32 %v3533, %v3538
      %3540 = vst [vmem:[%s438] sm:$0xff] %v3539
      %p3541 = scmp.lt.s32.totalorder %s24, 1
      %s3542 = scalar_select %p3541, %s24, 1
      %s3543 = smul.addr %s3542, 8
      %s3544 = scalar_lea.vmem %s13, %s3543
      // Predicated region
      $region73: #{d1_forward.1} parent=71 // pred_check
        %p3545 = pneg %p320
      $region74: #{d1_forward.1} parent=71 // pred_check_branch
        %3547 = sbr.rel (%p3545) target = $region76
      $region75: #{d1_forward.1} parent=71 // pred_region
        _
      $region76: #{d1_forward.1} parent=71 // pred_fallthru
        _
    $region72: #{d1_forward.1} parent=5 // pred_fallthru
      _
    %p3548 = scmp.le.s32.totalorder 2, %s19
    // Predicated region
    $region77: #{d1_forward.1} parent=5 // pred_check
      %p3549 = pneg %p3548
    $region78: #{d1_forward.1} parent=5 // pred_check_branch
      %3551 = sbr.rel (%p3549) target = $region80
    $region79: #{d1_forward.1} parent=5 // pred_region
      %s3552 = ssub.s32 %s19, 2
      // Predicated region
      $region81: #{d1_forward.1} parent=79 // pred_check
        %p3553 = pneg %p326
      $region82: #{d1_forward.1} parent=79 // pred_check_branch
        %3555 = sbr.rel (%p3553) target = $region84
      $region83: #{d1_forward.1} parent=79 // pred_region
        %p3556 = scmp.lt.s32.totalorder %s25, 1
        %s3557 = scalar_select %p3556, %s25, 1
        %s3558 = smul.addr %s3557, 8
        %s3559 = scalar_lea.vmem %s13, %s3558
      $region84: #{d1_forward.1} parent=79 // pred_fallthru
        _
    $region80: #{d1_forward.1} parent=5 // pred_fallthru
      _
  $region6: #{d1_forward.1} parent=0 // loop_footer
    %s23 = sadd.s32 1, %s19
  $region7: #{d1_forward.1} parent=0 // loop_footer_branch
    %18 = sbr.rel target = $region3
  $region8: #{d1_forward.1} parent=0 // loop_exit
    _

</llo_original>
